<compile_context>
chip_gen: v6e
topology: v6e:2x2x1
jax: 0.10.0
libtpu: 0.0.40
codegen_flags: <defaults>
</compile_context>

<pallas_src>
import functools

import jax
import jax.numpy as jnp
from jax.experimental import pallas as pl
from jax.experimental.pallas import tpu as pltpu

_WIDTHS = (1024, 512, 256, 128)     # candidate lane-dense row widths (mult. of 128)
_TARGET_BLOCK_ELEMS = 512 * 1024    # ~2 MiB per f32 block
_SMALL_N = 256 * 1024               # below this, plain XLA beats kernel setup cost


def _gauss_kernel(params_ref, x_ref, o_ref):
    # params_ref: SMEM (2,) f32 = [mu, -1/(2*sigma^2)]; x_ref/o_ref: VMEM tiles.
    mu = params_ref[0]
    c = params_ref[1]
    x = x_ref[...].astype(jnp.float32)     # cast in-vreg; HBM IO stays in x's dtype
    d = x - mu
    # sub/mul on the VPU; exp goes to the EUP (its own, otherwise-idle slot).
    o_ref[...] = jnp.exp(d * d * c).astype(o_ref.dtype)


@functools.lru_cache(maxsize=1)
def _num_tensorcores():
    """Best-effort TensorCore count (v7x has 2 per chip). Defaults to 1."""
    try:
        info = pltpu.get_tpu_info()
    except Exception:
        return 1
    for name in ("num_cores", "core_count", "num_tensorcores",
                 "tensor_core_count", "tensorcores_per_chip", "cores_per_chip"):
        v = getattr(info, name, None)
        if isinstance(v, int) and v >= 1:
            return int(v)
    return 1


def _run_pallas_2d(x2d, params, out_dtype):
    """Run the streaming kernel over a lane-dense 2-D slab [rows, width]."""
    rows, width = x2d.shape
    tile_rows = min(rows, max(8, _TARGET_BLOCK_ELEMS // width))
    blocks = pl.cdiv(rows, tile_rows)

    n = rows * width
    itemsize = jnp.dtype(out_dtype).itemsize
    cost = pl.CostEstimate(
        flops=3 * n,                       # sub, mul, mul per element
        transcendentals=n,                 # one exp per element
        bytes_accessed=2 * n * itemsize,   # read + write in the caller's dtype
    )

    nc = _num_tensorcores()
    core_parallel = getattr(pltpu, "CORE_PARALLEL", None)

    if nc > 1 and blocks >= nc and core_parallel is not None:
        # v7x-style explicit core split: leading axis of size num_cores marked
        # CORE_PARALLEL so both TensorCores stream from their own HBM paths.
        bpc = pl.cdiv(blocks, nc)
        last = blocks - 1
        # Clamp keeps the block index in range when blocks % nc != 0; the
        # duplicated last block recomputes identical values, which is benign.
        idx = lambda c, i: (jnp.minimum(c * bpc + i, last), 0)
        grid = (nc, bpc)
        dims = (core_parallel, "arbitrary")
    else:
        idx = lambda i: (i, 0)
        grid = (blocks,)
        dims = ("parallel",)

    return pl.pallas_call(
        _gauss_kernel,
        out_shape=jax.ShapeDtypeStruct((rows, width), out_dtype),
        grid=grid,
        in_specs=[
            pl.BlockSpec(memory_space=pltpu.MemorySpace.SMEM),   # [mu, -1/(2s^2)]
            pl.BlockSpec((tile_rows, width), idx),               # x tile
        ],
        out_specs=pl.BlockSpec((tile_rows, width), idx),
        compiler_params=pltpu.CompilerParams(dimension_semantics=dims),
        cost_estimate=cost,
    )(params, x2d)


def gauss_memb_func(x, mu, sigma):
    """Pallas implementation of GaussMembFunc.forward for any input shape."""
    orig_shape = x.shape
    dtype = x.dtype

    mu_f = jnp.asarray(mu, jnp.float32)
    sig_f = jnp.asarray(sigma, jnp.float32)
    c_f = -1.0 / (2.0 * sig_f * sig_f)       # fold sign + 1/(2*sigma^2)

    n = x.size
    if n == 0:
        return x

    def _plain(v):
        d = v.astype(jnp.float32) - mu_f
        return jnp.exp(d * d * c_f).astype(dtype)

    # Small-input fast path: pallas_call / DMA setup would dominate.
    if n < _SMALL_N:
        return _plain(x)

    params = jnp.stack([mu_f, c_f])           # single (2,) f32 SMEM operand

    # Zero-copy path: widest lane-dense width dividing n -> pure reshape.
    width = next((w for w in _WIDTHS if n % w == 0), None)
    if width is not None:
        x2d = x.reshape(n // width, width)
        return _run_pallas_2d(x2d, params, dtype).reshape(orig_shape)

    # Unaligned n (not a multiple of 128): kernel on the 1024-aligned prefix,
    # tiny jnp tail (<1024 elements), then stitch. No full-array pad pass.
    flat = x.reshape(-1)
    n_main = (n // _WIDTHS[0]) * _WIDTHS[0]
    main2d = flat[:n_main].reshape(n_main // _WIDTHS[0], _WIDTHS[0])
    main_out = _run_pallas_2d(main2d, params, dtype).reshape(-1)
    tail_out = _plain(flat[n_main:])
    return jnp.concatenate([main_out, tail_out]).reshape(orig_shape)


if __name__ == "__main__":
    # Deterministic scalar "parameters" (synthetic, matching the PyTorch module).
    mu = 0.5
    sigma = 1.25

    def ref(v):
        return jnp.exp(-jnp.square(v - mu) / (2.0 * sigma ** 2))

    key = jax.random.PRNGKey(0)
    k1, k2, k3 = jax.random.split(key, 3)

    # 1) Small NCHW input consistent with the module (takes the fused-XLA fast path).
    x_small = jax.random.normal(k1, (2, 4, 16, 16), dtype=jnp.float32)
    y_small = jax.block_until_ready(gauss_memb_func(x_small, mu, sigma))
    assert y_small.shape == x_small.shape and y_small.dtype == x_small.dtype
    assert jnp.allclose(y_small, ref(x_small), atol=1e-5, rtol=1e-5)

    # 2) Larger aligned input: exercises the Pallas streaming kernel (zero-copy reshape).
    x_big = jax.random.normal(k2, (8, 4, 128, 128), dtype=jnp.float32)   # 524288 elems
    y_big = jax.block_until_ready(gauss_memb_func(x_big, mu, sigma))
    assert y_big.shape == x_big.shape and y_big.dtype == x_big.dtype
    assert jnp.allclose(y_big, ref(x_big), atol=1e-5, rtol=1e-5)

    # 3) Unaligned length: aligned-prefix kernel + jnp tail stitching.
    x_odd = jax.random.normal(k3, (300001,), dtype=jnp.float32)
    y_odd = jax.block_until_ready(gauss_memb_func(x_odd, mu, sigma))
    assert y_odd.shape == x_odd.shape and y_odd.dtype == x_odd.dtype
    assert jnp.allclose(y_odd, ref(x_odd), atol=1e-5, rtol=1e-5)

    print("KERNEL_OK")
</pallas_src>

<mosaic_0001>
module attributes {stable_mosaic.version = 11 : i64} {
  func.func @_gauss_kernel(%arg0: i32, %arg1: memref<2xf32, #tpu.memory_space<smem>>, %arg2: memref<512x1024xf32, #tpu.memory_space<vmem>>, %arg3: memref<512x1024xf32, #tpu.memory_space<vmem>>) attributes {dimension_semantics = [#tpu.dimension_semantics<parallel>], iteration_bounds = array<i64: 1>, scalar_prefetch = 0 : i64, scratch_operands = 0 : i64, tpu.core_type = #tpu.core_type<tc>, window_params = [{transform_indices = @transform_0, window_bounds = array<i64: 2>}, {transform_indices = @transform_1, window_bounds = array<i64: 512, 1024>}, {transform_indices = @transform_2, window_bounds = array<i64: 512, 1024>}]} {
    %c0 = arith.constant 0 : index
    %0 = memref.load %arg1[%c0] : memref<2xf32, #tpu.memory_space<smem>>
    %c1 = arith.constant 1 : index
    %1 = memref.load %arg1[%c1] : memref<2xf32, #tpu.memory_space<smem>>
    %c0_0 = arith.constant 0 : index
    %c0_1 = arith.constant 0 : index
    %2 = vector.load %arg2[%c0_0, %c0_1] : memref<512x1024xf32, #tpu.memory_space<vmem>>, vector<512x1024xf32>
    %3 = vector.broadcast %0 : f32 to vector<512x1024xf32>
    %4 = arith.subf %2, %3 : vector<512x1024xf32>
    %5 = arith.mulf %4, %4 : vector<512x1024xf32>
    %6 = vector.broadcast %1 : f32 to vector<512x1024xf32>
    %7 = arith.mulf %5, %6 : vector<512x1024xf32>
    %8 = math.exp %7 : vector<512x1024xf32>
    %c0_2 = arith.constant 0 : index
    %c0_3 = arith.constant 0 : index
    %9 = vector.load %arg3[%c0_2, %c0_3] : memref<512x1024xf32, #tpu.memory_space<vmem>>, vector<512x1024xf32>
    tpu.vector_store %arg3[%c0_2, %c0_3], %8 {strides = array<i32>} : memref<512x1024xf32, #tpu.memory_space<vmem>>, vector<512x1024xf32>,
    return
  }
  func.func @transform_0(%arg0: i32) -> i32 {
    %c0_i32 = arith.constant 0 : i32
    %c0_i32_0 = arith.constant 0 : i32
    return %c0_i32 : i32
  }
  func.func @transform_1(%arg0: i32) -> (i32, i32) {
    %c0_i32 = arith.constant 0 : i32
    %c0_i32_0 = arith.constant 0 : i32
    return %arg0, %c0_i32 : i32, i32
  }
  func.func @transform_2(%arg0: i32) -> (i32, i32) {
    %c0_i32 = arith.constant 0 : i32
    %c0_i32_0 = arith.constant 0 : i32
    return %arg0, %c0_i32 : i32, i32
  }
}

</mosaic_0001>

<llo_original>
// kernel: tpu_custom_call.1
$region0: #{tpu_custom_call.1}
  #allocation0 [shape = 'u32[]', space=smem, size = 0x4, offset = 0x4, fixed_abs, tag = 'smem constant byte address 0x4 - core index']
  #allocation1 [shape = 'u32[144,128]{1,0:T(1,128)}', space=vmem, size = 0x12000, scoped, tag = 'internal scratch']
  %s0 = inlined_call_operand.hbm [shape: f32[2], index: 0, kind: input, shape index: {}]
  %s1 = inlined_call_operand.hbm [shape: f32[512,1024], index: 1, kind: input, shape index: {}]
  %s2 = inlined_call_operand.hbm [shape: f32[512,1024], index: 2, kind: output, shape index: {}]
  %s3 = sld [smem:[#allocation0]]
  $region26: #{tpu_custom_call.1} parent=0
    _
  %s5 = ssub.s32 1, %s3
  %s6 = scalar_select 0, %s5, %s3
  $region1: #{tpu_custom_call.1} parent=0
    #allocation2 [shape = 'u8[512]{0}', space=smem, size = 0x200, scoped, tag = 'input window, operand 0, single buffered']
    #allocation3 [shape = 's32[1]{0}', space=sflag, size = 0x4, scoped, tag = 'scoped memory for tpu_custom_call.1']
    #allocation4 [shape = 's32[1]{0}', space=sflag, size = 0x4, scoped, tag = 'scoped memory for tpu_custom_call.1']
    #allocation5 [shape = 's32[1]{0}', space=sflag, size = 0x4, scoped, tag = 'scoped memory for tpu_custom_call.1']
    #allocation6 [shape = 'u8[2097152]{0}', space=vmem, size = 0x200000, scoped, tag = 'input window, operand 1, single buffered']
    #allocation7 [shape = 'u8[2097152]{0}', space=vmem, size = 0x200000, scoped, tag = 'output window, operand 0, single buffered']
    %7 = vsyncpa [#allocation5], 0
    %8 = vsyncpa [#allocation3], 0
    %9 = vsyncpa [#allocation4], 0
    // Predicated region
    $region2: #{tpu_custom_call.1} parent=1 // pred_check
      _
    $region3: #{tpu_custom_call.1} parent=1 // pred_check_branch
      %11 = sbr.rel (0) target = $region5
    $region4: #{tpu_custom_call.1} parent=1 // pred_region
      %s13 = ssub.s32 16, 16
      %14 = vsyncadd [#allocation5], %s13
      %17 = dma.hbm_to_smem %s0, 16, [#allocation2], [#allocation5]
    $region5: #{tpu_custom_call.1} parent=1 // pred_fallthru
      _
    // Predicated region
    $region6: #{tpu_custom_call.1} parent=1 // pred_check
      _
    $region7: #{tpu_custom_call.1} parent=1 // pred_check_branch
      %19 = sbr.rel (0) target = $region9
    $region8: #{tpu_custom_call.1} parent=1 // pred_region
      %s21 = ssub.s32 65536, 65536
      %22 = vsyncadd [#allocation3], %s21
      %s23 = sshll.u32 [#allocation6], 4
      %s24 = int_to_ptr.vmem [resolvable:$true] %s23
      %29 = dma.hbm_to_vmem [thread:$0]  %s1, 65536, %s24, [#allocation3], 1024, 1024, 64
    $region9: #{tpu_custom_call.1} parent=1 // pred_fallthru
      _
    // Predicated region
    $region10: #{tpu_custom_call.1} parent=1 // pred_check
      _
    $region11: #{tpu_custom_call.1} parent=1 // pred_check_branch
      %31 = sbr.rel (0) target = $region13
    $region12: #{tpu_custom_call.1} parent=1 // pred_region
      %32 = dma.done [#allocation5], 16
    $region13: #{tpu_custom_call.1} parent=1 // pred_fallthru
      _
    // Predicated region
    $region14: #{tpu_custom_call.1} parent=1 // pred_check
      _
    $region15: #{tpu_custom_call.1} parent=1 // pred_check_branch
      %34 = sbr.rel (0) target = $region17
    $region16: #{tpu_custom_call.1} parent=1 // pred_region
      %35 = dma.done [#allocation3], 65536
    $region17: #{tpu_custom_call.1} parent=1 // pred_fallthru
      _
    %36 = sfence
    %s37 = sld [smem:[#allocation2]]
    %s38 = sld [smem:[#allocation2 + $0x1]]
    %v39 = vld [vmem:[#allocation6] sm:$0xff]
    %v40 = vld [vmem:[#allocation6 + $0x8] sm:$0xff]
    %v41 = vld [vmem:[#allocation6 + $0x10] sm:$0xff]
    %v42 = vld [vmem:[#allocation6 + $0x18] sm:$0xff]
    %v43 = vld [vmem:[#allocation6 + $0x20] sm:$0xff]
    %v44 = vld [vmem:[#allocation6 + $0x28] sm:$0xff]
    %v45 = vld [vmem:[#allocation6 + $0x30] sm:$0xff]
    %v46 = vld [vmem:[#allocation6 + $0x38] sm:$0xff]
    %v47 = vld [vmem:[#allocation6 + $0x40] sm:$0xff]
    %v48 = vld [vmem:[#allocation6 + $0x48] sm:$0xff]
    %v49 = vld [vmem:[#allocation6 + $0x50] sm:$0xff]
    %v50 = vld [vmem:[#allocation6 + $0x58] sm:$0xff]
    %v51 = vld [vmem:[#allocation6 + $0x60] sm:$0xff]
    %v52 = vld [vmem:[#allocation6 + $0x68] sm:$0xff]
    %v53 = vld [vmem:[#allocation6 + $0x70] sm:$0xff]
    %v54 = vld [vmem:[#allocation6 + $0x78] sm:$0xff]
    %v55 = vld [vmem:[#allocation6 + $0x80] sm:$0xff]
    %v56 = vld [vmem:[#allocation6 + $0x88] sm:$0xff]
    %v57 = vld [vmem:[#allocation6 + $0x90] sm:$0xff]
    %v58 = vld [vmem:[#allocation6 + $0x98] sm:$0xff]
    %v59 = vld [vmem:[#allocation6 + $0xa0] sm:$0xff]
    %v60 = vld [vmem:[#allocation6 + $0xa8] sm:$0xff]
    %v61 = vld [vmem:[#allocation6 + $0xb0] sm:$0xff]
    %v62 = vld [vmem:[#allocation6 + $0xb8] sm:$0xff]
    %v63 = vld [vmem:[#allocation6 + $0xc0] sm:$0xff]
    %v64 = vld [vmem:[#allocation6 + $0xc8] sm:$0xff]
    %v65 = vld [vmem:[#allocation6 + $0xd0] sm:$0xff]
    %v66 = vld [vmem:[#allocation6 + $0xd8] sm:$0xff]
    %v67 = vld [vmem:[#allocation6 + $0xe0] sm:$0xff]
    %v68 = vld [vmem:[#allocation6 + $0xe8] sm:$0xff]
    %v69 = vld [vmem:[#allocation6 + $0xf0] sm:$0xff]
    %v70 = vld [vmem:[#allocation6 + $0xf8] sm:$0xff]
    %v71 = vld [vmem:[#allocation6 + $0x100] sm:$0xff]
    %v72 = vld [vmem:[#allocation6 + $0x108] sm:$0xff]
    %v73 = vld [vmem:[#allocation6 + $0x110] sm:$0xff]
    %v74 = vld [vmem:[#allocation6 + $0x118] sm:$0xff]
    %v75 = vld [vmem:[#allocation6 + $0x120] sm:$0xff]
    %v76 = vld [vmem:[#allocation6 + $0x128] sm:$0xff]
    %v77 = vld [vmem:[#allocation6 + $0x130] sm:$0xff]
    %v78 = vld [vmem:[#allocation6 + $0x138] sm:$0xff]
    %v79 = vld [vmem:[#allocation6 + $0x140] sm:$0xff]
    %v80 = vld [vmem:[#allocation6 + $0x148] sm:$0xff]
    %v81 = vld [vmem:[#allocation6 + $0x150] sm:$0xff]
    %v82 = vld [vmem:[#allocation6 + $0x158] sm:$0xff]
    %v83 = vld [vmem:[#allocation6 + $0x160] sm:$0xff]
    %v84 = vld [vmem:[#allocation6 + $0x168] sm:$0xff]
    %v85 = vld [vmem:[#allocation6 + $0x170] sm:$0xff]
    %v86 = vld [vmem:[#allocation6 + $0x178] sm:$0xff]
    %v87 = vld [vmem:[#allocation6 + $0x180] sm:$0xff]
    %v88 = vld [vmem:[#allocation6 + $0x188] sm:$0xff]
    %v89 = vld [vmem:[#allocation6 + $0x190] sm:$0xff]
    %v90 = vld [vmem:[#allocation6 + $0x198] sm:$0xff]
    %v91 = vld [vmem:[#allocation6 + $0x1a0] sm:$0xff]
    %v92 = vld [vmem:[#allocation6 + $0x1a8] sm:$0xff]
    %v93 = vld [vmem:[#allocation6 + $0x1b0] sm:$0xff]
    %v94 = vld [vmem:[#allocation6 + $0x1b8] sm:$0xff]
    %v95 = vld [vmem:[#allocation6 + $0x1c0] sm:$0xff]
    %v96 = vld [vmem:[#allocation6 + $0x1c8] sm:$0xff]
    %v97 = vld [vmem:[#allocation6 + $0x1d0] sm:$0xff]
    %v98 = vld [vmem:[#allocation6 + $0x1d8] sm:$0xff]
    %v99 = vld [vmem:[#allocation6 + $0x1e0] sm:$0xff]
    %v100 = vld [vmem:[#allocation6 + $0x1e8] sm:$0xff]
    %v101 = vld [vmem:[#allocation6 + $0x1f0] sm:$0xff]
    %v102 = vld [vmem:[#allocation6 + $0x1f8] sm:$0xff]
    %v103 = vld [vmem:[#allocation6 + $0x200] sm:$0xff]
    %v104 = vld [vmem:[#allocation6 + $0x208] sm:$0xff]
    %v105 = vld [vmem:[#allocation6 + $0x210] sm:$0xff]
    %v106 = vld [vmem:[#allocation6 + $0x218] sm:$0xff]
    %v107 = vld [vmem:[#allocation6 + $0x220] sm:$0xff]
    %v108 = vld [vmem:[#allocation6 + $0x228] sm:$0xff]
    %v109 = vld [vmem:[#allocation6 + $0x230] sm:$0xff]
    %v110 = vld [vmem:[#allocation6 + $0x238] sm:$0xff]
    %v111 = vld [vmem:[#allocation6 + $0x240] sm:$0xff]
    %v112 = vld [vmem:[#allocation6 + $0x248] sm:$0xff]
    %v113 = vld [vmem:[#allocation6 + $0x250] sm:$0xff]
    %v114 = vld [vmem:[#allocation6 + $0x258] sm:$0xff]
    %v115 = vld [vmem:[#allocation6 + $0x260] sm:$0xff]
    %v116 = vld [vmem:[#allocation6 + $0x268] sm:$0xff]
    %v117 = vld [vmem:[#allocation6 + $0x270] sm:$0xff]
    %v118 = vld [vmem:[#allocation6 + $0x278] sm:$0xff]
    %v119 = vld [vmem:[#allocation6 + $0x280] sm:$0xff]
    %v120 = vld [vmem:[#allocation6 + $0x288] sm:$0xff]
    %v121 = vld [vmem:[#allocation6 + $0x290] sm:$0xff]
    %v122 = vld [vmem:[#allocation6 + $0x298] sm:$0xff]
    %v123 = vld [vmem:[#allocation6 + $0x2a0] sm:$0xff]
    %v124 = vld [vmem:[#allocation6 + $0x2a8] sm:$0xff]
    %v125 = vld [vmem:[#allocation6 + $0x2b0] sm:$0xff]
    %v126 = vld [vmem:[#allocation6 + $0x2b8] sm:$0xff]
    %v127 = vld [vmem:[#allocation6 + $0x2c0] sm:$0xff]
    %v128 = vld [vmem:[#allocation6 + $0x2c8] sm:$0xff]
    %v129 = vld [vmem:[#allocation6 + $0x2d0] sm:$0xff]
    %v130 = vld [vmem:[#allocation6 + $0x2d8] sm:$0xff]
    %v131 = vld [vmem:[#allocation6 + $0x2e0] sm:$0xff]
    %v132 = vld [vmem:[#allocation6 + $0x2e8] sm:$0xff]
    %v133 = vld [vmem:[#allocation6 + $0x2f0] sm:$0xff]
    %v134 = vld [vmem:[#allocation6 + $0x2f8] sm:$0xff]
    %v135 = vld [vmem:[#allocation6 + $0x300] sm:$0xff]
    %v136 = vld [vmem:[#allocation6 + $0x308] sm:$0xff]
    %v137 = vld [vmem:[#allocation6 + $0x310] sm:$0xff]
    %v138 = vld [vmem:[#allocation6 + $0x318] sm:$0xff]
    %v139 = vld [vmem:[#allocation6 + $0x320] sm:$0xff]
    %v140 = vld [vmem:[#allocation6 + $0x328] sm:$0xff]
    %v141 = vld [vmem:[#allocation6 + $0x330] sm:$0xff]
    %v142 = vld [vmem:[#allocation6 + $0x338] sm:$0xff]
    %v143 = vld [vmem:[#allocation6 + $0x340] sm:$0xff]
    %v144 = vld [vmem:[#allocation6 + $0x348] sm:$0xff]
    %v145 = vld [vmem:[#allocation6 + $0x350] sm:$0xff]
    %v146 = vld [vmem:[#allocation6 + $0x358] sm:$0xff]
    %v147 = vld [vmem:[#allocation6 + $0x360] sm:$0xff]
    %v148 = vld [vmem:[#allocation6 + $0x368] sm:$0xff]
    %v149 = vld [vmem:[#allocation6 + $0x370] sm:$0xff]
    %v150 = vld [vmem:[#allocation6 + $0x378] sm:$0xff]
    %v151 = vld [vmem:[#allocation6 + $0x380] sm:$0xff]
    %v152 = vld [vmem:[#allocation6 + $0x388] sm:$0xff]
    %v153 = vld [vmem:[#allocation6 + $0x390] sm:$0xff]
    %v154 = vld [vmem:[#allocation6 + $0x398] sm:$0xff]
    %v155 = vld [vmem:[#allocation6 + $0x3a0] sm:$0xff]
    %v156 = vld [vmem:[#allocation6 + $0x3a8] sm:$0xff]
    %v157 = vld [vmem:[#allocation6 + $0x3b0] sm:$0xff]
    %v158 = vld [vmem:[#allocation6 + $0x3b8] sm:$0xff]
    %v159 = vld [vmem:[#allocation6 + $0x3c0] sm:$0xff]
    %v160 = vld [vmem:[#allocation6 + $0x3c8] sm:$0xff]
    %v161 = vld [vmem:[#allocation6 + $0x3d0] sm:$0xff]
    %v162 = vld [vmem:[#allocation6 + $0x3d8] sm:$0xff]
    %v163 = vld [vmem:[#allocation6 + $0x3e0] sm:$0xff]
    %v164 = vld [vmem:[#allocation6 + $0x3e8] sm:$0xff]
    %v165 = vld [vmem:[#allocation6 + $0x3f0] sm:$0xff]
    %v166 = vld [vmem:[#allocation6 + $0x3f8] sm:$0xff]
    %v167 = vld [vmem:[#allocation6 + $0x400] sm:$0xff]
    %v168 = vld [vmem:[#allocation6 + $0x408] sm:$0xff]
    %v169 = vld [vmem:[#allocation6 + $0x410] sm:$0xff]
    %v170 = vld [vmem:[#allocation6 + $0x418] sm:$0xff]
    %v171 = vld [vmem:[#allocation6 + $0x420] sm:$0xff]
    %v172 = vld [vmem:[#allocation6 + $0x428] sm:$0xff]
    %v173 = vld [vmem:[#allocation6 + $0x430] sm:$0xff]
    %v174 = vld [vmem:[#allocation6 + $0x438] sm:$0xff]
    %v175 = vld [vmem:[#allocation6 + $0x440] sm:$0xff]
    %v176 = vld [vmem:[#allocation6 + $0x448] sm:$0xff]
    %v177 = vld [vmem:[#allocation6 + $0x450] sm:$0xff]
    %v178 = vld [vmem:[#allocation6 + $0x458] sm:$0xff]
    %v179 = vld [vmem:[#allocation6 + $0x460] sm:$0xff]
    %v180 = vld [vmem:[#allocation6 + $0x468] sm:$0xff]
    %v181 = vld [vmem:[#allocation6 + $0x470] sm:$0xff]
    %v182 = vld [vmem:[#allocation6 + $0x478] sm:$0xff]
    %v183 = vld [vmem:[#allocation6 + $0x480] sm:$0xff]
    %v184 = vld [vmem:[#allocation6 + $0x488] sm:$0xff]
    %v185 = vld [vmem:[#allocation6 + $0x490] sm:$0xff]
    %v186 = vld [vmem:[#allocation6 + $0x498] sm:$0xff]
    %v187 = vld [vmem:[#allocation6 + $0x4a0] sm:$0xff]
    %v188 = vld [vmem:[#allocation6 + $0x4a8] sm:$0xff]
    %v189 = vld [vmem:[#allocation6 + $0x4b0] sm:$0xff]
    %v190 = vld [vmem:[#allocation6 + $0x4b8] sm:$0xff]
    %v191 = vld [vmem:[#allocation6 + $0x4c0] sm:$0xff]
    %v192 = vld [vmem:[#allocation6 + $0x4c8] sm:$0xff]
    %v193 = vld [vmem:[#allocation6 + $0x4d0] sm:$0xff]
    %v194 = vld [vmem:[#allocation6 + $0x4d8] sm:$0xff]
    %v195 = vld [vmem:[#allocation6 + $0x4e0] sm:$0xff]
    %v196 = vld [vmem:[#allocation6 + $0x4e8] sm:$0xff]
    %v197 = vld [vmem:[#allocation6 + $0x4f0] sm:$0xff]
    %v198 = vld [vmem:[#allocation6 + $0x4f8] sm:$0xff]
    %v199 = vld [vmem:[#allocation6 + $0x500] sm:$0xff]
    %v200 = vld [vmem:[#allocation6 + $0x508] sm:$0xff]
    %v201 = vld [vmem:[#allocation6 + $0x510] sm:$0xff]
    %v202 = vld [vmem:[#allocation6 + $0x518] sm:$0xff]
    %v203 = vld [vmem:[#allocation6 + $0x520] sm:$0xff]
    %v204 = vld [vmem:[#allocation6 + $0x528] sm:$0xff]
    %v205 = vld [vmem:[#allocation6 + $0x530] sm:$0xff]
    %v206 = vld [vmem:[#allocation6 + $0x538] sm:$0xff]
    %v207 = vld [vmem:[#allocation6 + $0x540] sm:$0xff]
    %v208 = vld [vmem:[#allocation6 + $0x548] sm:$0xff]
    %v209 = vld [vmem:[#allocation6 + $0x550] sm:$0xff]
    %v210 = vld [vmem:[#allocation6 + $0x558] sm:$0xff]
    %v211 = vld [vmem:[#allocation6 + $0x560] sm:$0xff]
    %v212 = vld [vmem:[#allocation6 + $0x568] sm:$0xff]
    %v213 = vld [vmem:[#allocation6 + $0x570] sm:$0xff]
    %v214 = vld [vmem:[#allocation6 + $0x578] sm:$0xff]
    %v215 = vld [vmem:[#allocation6 + $0x580] sm:$0xff]
    %v216 = vld [vmem:[#allocation6 + $0x588] sm:$0xff]
    %v217 = vld [vmem:[#allocation6 + $0x590] sm:$0xff]
    %v218 = vld [vmem:[#allocation6 + $0x598] sm:$0xff]
    %v219 = vld [vmem:[#allocation6 + $0x5a0] sm:$0xff]
    %v220 = vld [vmem:[#allocation6 + $0x5a8] sm:$0xff]
    %v221 = vld [vmem:[#allocation6 + $0x5b0] sm:$0xff]
    %v222 = vld [vmem:[#allocation6 + $0x5b8] sm:$0xff]
    %v223 = vld [vmem:[#allocation6 + $0x5c0] sm:$0xff]
    %v224 = vld [vmem:[#allocation6 + $0x5c8] sm:$0xff]
    %v225 = vld [vmem:[#allocation6 + $0x5d0] sm:$0xff]
    %v226 = vld [vmem:[#allocation6 + $0x5d8] sm:$0xff]
    %v227 = vld [vmem:[#allocation6 + $0x5e0] sm:$0xff]
    %v228 = vld [vmem:[#allocation6 + $0x5e8] sm:$0xff]
    %v229 = vld [vmem:[#allocation6 + $0x5f0] sm:$0xff]
    %v230 = vld [vmem:[#allocation6 + $0x5f8] sm:$0xff]
    %v231 = vld [vmem:[#allocation6 + $0x600] sm:$0xff]
    %v232 = vld [vmem:[#allocation6 + $0x608] sm:$0xff]
    %v233 = vld [vmem:[#allocation6 + $0x610] sm:$0xff]
    %v234 = vld [vmem:[#allocation6 + $0x618] sm:$0xff]
    %v235 = vld [vmem:[#allocation6 + $0x620] sm:$0xff]
    %v236 = vld [vmem:[#allocation6 + $0x628] sm:$0xff]
    %v237 = vld [vmem:[#allocation6 + $0x630] sm:$0xff]
    %v238 = vld [vmem:[#allocation6 + $0x638] sm:$0xff]
    %v239 = vld [vmem:[#allocation6 + $0x640] sm:$0xff]
    %v240 = vld [vmem:[#allocation6 + $0x648] sm:$0xff]
    %v241 = vld [vmem:[#allocation6 + $0x650] sm:$0xff]
    %v242 = vld [vmem:[#allocation6 + $0x658] sm:$0xff]
    %v243 = vld [vmem:[#allocation6 + $0x660] sm:$0xff]
    %v244 = vld [vmem:[#allocation6 + $0x668] sm:$0xff]
    %v245 = vld [vmem:[#allocation6 + $0x670] sm:$0xff]
    %v246 = vld [vmem:[#allocation6 + $0x678] sm:$0xff]
    %v247 = vld [vmem:[#allocation6 + $0x680] sm:$0xff]
    %v248 = vld [vmem:[#allocation6 + $0x688] sm:$0xff]
    %v249 = vld [vmem:[#allocation6 + $0x690] sm:$0xff]
    %v250 = vld [vmem:[#allocation6 + $0x698] sm:$0xff]
    %v251 = vld [vmem:[#allocation6 + $0x6a0] sm:$0xff]
    %v252 = vld [vmem:[#allocation6 + $0x6a8] sm:$0xff]
    %v253 = vld [vmem:[#allocation6 + $0x6b0] sm:$0xff]
    %v254 = vld [vmem:[#allocation6 + $0x6b8] sm:$0xff]
    %v255 = vld [vmem:[#allocation6 + $0x6c0] sm:$0xff]
    %v256 = vld [vmem:[#allocation6 + $0x6c8] sm:$0xff]
    %v257 = vld [vmem:[#allocation6 + $0x6d0] sm:$0xff]
    %v258 = vld [vmem:[#allocation6 + $0x6d8] sm:$0xff]
    %v259 = vld [vmem:[#allocation6 + $0x6e0] sm:$0xff]
    %v260 = vld [vmem:[#allocation6 + $0x6e8] sm:$0xff]
    %v261 = vld [vmem:[#allocation6 + $0x6f0] sm:$0xff]
    %v262 = vld [vmem:[#allocation6 + $0x6f8] sm:$0xff]
    %v263 = vld [vmem:[#allocation6 + $0x700] sm:$0xff]
    %v264 = vld [vmem:[#allocation6 + $0x708] sm:$0xff]
    %v265 = vld [vmem:[#allocation6 + $0x710] sm:$0xff]
    %v266 = vld [vmem:[#allocation6 + $0x718] sm:$0xff]
    %v267 = vld [vmem:[#allocation6 + $0x720] sm:$0xff]
    %v268 = vld [vmem:[#allocation6 + $0x728] sm:$0xff]
    %v269 = vld [vmem:[#allocation6 + $0x730] sm:$0xff]
    %v270 = vld [vmem:[#allocation6 + $0x738] sm:$0xff]
    %v271 = vld [vmem:[#allocation6 + $0x740] sm:$0xff]
    %v272 = vld [vmem:[#allocation6 + $0x748] sm:$0xff]
    %v273 = vld [vmem:[#allocation6 + $0x750] sm:$0xff]
    %v274 = vld [vmem:[#allocation6 + $0x758] sm:$0xff]
    %v275 = vld [vmem:[#allocation6 + $0x760] sm:$0xff]
    %v276 = vld [vmem:[#allocation6 + $0x768] sm:$0xff]
    %v277 = vld [vmem:[#allocation6 + $0x770] sm:$0xff]
    %v278 = vld [vmem:[#allocation6 + $0x778] sm:$0xff]
    %v279 = vld [vmem:[#allocation6 + $0x780] sm:$0xff]
    %v280 = vld [vmem:[#allocation6 + $0x788] sm:$0xff]
    %v281 = vld [vmem:[#allocation6 + $0x790] sm:$0xff]
    %v282 = vld [vmem:[#allocation6 + $0x798] sm:$0xff]
    %v283 = vld [vmem:[#allocation6 + $0x7a0] sm:$0xff]
    %v284 = vld [vmem:[#allocation6 + $0x7a8] sm:$0xff]
    %v285 = vld [vmem:[#allocation6 + $0x7b0] sm:$0xff]
    %v286 = vld [vmem:[#allocation6 + $0x7b8] sm:$0xff]
    %v287 = vld [vmem:[#allocation6 + $0x7c0] sm:$0xff]
    %v288 = vld [vmem:[#allocation6 + $0x7c8] sm:$0xff]
    %v289 = vld [vmem:[#allocation6 + $0x7d0] sm:$0xff]
    %v290 = vld [vmem:[#allocation6 + $0x7d8] sm:$0xff]
    %v291 = vld [vmem:[#allocation6 + $0x7e0] sm:$0xff]
    %v292 = vld [vmem:[#allocation6 + $0x7e8] sm:$0xff]
    %v293 = vld [vmem:[#allocation6 + $0x7f0] sm:$0xff]
    %v294 = vld [vmem:[#allocation6 + $0x7f8] sm:$0xff]
    %v295 = vld [vmem:[#allocation6 + $0x800] sm:$0xff]
    %v296 = vld [vmem:[#allocation6 + $0x808] sm:$0xff]
    %v297 = vld [vmem:[#allocation6 + $0x810] sm:$0xff]
    %v298 = vld [vmem:[#allocation6 + $0x818] sm:$0xff]
    %v299 = vld [vmem:[#allocation6 + $0x820] sm:$0xff]
    %v300 = vld [vmem:[#allocation6 + $0x828] sm:$0xff]
    %v301 = vld [vmem:[#allocation6 + $0x830] sm:$0xff]
    %v302 = vld [vmem:[#allocation6 + $0x838] sm:$0xff]
    %v303 = vld [vmem:[#allocation6 + $0x840] sm:$0xff]
    %v304 = vld [vmem:[#allocation6 + $0x848] sm:$0xff]
    %v305 = vld [vmem:[#allocation6 + $0x850] sm:$0xff]
    %v306 = vld [vmem:[#allocation6 + $0x858] sm:$0xff]
    %v307 = vld [vmem:[#allocation6 + $0x860] sm:$0xff]
    %v308 = vld [vmem:[#allocation6 + $0x868] sm:$0xff]
    %v309 = vld [vmem:[#allocation6 + $0x870] sm:$0xff]
    %v310 = vld [vmem:[#allocation6 + $0x878] sm:$0xff]
    %v311 = vld [vmem:[#allocation6 + $0x880] sm:$0xff]
    %v312 = vld [vmem:[#allocation6 + $0x888] sm:$0xff]
    %v313 = vld [vmem:[#allocation6 + $0x890] sm:$0xff]
    %v314 = vld [vmem:[#allocation6 + $0x898] sm:$0xff]
    %v315 = vld [vmem:[#allocation6 + $0x8a0] sm:$0xff]
    %v316 = vld [vmem:[#allocation6 + $0x8a8] sm:$0xff]
    %v317 = vld [vmem:[#allocation6 + $0x8b0] sm:$0xff]
    %v318 = vld [vmem:[#allocation6 + $0x8b8] sm:$0xff]
    %v319 = vld [vmem:[#allocation6 + $0x8c0] sm:$0xff]
    %v320 = vld [vmem:[#allocation6 + $0x8c8] sm:$0xff]
    %v321 = vld [vmem:[#allocation6 + $0x8d0] sm:$0xff]
    %v322 = vld [vmem:[#allocation6 + $0x8d8] sm:$0xff]
    %v323 = vld [vmem:[#allocation6 + $0x8e0] sm:$0xff]
    %v324 = vld [vmem:[#allocation6 + $0x8e8] sm:$0xff]
    %v325 = vld [vmem:[#allocation6 + $0x8f0] sm:$0xff]
    %v326 = vld [vmem:[#allocation6 + $0x8f8] sm:$0xff]
    %v327 = vld [vmem:[#allocation6 + $0x900] sm:$0xff]
    %v328 = vld [vmem:[#allocation6 + $0x908] sm:$0xff]
    %v329 = vld [vmem:[#allocation6 + $0x910] sm:$0xff]
    %v330 = vld [vmem:[#allocation6 + $0x918] sm:$0xff]
    %v331 = vld [vmem:[#allocation6 + $0x920] sm:$0xff]
    %v332 = vld [vmem:[#allocation6 + $0x928] sm:$0xff]
    %v333 = vld [vmem:[#allocation6 + $0x930] sm:$0xff]
    %v334 = vld [vmem:[#allocation6 + $0x938] sm:$0xff]
    %v335 = vld [vmem:[#allocation6 + $0x940] sm:$0xff]
    %v336 = vld [vmem:[#allocation6 + $0x948] sm:$0xff]
    %v337 = vld [vmem:[#allocation6 + $0x950] sm:$0xff]
    %v338 = vld [vmem:[#allocation6 + $0x958] sm:$0xff]
    %v339 = vld [vmem:[#allocation6 + $0x960] sm:$0xff]
    %v340 = vld [vmem:[#allocation6 + $0x968] sm:$0xff]
    %v341 = vld [vmem:[#allocation6 + $0x970] sm:$0xff]
    %v342 = vld [vmem:[#allocation6 + $0x978] sm:$0xff]
    %v343 = vld [vmem:[#allocation6 + $0x980] sm:$0xff]
    %v344 = vld [vmem:[#allocation6 + $0x988] sm:$0xff]
    %v345 = vld [vmem:[#allocation6 + $0x990] sm:$0xff]
    %v346 = vld [vmem:[#allocation6 + $0x998] sm:$0xff]
    %v347 = vld [vmem:[#allocation6 + $0x9a0] sm:$0xff]
    %v348 = vld [vmem:[#allocation6 + $0x9a8] sm:$0xff]
    %v349 = vld [vmem:[#allocation6 + $0x9b0] sm:$0xff]
    %v350 = vld [vmem:[#allocation6 + $0x9b8] sm:$0xff]
    %v351 = vld [vmem:[#allocation6 + $0x9c0] sm:$0xff]
    %v352 = vld [vmem:[#allocation6 + $0x9c8] sm:$0xff]
    %v353 = vld [vmem:[#allocation6 + $0x9d0] sm:$0xff]
    %v354 = vld [vmem:[#allocation6 + $0x9d8] sm:$0xff]
    %v355 = vld [vmem:[#allocation6 + $0x9e0] sm:$0xff]
    %v356 = vld [vmem:[#allocation6 + $0x9e8] sm:$0xff]
    %v357 = vld [vmem:[#allocation6 + $0x9f0] sm:$0xff]
    %v358 = vld [vmem:[#allocation6 + $0x9f8] sm:$0xff]
    %v359 = vld [vmem:[#allocation6 + $0xa00] sm:$0xff]
    %v360 = vld [vmem:[#allocation6 + $0xa08] sm:$0xff]
    %v361 = vld [vmem:[#allocation6 + $0xa10] sm:$0xff]
    %v362 = vld [vmem:[#allocation6 + $0xa18] sm:$0xff]
    %v363 = vld [vmem:[#allocation6 + $0xa20] sm:$0xff]
    %v364 = vld [vmem:[#allocation6 + $0xa28] sm:$0xff]
    %v365 = vld [vmem:[#allocation6 + $0xa30] sm:$0xff]
    %v366 = vld [vmem:[#allocation6 + $0xa38] sm:$0xff]
    %v367 = vld [vmem:[#allocation6 + $0xa40] sm:$0xff]
    %v368 = vld [vmem:[#allocation6 + $0xa48] sm:$0xff]
    %v369 = vld [vmem:[#allocation6 + $0xa50] sm:$0xff]
    %v370 = vld [vmem:[#allocation6 + $0xa58] sm:$0xff]
    %v371 = vld [vmem:[#allocation6 + $0xa60] sm:$0xff]
    %v372 = vld [vmem:[#allocation6 + $0xa68] sm:$0xff]
    %v373 = vld [vmem:[#allocation6 + $0xa70] sm:$0xff]
    %v374 = vld [vmem:[#allocation6 + $0xa78] sm:$0xff]
    %v375 = vld [vmem:[#allocation6 + $0xa80] sm:$0xff]
    %v376 = vld [vmem:[#allocation6 + $0xa88] sm:$0xff]
    %v377 = vld [vmem:[#allocation6 + $0xa90] sm:$0xff]
    %v378 = vld [vmem:[#allocation6 + $0xa98] sm:$0xff]
    %v379 = vld [vmem:[#allocation6 + $0xaa0] sm:$0xff]
    %v380 = vld [vmem:[#allocation6 + $0xaa8] sm:$0xff]
    %v381 = vld [vmem:[#allocation6 + $0xab0] sm:$0xff]
    %v382 = vld [vmem:[#allocation6 + $0xab8] sm:$0xff]
    %v383 = vld [vmem:[#allocation6 + $0xac0] sm:$0xff]
    %v384 = vld [vmem:[#allocation6 + $0xac8] sm:$0xff]
    %v385 = vld [vmem:[#allocation6 + $0xad0] sm:$0xff]
    %v386 = vld [vmem:[#allocation6 + $0xad8] sm:$0xff]
    %v387 = vld [vmem:[#allocation6 + $0xae0] sm:$0xff]
    %v388 = vld [vmem:[#allocation6 + $0xae8] sm:$0xff]
    %v389 = vld [vmem:[#allocation6 + $0xaf0] sm:$0xff]
    %v390 = vld [vmem:[#allocation6 + $0xaf8] sm:$0xff]
    %v391 = vld [vmem:[#allocation6 + $0xb00] sm:$0xff]
    %v392 = vld [vmem:[#allocation6 + $0xb08] sm:$0xff]
    %v393 = vld [vmem:[#allocation6 + $0xb10] sm:$0xff]
    %v394 = vld [vmem:[#allocation6 + $0xb18] sm:$0xff]
    %v395 = vld [vmem:[#allocation6 + $0xb20] sm:$0xff]
    %v396 = vld [vmem:[#allocation6 + $0xb28] sm:$0xff]
    %v397 = vld [vmem:[#allocation6 + $0xb30] sm:$0xff]
    %v398 = vld [vmem:[#allocation6 + $0xb38] sm:$0xff]
    %v399 = vld [vmem:[#allocation6 + $0xb40] sm:$0xff]
    %v400 = vld [vmem:[#allocation6 + $0xb48] sm:$0xff]
    %v401 = vld [vmem:[#allocation6 + $0xb50] sm:$0xff]
    %v402 = vld [vmem:[#allocation6 + $0xb58] sm:$0xff]
    %v403 = vld [vmem:[#allocation6 + $0xb60] sm:$0xff]
    %v404 = vld [vmem:[#allocation6 + $0xb68] sm:$0xff]
    %v405 = vld [vmem:[#allocation6 + $0xb70] sm:$0xff]
    %v406 = vld [vmem:[#allocation6 + $0xb78] sm:$0xff]
    %v407 = vld [vmem:[#allocation6 + $0xb80] sm:$0xff]
    %v408 = vld [vmem:[#allocation6 + $0xb88] sm:$0xff]
    %v409 = vld [vmem:[#allocation6 + $0xb90] sm:$0xff]
    %v410 = vld [vmem:[#allocation6 + $0xb98] sm:$0xff]
    %v411 = vld [vmem:[#allocation6 + $0xba0] sm:$0xff]
    %v412 = vld [vmem:[#allocation6 + $0xba8] sm:$0xff]
    %v413 = vld [vmem:[#allocation6 + $0xbb0] sm:$0xff]
    %v414 = vld [vmem:[#allocation6 + $0xbb8] sm:$0xff]
    %v415 = vld [vmem:[#allocation6 + $0xbc0] sm:$0xff]
    %v416 = vld [vmem:[#allocation6 + $0xbc8] sm:$0xff]
    %v417 = vld [vmem:[#allocation6 + $0xbd0] sm:$0xff]
    %v418 = vld [vmem:[#allocation6 + $0xbd8] sm:$0xff]
    %v419 = vld [vmem:[#allocation6 + $0xbe0] sm:$0xff]
    %v420 = vld [vmem:[#allocation6 + $0xbe8] sm:$0xff]
    %v421 = vld [vmem:[#allocation6 + $0xbf0] sm:$0xff]
    %v422 = vld [vmem:[#allocation6 + $0xbf8] sm:$0xff]
    %v423 = vld [vmem:[#allocation6 + $0xc00] sm:$0xff]
    %v424 = vld [vmem:[#allocation6 + $0xc08] sm:$0xff]
    %v425 = vld [vmem:[#allocation6 + $0xc10] sm:$0xff]
    %v426 = vld [vmem:[#allocation6 + $0xc18] sm:$0xff]
    %v427 = vld [vmem:[#allocation6 + $0xc20] sm:$0xff]
    %v428 = vld [vmem:[#allocation6 + $0xc28] sm:$0xff]
    %v429 = vld [vmem:[#allocation6 + $0xc30] sm:$0xff]
    %v430 = vld [vmem:[#allocation6 + $0xc38] sm:$0xff]
    %v431 = vld [vmem:[#allocation6 + $0xc40] sm:$0xff]
    %v432 = vld [vmem:[#allocation6 + $0xc48] sm:$0xff]
    %v433 = vld [vmem:[#allocation6 + $0xc50] sm:$0xff]
    %v434 = vld [vmem:[#allocation6 + $0xc58] sm:$0xff]
    %v435 = vld [vmem:[#allocation6 + $0xc60] sm:$0xff]
    %v436 = vld [vmem:[#allocation6 + $0xc68] sm:$0xff]
    %v437 = vld [vmem:[#allocation6 + $0xc70] sm:$0xff]
    %v438 = vld [vmem:[#allocation6 + $0xc78] sm:$0xff]
    %v439 = vld [vmem:[#allocation6 + $0xc80] sm:$0xff]
    %v440 = vld [vmem:[#allocation6 + $0xc88] sm:$0xff]
    %v441 = vld [vmem:[#allocation6 + $0xc90] sm:$0xff]
    %v442 = vld [vmem:[#allocation6 + $0xc98] sm:$0xff]
    %v443 = vld [vmem:[#allocation6 + $0xca0] sm:$0xff]
    %v444 = vld [vmem:[#allocation6 + $0xca8] sm:$0xff]
    %v445 = vld [vmem:[#allocation6 + $0xcb0] sm:$0xff]
    %v446 = vld [vmem:[#allocation6 + $0xcb8] sm:$0xff]
    %v447 = vld [vmem:[#allocation6 + $0xcc0] sm:$0xff]
    %v448 = vld [vmem:[#allocation6 + $0xcc8] sm:$0xff]
    %v449 = vld [vmem:[#allocation6 + $0xcd0] sm:$0xff]
    %v450 = vld [vmem:[#allocation6 + $0xcd8] sm:$0xff]
    %v451 = vld [vmem:[#allocation6 + $0xce0] sm:$0xff]
    %v452 = vld [vmem:[#allocation6 + $0xce8] sm:$0xff]
    %v453 = vld [vmem:[#allocation6 + $0xcf0] sm:$0xff]
    %v454 = vld [vmem:[#allocation6 + $0xcf8] sm:$0xff]
    %v455 = vld [vmem:[#allocation6 + $0xd00] sm:$0xff]
    %v456 = vld [vmem:[#allocation6 + $0xd08] sm:$0xff]
    %v457 = vld [vmem:[#allocation6 + $0xd10] sm:$0xff]
    %v458 = vld [vmem:[#allocation6 + $0xd18] sm:$0xff]
    %v459 = vld [vmem:[#allocation6 + $0xd20] sm:$0xff]
    %v460 = vld [vmem:[#allocation6 + $0xd28] sm:$0xff]
    %v461 = vld [vmem:[#allocation6 + $0xd30] sm:$0xff]
    %v462 = vld [vmem:[#allocation6 + $0xd38] sm:$0xff]
    %v463 = vld [vmem:[#allocation6 + $0xd40] sm:$0xff]
    %v464 = vld [vmem:[#allocation6 + $0xd48] sm:$0xff]
    %v465 = vld [vmem:[#allocation6 + $0xd50] sm:$0xff]
    %v466 = vld [vmem:[#allocation6 + $0xd58] sm:$0xff]
    %v467 = vld [vmem:[#allocation6 + $0xd60] sm:$0xff]
    %v468 = vld [vmem:[#allocation6 + $0xd68] sm:$0xff]
    %v469 = vld [vmem:[#allocation6 + $0xd70] sm:$0xff]
    %v470 = vld [vmem:[#allocation6 + $0xd78] sm:$0xff]
    %v471 = vld [vmem:[#allocation6 + $0xd80] sm:$0xff]
    %v472 = vld [vmem:[#allocation6 + $0xd88] sm:$0xff]
    %v473 = vld [vmem:[#allocation6 + $0xd90] sm:$0xff]
    %v474 = vld [vmem:[#allocation6 + $0xd98] sm:$0xff]
    %v475 = vld [vmem:[#allocation6 + $0xda0] sm:$0xff]
    %v476 = vld [vmem:[#allocation6 + $0xda8] sm:$0xff]
    %v477 = vld [vmem:[#allocation6 + $0xdb0] sm:$0xff]
    %v478 = vld [vmem:[#allocation6 + $0xdb8] sm:$0xff]
    %v479 = vld [vmem:[#allocation6 + $0xdc0] sm:$0xff]
    %v480 = vld [vmem:[#allocation6 + $0xdc8] sm:$0xff]
    %v481 = vld [vmem:[#allocation6 + $0xdd0] sm:$0xff]
    %v482 = vld [vmem:[#allocation6 + $0xdd8] sm:$0xff]
    %v483 = vld [vmem:[#allocation6 + $0xde0] sm:$0xff]
    %v484 = vld [vmem:[#allocation6 + $0xde8] sm:$0xff]
    %v485 = vld [vmem:[#allocation6 + $0xdf0] sm:$0xff]
    %v486 = vld [vmem:[#allocation6 + $0xdf8] sm:$0xff]
    %v487 = vld [vmem:[#allocation6 + $0xe00] sm:$0xff]
    %v488 = vld [vmem:[#allocation6 + $0xe08] sm:$0xff]
    %v489 = vld [vmem:[#allocation6 + $0xe10] sm:$0xff]
    %v490 = vld [vmem:[#allocation6 + $0xe18] sm:$0xff]
    %v491 = vld [vmem:[#allocation6 + $0xe20] sm:$0xff]
    %v492 = vld [vmem:[#allocation6 + $0xe28] sm:$0xff]
    %v493 = vld [vmem:[#allocation6 + $0xe30] sm:$0xff]
    %v494 = vld [vmem:[#allocation6 + $0xe38] sm:$0xff]
    %v495 = vld [vmem:[#allocation6 + $0xe40] sm:$0xff]
    %v496 = vld [vmem:[#allocation6 + $0xe48] sm:$0xff]
    %v497 = vld [vmem:[#allocation6 + $0xe50] sm:$0xff]
    %v498 = vld [vmem:[#allocation6 + $0xe58] sm:$0xff]
    %v499 = vld [vmem:[#allocation6 + $0xe60] sm:$0xff]
    %v500 = vld [vmem:[#allocation6 + $0xe68] sm:$0xff]
    %v501 = vld [vmem:[#allocation6 + $0xe70] sm:$0xff]
    %v502 = vld [vmem:[#allocation6 + $0xe78] sm:$0xff]
    %v503 = vld [vmem:[#allocation6 + $0xe80] sm:$0xff]
    %v504 = vld [vmem:[#allocation6 + $0xe88] sm:$0xff]
    %v505 = vld [vmem:[#allocation6 + $0xe90] sm:$0xff]
    %v506 = vld [vmem:[#allocation6 + $0xe98] sm:$0xff]
    %v507 = vld [vmem:[#allocation6 + $0xea0] sm:$0xff]
    %v508 = vld [vmem:[#allocation6 + $0xea8] sm:$0xff]
    %v509 = vld [vmem:[#allocation6 + $0xeb0] sm:$0xff]
    %v510 = vld [vmem:[#allocation6 + $0xeb8] sm:$0xff]
    %v511 = vld [vmem:[#allocation6 + $0xec0] sm:$0xff]
    %v512 = vld [vmem:[#allocation6 + $0xec8] sm:$0xff]
    %v513 = vld [vmem:[#allocation6 + $0xed0] sm:$0xff]
    %v514 = vld [vmem:[#allocation6 + $0xed8] sm:$0xff]
    %v515 = vld [vmem:[#allocation6 + $0xee0] sm:$0xff]
    %v516 = vld [vmem:[#allocation6 + $0xee8] sm:$0xff]
    %v517 = vld [vmem:[#allocation6 + $0xef0] sm:$0xff]
    %v518 = vld [vmem:[#allocation6 + $0xef8] sm:$0xff]
    %v519 = vld [vmem:[#allocation6 + $0xf00] sm:$0xff]
    %v520 = vld [vmem:[#allocation6 + $0xf08] sm:$0xff]
    %v521 = vld [vmem:[#allocation6 + $0xf10] sm:$0xff]
    %v522 = vld [vmem:[#allocation6 + $0xf18] sm:$0xff]
    %v523 = vld [vmem:[#allocation6 + $0xf20] sm:$0xff]
    %v524 = vld [vmem:[#allocation6 + $0xf28] sm:$0xff]
    %v525 = vld [vmem:[#allocation6 + $0xf30] sm:$0xff]
    %v526 = vld [vmem:[#allocation6 + $0xf38] sm:$0xff]
    %v527 = vld [vmem:[#allocation6 + $0xf40] sm:$0xff]
    %v528 = vld [vmem:[#allocation6 + $0xf48] sm:$0xff]
    %v529 = vld [vmem:[#allocation6 + $0xf50] sm:$0xff]
    %v530 = vld [vmem:[#allocation6 + $0xf58] sm:$0xff]
    %v531 = vld [vmem:[#allocation6 + $0xf60] sm:$0xff]
    %v532 = vld [vmem:[#allocation6 + $0xf68] sm:$0xff]
    %v533 = vld [vmem:[#allocation6 + $0xf70] sm:$0xff]
    %v534 = vld [vmem:[#allocation6 + $0xf78] sm:$0xff]
    %v535 = vld [vmem:[#allocation6 + $0xf80] sm:$0xff]
    %v536 = vld [vmem:[#allocation6 + $0xf88] sm:$0xff]
    %v537 = vld [vmem:[#allocation6 + $0xf90] sm:$0xff]
    %v538 = vld [vmem:[#allocation6 + $0xf98] sm:$0xff]
    %v539 = vld [vmem:[#allocation6 + $0xfa0] sm:$0xff]
    %v540 = vld [vmem:[#allocation6 + $0xfa8] sm:$0xff]
    %v541 = vld [vmem:[#allocation6 + $0xfb0] sm:$0xff]
    %v542 = vld [vmem:[#allocation6 + $0xfb8] sm:$0xff]
    %v543 = vld [vmem:[#allocation6 + $0xfc0] sm:$0xff]
    %v544 = vld [vmem:[#allocation6 + $0xfc8] sm:$0xff]
    %v545 = vld [vmem:[#allocation6 + $0xfd0] sm:$0xff]
    %v546 = vld [vmem:[#allocation6 + $0xfd8] sm:$0xff]
    %v547 = vld [vmem:[#allocation6 + $0xfe0] sm:$0xff]
    %v548 = vld [vmem:[#allocation6 + $0xfe8] sm:$0xff]
    %v549 = vld [vmem:[#allocation6 + $0xff0] sm:$0xff]
    %v550 = vld [vmem:[#allocation6 + $0xff8] sm:$0xff]
    %v551 = vstv %s37
    %v552 = vsub.f32 %v39, %v551
    %v553 = vsub.f32 %v40, %v551
    %v554 = vsub.f32 %v41, %v551
    %v555 = vsub.f32 %v42, %v551
    %v556 = vsub.f32 %v43, %v551
    %v557 = vsub.f32 %v44, %v551
    %v558 = vsub.f32 %v45, %v551
    %v559 = vsub.f32 %v46, %v551
    %v560 = vsub.f32 %v47, %v551
    %v561 = vsub.f32 %v48, %v551
    %v562 = vsub.f32 %v49, %v551
    %v563 = vsub.f32 %v50, %v551
    %v564 = vsub.f32 %v51, %v551
    %v565 = vsub.f32 %v52, %v551
    %v566 = vsub.f32 %v53, %v551
    %v567 = vsub.f32 %v54, %v551
    %v568 = vsub.f32 %v55, %v551
    %v569 = vsub.f32 %v56, %v551
    %v570 = vsub.f32 %v57, %v551
    %v571 = vsub.f32 %v58, %v551
    %v572 = vsub.f32 %v59, %v551
    %v573 = vsub.f32 %v60, %v551
    %v574 = vsub.f32 %v61, %v551
    %v575 = vsub.f32 %v62, %v551
    %v576 = vsub.f32 %v63, %v551
    %v577 = vsub.f32 %v64, %v551
    %v578 = vsub.f32 %v65, %v551
    %v579 = vsub.f32 %v66, %v551
    %v580 = vsub.f32 %v67, %v551
    %v581 = vsub.f32 %v68, %v551
    %v582 = vsub.f32 %v69, %v551
    %v583 = vsub.f32 %v70, %v551
    %v584 = vsub.f32 %v71, %v551
    %v585 = vsub.f32 %v72, %v551
    %v586 = vsub.f32 %v73, %v551
    %v587 = vsub.f32 %v74, %v551
    %v588 = vsub.f32 %v75, %v551
    %v589 = vsub.f32 %v76, %v551
    %v590 = vsub.f32 %v77, %v551
    %v591 = vsub.f32 %v78, %v551
    %v592 = vsub.f32 %v79, %v551
    %v593 = vsub.f32 %v80, %v551
    %v594 = vsub.f32 %v81, %v551
    %v595 = vsub.f32 %v82, %v551
    %v596 = vsub.f32 %v83, %v551
    %v597 = vsub.f32 %v84, %v551
    %v598 = vsub.f32 %v85, %v551
    %v599 = vsub.f32 %v86, %v551
    %v600 = vsub.f32 %v87, %v551
    %v601 = vsub.f32 %v88, %v551
    %v602 = vsub.f32 %v89, %v551
    %v603 = vsub.f32 %v90, %v551
    %v604 = vsub.f32 %v91, %v551
    %v605 = vsub.f32 %v92, %v551
    %v606 = vsub.f32 %v93, %v551
    %v607 = vsub.f32 %v94, %v551
    %v608 = vsub.f32 %v95, %v551
    %v609 = vsub.f32 %v96, %v551
    %v610 = vsub.f32 %v97, %v551
    %v611 = vsub.f32 %v98, %v551
    %v612 = vsub.f32 %v99, %v551
    %v613 = vsub.f32 %v100, %v551
    %v614 = vsub.f32 %v101, %v551
    %v615 = vsub.f32 %v102, %v551
    %v616 = vsub.f32 %v103, %v551
    %v617 = vsub.f32 %v104, %v551
    %v618 = vsub.f32 %v105, %v551
    %v619 = vsub.f32 %v106, %v551
    %v620 = vsub.f32 %v107, %v551
    %v621 = vsub.f32 %v108, %v551
    %v622 = vsub.f32 %v109, %v551
    %v623 = vsub.f32 %v110, %v551
    %v624 = vsub.f32 %v111, %v551
    %v625 = vsub.f32 %v112, %v551
    %v626 = vsub.f32 %v113, %v551
    %v627 = vsub.f32 %v114, %v551
    %v628 = vsub.f32 %v115, %v551
    %v629 = vsub.f32 %v116, %v551
    %v630 = vsub.f32 %v117, %v551
    %v631 = vsub.f32 %v118, %v551
    %v632 = vsub.f32 %v119, %v551
    %v633 = vsub.f32 %v120, %v551
    %v634 = vsub.f32 %v121, %v551
    %v635 = vsub.f32 %v122, %v551
    %v636 = vsub.f32 %v123, %v551
    %v637 = vsub.f32 %v124, %v551
    %v638 = vsub.f32 %v125, %v551
    %v639 = vsub.f32 %v126, %v551
    %v640 = vsub.f32 %v127, %v551
    %v641 = vsub.f32 %v128, %v551
    %v642 = vsub.f32 %v129, %v551
    %v643 = vsub.f32 %v130, %v551
    %v644 = vsub.f32 %v131, %v551
    %v645 = vsub.f32 %v132, %v551
    %v646 = vsub.f32 %v133, %v551
    %v647 = vsub.f32 %v134, %v551
    %v648 = vsub.f32 %v135, %v551
    %v649 = vsub.f32 %v136, %v551
    %v650 = vsub.f32 %v137, %v551
    %v651 = vsub.f32 %v138, %v551
    %v652 = vsub.f32 %v139, %v551
    %v653 = vsub.f32 %v140, %v551
    %v654 = vsub.f32 %v141, %v551
    %v655 = vsub.f32 %v142, %v551
    %v656 = vsub.f32 %v143, %v551
    %v657 = vsub.f32 %v144, %v551
    %v658 = vsub.f32 %v145, %v551
    %v659 = vsub.f32 %v146, %v551
    %v660 = vsub.f32 %v147, %v551
    %v661 = vsub.f32 %v148, %v551
    %v662 = vsub.f32 %v149, %v551
    %v663 = vsub.f32 %v150, %v551
    %v664 = vsub.f32 %v151, %v551
    %v665 = vsub.f32 %v152, %v551
    %v666 = vsub.f32 %v153, %v551
    %v667 = vsub.f32 %v154, %v551
    %v668 = vsub.f32 %v155, %v551
    %v669 = vsub.f32 %v156, %v551
    %v670 = vsub.f32 %v157, %v551
    %v671 = vsub.f32 %v158, %v551
    %v672 = vsub.f32 %v159, %v551
    %v673 = vsub.f32 %v160, %v551
    %v674 = vsub.f32 %v161, %v551
    %v675 = vsub.f32 %v162, %v551
    %v676 = vsub.f32 %v163, %v551
    %v677 = vsub.f32 %v164, %v551
    %v678 = vsub.f32 %v165, %v551
    %v679 = vsub.f32 %v166, %v551
    %v680 = vsub.f32 %v167, %v551
    %v681 = vsub.f32 %v168, %v551
    %v682 = vsub.f32 %v169, %v551
    %v683 = vsub.f32 %v170, %v551
    %v684 = vsub.f32 %v171, %v551
    %v685 = vsub.f32 %v172, %v551
    %v686 = vsub.f32 %v173, %v551
    %v687 = vsub.f32 %v174, %v551
    %v688 = vsub.f32 %v175, %v551
    %v689 = vsub.f32 %v176, %v551
    %v690 = vsub.f32 %v177, %v551
    %v691 = vsub.f32 %v178, %v551
    %v692 = vsub.f32 %v179, %v551
    %v693 = vsub.f32 %v180, %v551
    %v694 = vsub.f32 %v181, %v551
    %v695 = vsub.f32 %v182, %v551
    %v696 = vsub.f32 %v183, %v551
    %v697 = vsub.f32 %v184, %v551
    %v698 = vsub.f32 %v185, %v551
    %v699 = vsub.f32 %v186, %v551
    %v700 = vsub.f32 %v187, %v551
    %v701 = vsub.f32 %v188, %v551
    %v702 = vsub.f32 %v189, %v551
    %v703 = vsub.f32 %v190, %v551
    %v704 = vsub.f32 %v191, %v551
    %v705 = vsub.f32 %v192, %v551
    %v706 = vsub.f32 %v193, %v551
    %v707 = vsub.f32 %v194, %v551
    %v708 = vsub.f32 %v195, %v551
    %v709 = vsub.f32 %v196, %v551
    %v710 = vsub.f32 %v197, %v551
    %v711 = vsub.f32 %v198, %v551
    %v712 = vsub.f32 %v199, %v551
    %v713 = vsub.f32 %v200, %v551
    %v714 = vsub.f32 %v201, %v551
    %v715 = vsub.f32 %v202, %v551
    %v716 = vsub.f32 %v203, %v551
    %v717 = vsub.f32 %v204, %v551
    %v718 = vsub.f32 %v205, %v551
    %v719 = vsub.f32 %v206, %v551
    %v720 = vsub.f32 %v207, %v551
    %v721 = vsub.f32 %v208, %v551
    %v722 = vsub.f32 %v209, %v551
    %v723 = vsub.f32 %v210, %v551
    %v724 = vsub.f32 %v211, %v551
    %v725 = vsub.f32 %v212, %v551
    %v726 = vsub.f32 %v213, %v551
    %v727 = vsub.f32 %v214, %v551
    %v728 = vsub.f32 %v215, %v551
    %v729 = vsub.f32 %v216, %v551
    %v730 = vsub.f32 %v217, %v551
    %v731 = vsub.f32 %v218, %v551
    %v732 = vsub.f32 %v219, %v551
    %v733 = vsub.f32 %v220, %v551
    %v734 = vsub.f32 %v221, %v551
    %v735 = vsub.f32 %v222, %v551
    %v736 = vsub.f32 %v223, %v551
    %v737 = vsub.f32 %v224, %v551
    %v738 = vsub.f32 %v225, %v551
    %v739 = vsub.f32 %v226, %v551
    %v740 = vsub.f32 %v227, %v551
    %v741 = vsub.f32 %v228, %v551
    %v742 = vsub.f32 %v229, %v551
    %v743 = vsub.f32 %v230, %v551
    %v744 = vsub.f32 %v231, %v551
    %v745 = vsub.f32 %v232, %v551
    %v746 = vsub.f32 %v233, %v551
    %v747 = vsub.f32 %v234, %v551
    %v748 = vsub.f32 %v235, %v551
    %v749 = vsub.f32 %v236, %v551
    %v750 = vsub.f32 %v237, %v551
    %v751 = vsub.f32 %v238, %v551
    %v752 = vsub.f32 %v239, %v551
    %v753 = vsub.f32 %v240, %v551
    %v754 = vsub.f32 %v241, %v551
    %v755 = vsub.f32 %v242, %v551
    %v756 = vsub.f32 %v243, %v551
    %v757 = vsub.f32 %v244, %v551
    %v758 = vsub.f32 %v245, %v551
    %v759 = vsub.f32 %v246, %v551
    %v760 = vsub.f32 %v247, %v551
    %v761 = vsub.f32 %v248, %v551
    %v762 = vsub.f32 %v249, %v551
    %v763 = vsub.f32 %v250, %v551
    %v764 = vsub.f32 %v251, %v551
    %v765 = vsub.f32 %v252, %v551
    %v766 = vsub.f32 %v253, %v551
    %v767 = vsub.f32 %v254, %v551
    %v768 = vsub.f32 %v255, %v551
    %v769 = vsub.f32 %v256, %v551
    %v770 = vsub.f32 %v257, %v551
    %v771 = vsub.f32 %v258, %v551
    %v772 = vsub.f32 %v259, %v551
    %v773 = vsub.f32 %v260, %v551
    %v774 = vsub.f32 %v261, %v551
    %v775 = vsub.f32 %v262, %v551
    %v776 = vsub.f32 %v263, %v551
    %v777 = vsub.f32 %v264, %v551
    %v778 = vsub.f32 %v265, %v551
    %v779 = vsub.f32 %v266, %v551
    %v780 = vsub.f32 %v267, %v551
    %v781 = vsub.f32 %v268, %v551
    %v782 = vsub.f32 %v269, %v551
    %v783 = vsub.f32 %v270, %v551
    %v784 = vsub.f32 %v271, %v551
    %v785 = vsub.f32 %v272, %v551
    %v786 = vsub.f32 %v273, %v551
    %v787 = vsub.f32 %v274, %v551
    %v788 = vsub.f32 %v275, %v551
    %v789 = vsub.f32 %v276, %v551
    %v790 = vsub.f32 %v277, %v551
    %v791 = vsub.f32 %v278, %v551
    %v792 = vsub.f32 %v279, %v551
    %v793 = vsub.f32 %v280, %v551
    %v794 = vsub.f32 %v281, %v551
    %v795 = vsub.f32 %v282, %v551
    %v796 = vsub.f32 %v283, %v551
    %v797 = vsub.f32 %v284, %v551
    %v798 = vsub.f32 %v285, %v551
    %v799 = vsub.f32 %v286, %v551
    %v800 = vsub.f32 %v287, %v551
    %v801 = vsub.f32 %v288, %v551
    %v802 = vsub.f32 %v289, %v551
    %v803 = vsub.f32 %v290, %v551
    %v804 = vsub.f32 %v291, %v551
    %v805 = vsub.f32 %v292, %v551
    %v806 = vsub.f32 %v293, %v551
    %v807 = vsub.f32 %v294, %v551
    %v808 = vsub.f32 %v295, %v551
    %v809 = vsub.f32 %v296, %v551
    %v810 = vsub.f32 %v297, %v551
    %v811 = vsub.f32 %v298, %v551
    %v812 = vsub.f32 %v299, %v551
    %v813 = vsub.f32 %v300, %v551
    %v814 = vsub.f32 %v301, %v551
    %v815 = vsub.f32 %v302, %v551
    %v816 = vsub.f32 %v303, %v551
    %v817 = vsub.f32 %v304, %v551
    %v818 = vsub.f32 %v305, %v551
    %v819 = vsub.f32 %v306, %v551
    %v820 = vsub.f32 %v307, %v551
    %v821 = vsub.f32 %v308, %v551
    %v822 = vsub.f32 %v309, %v551
    %v823 = vsub.f32 %v310, %v551
    %v824 = vsub.f32 %v311, %v551
    %v825 = vsub.f32 %v312, %v551
    %v826 = vsub.f32 %v313, %v551
    %v827 = vsub.f32 %v314, %v551
    %v828 = vsub.f32 %v315, %v551
    %v829 = vsub.f32 %v316, %v551
    %v830 = vsub.f32 %v317, %v551
    %v831 = vsub.f32 %v318, %v551
    %v832 = vsub.f32 %v319, %v551
    %v833 = vsub.f32 %v320, %v551
    %v834 = vsub.f32 %v321, %v551
    %v835 = vsub.f32 %v322, %v551
    %v836 = vsub.f32 %v323, %v551
    %v837 = vsub.f32 %v324, %v551
    %v838 = vsub.f32 %v325, %v551
    %v839 = vsub.f32 %v326, %v551
    %v840 = vsub.f32 %v327, %v551
    %v841 = vsub.f32 %v328, %v551
    %v842 = vsub.f32 %v329, %v551
    %v843 = vsub.f32 %v330, %v551
    %v844 = vsub.f32 %v331, %v551
    %v845 = vsub.f32 %v332, %v551
    %v846 = vsub.f32 %v333, %v551
    %v847 = vsub.f32 %v334, %v551
    %v848 = vsub.f32 %v335, %v551
    %v849 = vsub.f32 %v336, %v551
    %v850 = vsub.f32 %v337, %v551
    %v851 = vsub.f32 %v338, %v551
    %v852 = vsub.f32 %v339, %v551
    %v853 = vsub.f32 %v340, %v551
    %v854 = vsub.f32 %v341, %v551
    %v855 = vsub.f32 %v342, %v551
    %v856 = vsub.f32 %v343, %v551
    %v857 = vsub.f32 %v344, %v551
    %v858 = vsub.f32 %v345, %v551
    %v859 = vsub.f32 %v346, %v551
    %v860 = vsub.f32 %v347, %v551
    %v861 = vsub.f32 %v348, %v551
    %v862 = vsub.f32 %v349, %v551
    %v863 = vsub.f32 %v350, %v551
    %v864 = vsub.f32 %v351, %v551
    %v865 = vsub.f32 %v352, %v551
    %v866 = vsub.f32 %v353, %v551
    %v867 = vsub.f32 %v354, %v551
    %v868 = vsub.f32 %v355, %v551
    %v869 = vsub.f32 %v356, %v551
    %v870 = vsub.f32 %v357, %v551
    %v871 = vsub.f32 %v358, %v551
    %v872 = vsub.f32 %v359, %v551
    %v873 = vsub.f32 %v360, %v551
    %v874 = vsub.f32 %v361, %v551
    %v875 = vsub.f32 %v362, %v551
    %v876 = vsub.f32 %v363, %v551
    %v877 = vsub.f32 %v364, %v551
    %v878 = vsub.f32 %v365, %v551
    %v879 = vsub.f32 %v366, %v551
    %v880 = vsub.f32 %v367, %v551
    %v881 = vsub.f32 %v368, %v551
    %v882 = vsub.f32 %v369, %v551
    %v883 = vsub.f32 %v370, %v551
    %v884 = vsub.f32 %v371, %v551
    %v885 = vsub.f32 %v372, %v551
    %v886 = vsub.f32 %v373, %v551
    %v887 = vsub.f32 %v374, %v551
    %v888 = vsub.f32 %v375, %v551
    %v889 = vsub.f32 %v376, %v551
    %v890 = vsub.f32 %v377, %v551
    %v891 = vsub.f32 %v378, %v551
    %v892 = vsub.f32 %v379, %v551
    %v893 = vsub.f32 %v380, %v551
    %v894 = vsub.f32 %v381, %v551
    %v895 = vsub.f32 %v382, %v551
    %v896 = vsub.f32 %v383, %v551
    %v897 = vsub.f32 %v384, %v551
    %v898 = vsub.f32 %v385, %v551
    %v899 = vsub.f32 %v386, %v551
    %v900 = vsub.f32 %v387, %v551
    %v901 = vsub.f32 %v388, %v551
    %v902 = vsub.f32 %v389, %v551
    %v903 = vsub.f32 %v390, %v551
    %v904 = vsub.f32 %v391, %v551
    %v905 = vsub.f32 %v392, %v551
    %v906 = vsub.f32 %v393, %v551
    %v907 = vsub.f32 %v394, %v551
    %v908 = vsub.f32 %v395, %v551
    %v909 = vsub.f32 %v396, %v551
    %v910 = vsub.f32 %v397, %v551
    %v911 = vsub.f32 %v398, %v551
    %v912 = vsub.f32 %v399, %v551
    %v913 = vsub.f32 %v400, %v551
    %v914 = vsub.f32 %v401, %v551
    %v915 = vsub.f32 %v402, %v551
    %v916 = vsub.f32 %v403, %v551
    %v917 = vsub.f32 %v404, %v551
    %v918 = vsub.f32 %v405, %v551
    %v919 = vsub.f32 %v406, %v551
    %v920 = vsub.f32 %v407, %v551
    %v921 = vsub.f32 %v408, %v551
    %v922 = vsub.f32 %v409, %v551
    %v923 = vsub.f32 %v410, %v551
    %v924 = vsub.f32 %v411, %v551
    %v925 = vsub.f32 %v412, %v551
    %v926 = vsub.f32 %v413, %v551
    %v927 = vsub.f32 %v414, %v551
    %v928 = vsub.f32 %v415, %v551
    %v929 = vsub.f32 %v416, %v551
    %v930 = vsub.f32 %v417, %v551
    %v931 = vsub.f32 %v418, %v551
    %v932 = vsub.f32 %v419, %v551
    %v933 = vsub.f32 %v420, %v551
    %v934 = vsub.f32 %v421, %v551
    %v935 = vsub.f32 %v422, %v551
    %v936 = vsub.f32 %v423, %v551
    %v937 = vsub.f32 %v424, %v551
    %v938 = vsub.f32 %v425, %v551
    %v939 = vsub.f32 %v426, %v551
    %v940 = vsub.f32 %v427, %v551
    %v941 = vsub.f32 %v428, %v551
    %v942 = vsub.f32 %v429, %v551
    %v943 = vsub.f32 %v430, %v551
    %v944 = vsub.f32 %v431, %v551
    %v945 = vsub.f32 %v432, %v551
    %v946 = vsub.f32 %v433, %v551
    %v947 = vsub.f32 %v434, %v551
    %v948 = vsub.f32 %v435, %v551
    %v949 = vsub.f32 %v436, %v551
    %v950 = vsub.f32 %v437, %v551
    %v951 = vsub.f32 %v438, %v551
    %v952 = vsub.f32 %v439, %v551
    %v953 = vsub.f32 %v440, %v551
    %v954 = vsub.f32 %v441, %v551
    %v955 = vsub.f32 %v442, %v551
    %v956 = vsub.f32 %v443, %v551
    %v957 = vsub.f32 %v444, %v551
    %v958 = vsub.f32 %v445, %v551
    %v959 = vsub.f32 %v446, %v551
    %v960 = vsub.f32 %v447, %v551
    %v961 = vsub.f32 %v448, %v551
    %v962 = vsub.f32 %v449, %v551
    %v963 = vsub.f32 %v450, %v551
    %v964 = vsub.f32 %v451, %v551
    %v965 = vsub.f32 %v452, %v551
    %v966 = vsub.f32 %v453, %v551
    %v967 = vsub.f32 %v454, %v551
    %v968 = vsub.f32 %v455, %v551
    %v969 = vsub.f32 %v456, %v551
    %v970 = vsub.f32 %v457, %v551
    %v971 = vsub.f32 %v458, %v551
    %v972 = vsub.f32 %v459, %v551
    %v973 = vsub.f32 %v460, %v551
    %v974 = vsub.f32 %v461, %v551
    %v975 = vsub.f32 %v462, %v551
    %v976 = vsub.f32 %v463, %v551
    %v977 = vsub.f32 %v464, %v551
    %v978 = vsub.f32 %v465, %v551
    %v979 = vsub.f32 %v466, %v551
    %v980 = vsub.f32 %v467, %v551
    %v981 = vsub.f32 %v468, %v551
    %v982 = vsub.f32 %v469, %v551
    %v983 = vsub.f32 %v470, %v551
    %v984 = vsub.f32 %v471, %v551
    %v985 = vsub.f32 %v472, %v551
    %v986 = vsub.f32 %v473, %v551
    %v987 = vsub.f32 %v474, %v551
    %v988 = vsub.f32 %v475, %v551
    %v989 = vsub.f32 %v476, %v551
    %v990 = vsub.f32 %v477, %v551
    %v991 = vsub.f32 %v478, %v551
    %v992 = vsub.f32 %v479, %v551
    %v993 = vsub.f32 %v480, %v551
    %v994 = vsub.f32 %v481, %v551
    %v995 = vsub.f32 %v482, %v551
    %v996 = vsub.f32 %v483, %v551
    %v997 = vsub.f32 %v484, %v551
    %v998 = vsub.f32 %v485, %v551
    %v999 = vsub.f32 %v486, %v551
    %v1000 = vsub.f32 %v487, %v551
    %v1001 = vsub.f32 %v488, %v551
    %v1002 = vsub.f32 %v489, %v551
    %v1003 = vsub.f32 %v490, %v551
    %v1004 = vsub.f32 %v491, %v551
    %v1005 = vsub.f32 %v492, %v551
    %v1006 = vsub.f32 %v493, %v551
    %v1007 = vsub.f32 %v494, %v551
    %v1008 = vsub.f32 %v495, %v551
    %v1009 = vsub.f32 %v496, %v551
    %v1010 = vsub.f32 %v497, %v551
    %v1011 = vsub.f32 %v498, %v551
    %v1012 = vsub.f32 %v499, %v551
    %v1013 = vsub.f32 %v500, %v551
    %v1014 = vsub.f32 %v501, %v551
    %v1015 = vsub.f32 %v502, %v551
    %v1016 = vsub.f32 %v503, %v551
    %v1017 = vsub.f32 %v504, %v551
    %v1018 = vsub.f32 %v505, %v551
    %v1019 = vsub.f32 %v506, %v551
    %v1020 = vsub.f32 %v507, %v551
    %v1021 = vsub.f32 %v508, %v551
    %v1022 = vsub.f32 %v509, %v551
    %v1023 = vsub.f32 %v510, %v551
    %v1024 = vsub.f32 %v511, %v551
    %v1025 = vsub.f32 %v512, %v551
    %v1026 = vsub.f32 %v513, %v551
    %v1027 = vsub.f32 %v514, %v551
    %v1028 = vsub.f32 %v515, %v551
    %v1029 = vsub.f32 %v516, %v551
    %v1030 = vsub.f32 %v517, %v551
    %v1031 = vsub.f32 %v518, %v551
    %v1032 = vsub.f32 %v519, %v551
    %v1033 = vsub.f32 %v520, %v551
    %v1034 = vsub.f32 %v521, %v551
    %v1035 = vsub.f32 %v522, %v551
    %v1036 = vsub.f32 %v523, %v551
    %v1037 = vsub.f32 %v524, %v551
    %v1038 = vsub.f32 %v525, %v551
    %v1039 = vsub.f32 %v526, %v551
    %v1040 = vsub.f32 %v527, %v551
    %v1041 = vsub.f32 %v528, %v551
    %v1042 = vsub.f32 %v529, %v551
    %v1043 = vsub.f32 %v530, %v551
    %v1044 = vsub.f32 %v531, %v551
    %v1045 = vsub.f32 %v532, %v551
    %v1046 = vsub.f32 %v533, %v551
    %v1047 = vsub.f32 %v534, %v551
    %v1048 = vsub.f32 %v535, %v551
    %v1049 = vsub.f32 %v536, %v551
    %v1050 = vsub.f32 %v537, %v551
    %v1051 = vsub.f32 %v538, %v551
    %v1052 = vsub.f32 %v539, %v551
    %v1053 = vsub.f32 %v540, %v551
    %v1054 = vsub.f32 %v541, %v551
    %v1055 = vsub.f32 %v542, %v551
    %v1056 = vsub.f32 %v543, %v551
    %v1057 = vsub.f32 %v544, %v551
    %v1058 = vsub.f32 %v545, %v551
    %v1059 = vsub.f32 %v546, %v551
    %v1060 = vsub.f32 %v547, %v551
    %v1061 = vsub.f32 %v548, %v551
    %v1062 = vsub.f32 %v549, %v551
    %v1063 = vsub.f32 %v550, %v551
    %v1064 = vmul.f32 %v552, %v552
    %v1065 = vmul.f32 %v553, %v553
    %v1066 = vmul.f32 %v554, %v554
    %v1067 = vmul.f32 %v555, %v555
    %v1068 = vmul.f32 %v556, %v556
    %v1069 = vmul.f32 %v557, %v557
    %v1070 = vmul.f32 %v558, %v558
    %v1071 = vmul.f32 %v559, %v559
    %v1072 = vmul.f32 %v560, %v560
    %v1073 = vmul.f32 %v561, %v561
    %v1074 = vmul.f32 %v562, %v562
    %v1075 = vmul.f32 %v563, %v563
    %v1076 = vmul.f32 %v564, %v564
    %v1077 = vmul.f32 %v565, %v565
    %v1078 = vmul.f32 %v566, %v566
    %v1079 = vmul.f32 %v567, %v567
    %v1080 = vmul.f32 %v568, %v568
    %v1081 = vmul.f32 %v569, %v569
    %v1082 = vmul.f32 %v570, %v570
    %v1083 = vmul.f32 %v571, %v571
    %v1084 = vmul.f32 %v572, %v572
    %v1085 = vmul.f32 %v573, %v573
    %v1086 = vmul.f32 %v574, %v574
    %v1087 = vmul.f32 %v575, %v575
    %v1088 = vmul.f32 %v576, %v576
    %v1089 = vmul.f32 %v577, %v577
    %v1090 = vmul.f32 %v578, %v578
    %v1091 = vmul.f32 %v579, %v579
    %v1092 = vmul.f32 %v580, %v580
    %v1093 = vmul.f32 %v581, %v581
    %v1094 = vmul.f32 %v582, %v582
    %v1095 = vmul.f32 %v583, %v583
    %v1096 = vmul.f32 %v584, %v584
    %v1097 = vmul.f32 %v585, %v585
    %v1098 = vmul.f32 %v586, %v586
    %v1099 = vmul.f32 %v587, %v587
    %v1100 = vmul.f32 %v588, %v588
    %v1101 = vmul.f32 %v589, %v589
    %v1102 = vmul.f32 %v590, %v590
    %v1103 = vmul.f32 %v591, %v591
    %v1104 = vmul.f32 %v592, %v592
    %v1105 = vmul.f32 %v593, %v593
    %v1106 = vmul.f32 %v594, %v594
    %v1107 = vmul.f32 %v595, %v595
    %v1108 = vmul.f32 %v596, %v596
    %v1109 = vmul.f32 %v597, %v597
    %v1110 = vmul.f32 %v598, %v598
    %v1111 = vmul.f32 %v599, %v599
    %v1112 = vmul.f32 %v600, %v600
    %v1113 = vmul.f32 %v601, %v601
    %v1114 = vmul.f32 %v602, %v602
    %v1115 = vmul.f32 %v603, %v603
    %v1116 = vmul.f32 %v604, %v604
    %v1117 = vmul.f32 %v605, %v605
    %v1118 = vmul.f32 %v606, %v606
    %v1119 = vmul.f32 %v607, %v607
    %v1120 = vmul.f32 %v608, %v608
    %v1121 = vmul.f32 %v609, %v609
    %v1122 = vmul.f32 %v610, %v610
    %v1123 = vmul.f32 %v611, %v611
    %v1124 = vmul.f32 %v612, %v612
    %v1125 = vmul.f32 %v613, %v613
    %v1126 = vmul.f32 %v614, %v614
    %v1127 = vmul.f32 %v615, %v615
    %v1128 = vmul.f32 %v616, %v616
    %v1129 = vmul.f32 %v617, %v617
    %v1130 = vmul.f32 %v618, %v618
    %v1131 = vmul.f32 %v619, %v619
    %v1132 = vmul.f32 %v620, %v620
    %v1133 = vmul.f32 %v621, %v621
    %v1134 = vmul.f32 %v622, %v622
    %v1135 = vmul.f32 %v623, %v623
    %v1136 = vmul.f32 %v624, %v624
    %v1137 = vmul.f32 %v625, %v625
    %v1138 = vmul.f32 %v626, %v626
    %v1139 = vmul.f32 %v627, %v627
    %v1140 = vmul.f32 %v628, %v628
    %v1141 = vmul.f32 %v629, %v629
    %v1142 = vmul.f32 %v630, %v630
    %v1143 = vmul.f32 %v631, %v631
    %v1144 = vmul.f32 %v632, %v632
    %v1145 = vmul.f32 %v633, %v633
    %v1146 = vmul.f32 %v634, %v634
    %v1147 = vmul.f32 %v635, %v635
    %v1148 = vmul.f32 %v636, %v636
    %v1149 = vmul.f32 %v637, %v637
    %v1150 = vmul.f32 %v638, %v638
    %v1151 = vmul.f32 %v639, %v639
    %v1152 = vmul.f32 %v640, %v640
    %v1153 = vmul.f32 %v641, %v641
    %v1154 = vmul.f32 %v642, %v642
    %v1155 = vmul.f32 %v643, %v643
    %v1156 = vmul.f32 %v644, %v644
    %v1157 = vmul.f32 %v645, %v645
    %v1158 = vmul.f32 %v646, %v646
    %v1159 = vmul.f32 %v647, %v647
    %v1160 = vmul.f32 %v648, %v648
    %v1161 = vmul.f32 %v649, %v649
    %v1162 = vmul.f32 %v650, %v650
    %v1163 = vmul.f32 %v651, %v651
    %v1164 = vmul.f32 %v652, %v652
    %v1165 = vmul.f32 %v653, %v653
    %v1166 = vmul.f32 %v654, %v654
    %v1167 = vmul.f32 %v655, %v655
    %v1168 = vmul.f32 %v656, %v656
    %v1169 = vmul.f32 %v657, %v657
    %v1170 = vmul.f32 %v658, %v658
    %v1171 = vmul.f32 %v659, %v659
    %v1172 = vmul.f32 %v660, %v660
    %v1173 = vmul.f32 %v661, %v661
    %v1174 = vmul.f32 %v662, %v662
    %v1175 = vmul.f32 %v663, %v663
    %v1176 = vmul.f32 %v664, %v664
    %v1177 = vmul.f32 %v665, %v665
    %v1178 = vmul.f32 %v666, %v666
    %v1179 = vmul.f32 %v667, %v667
    %v1180 = vmul.f32 %v668, %v668
    %v1181 = vmul.f32 %v669, %v669
    %v1182 = vmul.f32 %v670, %v670
    %v1183 = vmul.f32 %v671, %v671
    %v1184 = vmul.f32 %v672, %v672
    %v1185 = vmul.f32 %v673, %v673
    %v1186 = vmul.f32 %v674, %v674
    %v1187 = vmul.f32 %v675, %v675
    %v1188 = vmul.f32 %v676, %v676
    %v1189 = vmul.f32 %v677, %v677
    %v1190 = vmul.f32 %v678, %v678
    %v1191 = vmul.f32 %v679, %v679
    %v1192 = vmul.f32 %v680, %v680
    %v1193 = vmul.f32 %v681, %v681
    %v1194 = vmul.f32 %v682, %v682
    %v1195 = vmul.f32 %v683, %v683
    %v1196 = vmul.f32 %v684, %v684
    %v1197 = vmul.f32 %v685, %v685
    %v1198 = vmul.f32 %v686, %v686
    %v1199 = vmul.f32 %v687, %v687
    %v1200 = vmul.f32 %v688, %v688
    %v1201 = vmul.f32 %v689, %v689
    %v1202 = vmul.f32 %v690, %v690
    %v1203 = vmul.f32 %v691, %v691
    %v1204 = vmul.f32 %v692, %v692
    %v1205 = vmul.f32 %v693, %v693
    %v1206 = vmul.f32 %v694, %v694
    %v1207 = vmul.f32 %v695, %v695
    %v1208 = vmul.f32 %v696, %v696
    %v1209 = vmul.f32 %v697, %v697
    %v1210 = vmul.f32 %v698, %v698
    %v1211 = vmul.f32 %v699, %v699
    %v1212 = vmul.f32 %v700, %v700
    %v1213 = vmul.f32 %v701, %v701
    %v1214 = vmul.f32 %v702, %v702
    %v1215 = vmul.f32 %v703, %v703
    %v1216 = vmul.f32 %v704, %v704
    %v1217 = vmul.f32 %v705, %v705
    %v1218 = vmul.f32 %v706, %v706
    %v1219 = vmul.f32 %v707, %v707
    %v1220 = vmul.f32 %v708, %v708
    %v1221 = vmul.f32 %v709, %v709
    %v1222 = vmul.f32 %v710, %v710
    %v1223 = vmul.f32 %v711, %v711
    %v1224 = vmul.f32 %v712, %v712
    %v1225 = vmul.f32 %v713, %v713
    %v1226 = vmul.f32 %v714, %v714
    %v1227 = vmul.f32 %v715, %v715
    %v1228 = vmul.f32 %v716, %v716
    %v1229 = vmul.f32 %v717, %v717
    %v1230 = vmul.f32 %v718, %v718
    %v1231 = vmul.f32 %v719, %v719
    %v1232 = vmul.f32 %v720, %v720
    %v1233 = vmul.f32 %v721, %v721
    %v1234 = vmul.f32 %v722, %v722
    %v1235 = vmul.f32 %v723, %v723
    %v1236 = vmul.f32 %v724, %v724
    %v1237 = vmul.f32 %v725, %v725
    %v1238 = vmul.f32 %v726, %v726
    %v1239 = vmul.f32 %v727, %v727
    %v1240 = vmul.f32 %v728, %v728
    %v1241 = vmul.f32 %v729, %v729
    %v1242 = vmul.f32 %v730, %v730
    %v1243 = vmul.f32 %v731, %v731
    %v1244 = vmul.f32 %v732, %v732
    %v1245 = vmul.f32 %v733, %v733
    %v1246 = vmul.f32 %v734, %v734
    %v1247 = vmul.f32 %v735, %v735
    %v1248 = vmul.f32 %v736, %v736
    %v1249 = vmul.f32 %v737, %v737
    %v1250 = vmul.f32 %v738, %v738
    %v1251 = vmul.f32 %v739, %v739
    %v1252 = vmul.f32 %v740, %v740
    %v1253 = vmul.f32 %v741, %v741
    %v1254 = vmul.f32 %v742, %v742
    %v1255 = vmul.f32 %v743, %v743
    %v1256 = vmul.f32 %v744, %v744
    %v1257 = vmul.f32 %v745, %v745
    %v1258 = vmul.f32 %v746, %v746
    %v1259 = vmul.f32 %v747, %v747
    %v1260 = vmul.f32 %v748, %v748
    %v1261 = vmul.f32 %v749, %v749
    %v1262 = vmul.f32 %v750, %v750
    %v1263 = vmul.f32 %v751, %v751
    %v1264 = vmul.f32 %v752, %v752
    %v1265 = vmul.f32 %v753, %v753
    %v1266 = vmul.f32 %v754, %v754
    %v1267 = vmul.f32 %v755, %v755
    %v1268 = vmul.f32 %v756, %v756
    %v1269 = vmul.f32 %v757, %v757
    %v1270 = vmul.f32 %v758, %v758
    %v1271 = vmul.f32 %v759, %v759
    %v1272 = vmul.f32 %v760, %v760
    %v1273 = vmul.f32 %v761, %v761
    %v1274 = vmul.f32 %v762, %v762
    %v1275 = vmul.f32 %v763, %v763
    %v1276 = vmul.f32 %v764, %v764
    %v1277 = vmul.f32 %v765, %v765
    %v1278 = vmul.f32 %v766, %v766
    %v1279 = vmul.f32 %v767, %v767
    %v1280 = vmul.f32 %v768, %v768
    %v1281 = vmul.f32 %v769, %v769
    %v1282 = vmul.f32 %v770, %v770
    %v1283 = vmul.f32 %v771, %v771
    %v1284 = vmul.f32 %v772, %v772
    %v1285 = vmul.f32 %v773, %v773
    %v1286 = vmul.f32 %v774, %v774
    %v1287 = vmul.f32 %v775, %v775
    %v1288 = vmul.f32 %v776, %v776
    %v1289 = vmul.f32 %v777, %v777
    %v1290 = vmul.f32 %v778, %v778
    %v1291 = vmul.f32 %v779, %v779
    %v1292 = vmul.f32 %v780, %v780
    %v1293 = vmul.f32 %v781, %v781
    %v1294 = vmul.f32 %v782, %v782
    %v1295 = vmul.f32 %v783, %v783
    %v1296 = vmul.f32 %v784, %v784
    %v1297 = vmul.f32 %v785, %v785
    %v1298 = vmul.f32 %v786, %v786
    %v1299 = vmul.f32 %v787, %v787
    %v1300 = vmul.f32 %v788, %v788
    %v1301 = vmul.f32 %v789, %v789
    %v1302 = vmul.f32 %v790, %v790
    %v1303 = vmul.f32 %v791, %v791
    %v1304 = vmul.f32 %v792, %v792
    %v1305 = vmul.f32 %v793, %v793
    %v1306 = vmul.f32 %v794, %v794
    %v1307 = vmul.f32 %v795, %v795
    %v1308 = vmul.f32 %v796, %v796
    %v1309 = vmul.f32 %v797, %v797
    %v1310 = vmul.f32 %v798, %v798
    %v1311 = vmul.f32 %v799, %v799
    %v1312 = vmul.f32 %v800, %v800
    %v1313 = vmul.f32 %v801, %v801
    %v1314 = vmul.f32 %v802, %v802
    %v1315 = vmul.f32 %v803, %v803
    %v1316 = vmul.f32 %v804, %v804
    %v1317 = vmul.f32 %v805, %v805
    %v1318 = vmul.f32 %v806, %v806
    %v1319 = vmul.f32 %v807, %v807
    %v1320 = vmul.f32 %v808, %v808
    %v1321 = vmul.f32 %v809, %v809
    %v1322 = vmul.f32 %v810, %v810
    %v1323 = vmul.f32 %v811, %v811
    %v1324 = vmul.f32 %v812, %v812
    %v1325 = vmul.f32 %v813, %v813
    %v1326 = vmul.f32 %v814, %v814
    %v1327 = vmul.f32 %v815, %v815
    %v1328 = vmul.f32 %v816, %v816
    %v1329 = vmul.f32 %v817, %v817
    %v1330 = vmul.f32 %v818, %v818
    %v1331 = vmul.f32 %v819, %v819
    %v1332 = vmul.f32 %v820, %v820
    %v1333 = vmul.f32 %v821, %v821
    %v1334 = vmul.f32 %v822, %v822
    %v1335 = vmul.f32 %v823, %v823
    %v1336 = vmul.f32 %v824, %v824
    %v1337 = vmul.f32 %v825, %v825
    %v1338 = vmul.f32 %v826, %v826
    %v1339 = vmul.f32 %v827, %v827
    %v1340 = vmul.f32 %v828, %v828
    %v1341 = vmul.f32 %v829, %v829
    %v1342 = vmul.f32 %v830, %v830
    %v1343 = vmul.f32 %v831, %v831
    %v1344 = vmul.f32 %v832, %v832
    %v1345 = vmul.f32 %v833, %v833
    %v1346 = vmul.f32 %v834, %v834
    %v1347 = vmul.f32 %v835, %v835
    %v1348 = vmul.f32 %v836, %v836
    %v1349 = vmul.f32 %v837, %v837
    %v1350 = vmul.f32 %v838, %v838
    %v1351 = vmul.f32 %v839, %v839
    %v1352 = vmul.f32 %v840, %v840
    %v1353 = vmul.f32 %v841, %v841
    %v1354 = vmul.f32 %v842, %v842
    %v1355 = vmul.f32 %v843, %v843
    %v1356 = vmul.f32 %v844, %v844
    %v1357 = vmul.f32 %v845, %v845
    %v1358 = vmul.f32 %v846, %v846
    %v1359 = vmul.f32 %v847, %v847
    %v1360 = vmul.f32 %v848, %v848
    %v1361 = vmul.f32 %v849, %v849
    %v1362 = vmul.f32 %v850, %v850
    %v1363 = vmul.f32 %v851, %v851
    %v1364 = vmul.f32 %v852, %v852
    %v1365 = vmul.f32 %v853, %v853
    %v1366 = vmul.f32 %v854, %v854
    %v1367 = vmul.f32 %v855, %v855
    %v1368 = vmul.f32 %v856, %v856
    %v1369 = vmul.f32 %v857, %v857
    %v1370 = vmul.f32 %v858, %v858
    %v1371 = vmul.f32 %v859, %v859
    %v1372 = vmul.f32 %v860, %v860
    %v1373 = vmul.f32 %v861, %v861
    %v1374 = vmul.f32 %v862, %v862
    %v1375 = vmul.f32 %v863, %v863
    %v1376 = vmul.f32 %v864, %v864
    %v1377 = vmul.f32 %v865, %v865
    %v1378 = vmul.f32 %v866, %v866
    %v1379 = vmul.f32 %v867, %v867
    %v1380 = vmul.f32 %v868, %v868
    %v1381 = vmul.f32 %v869, %v869
    %v1382 = vmul.f32 %v870, %v870
    %v1383 = vmul.f32 %v871, %v871
    %v1384 = vmul.f32 %v872, %v872
    %v1385 = vmul.f32 %v873, %v873
    %v1386 = vmul.f32 %v874, %v874
    %v1387 = vmul.f32 %v875, %v875
    %v1388 = vmul.f32 %v876, %v876
    %v1389 = vmul.f32 %v877, %v877
    %v1390 = vmul.f32 %v878, %v878
    %v1391 = vmul.f32 %v879, %v879
    %v1392 = vmul.f32 %v880, %v880
    %v1393 = vmul.f32 %v881, %v881
    %v1394 = vmul.f32 %v882, %v882
    %v1395 = vmul.f32 %v883, %v883
    %v1396 = vmul.f32 %v884, %v884
    %v1397 = vmul.f32 %v885, %v885
    %v1398 = vmul.f32 %v886, %v886
    %v1399 = vmul.f32 %v887, %v887
    %v1400 = vmul.f32 %v888, %v888
    %v1401 = vmul.f32 %v889, %v889
    %v1402 = vmul.f32 %v890, %v890
    %v1403 = vmul.f32 %v891, %v891
    %v1404 = vmul.f32 %v892, %v892
    %v1405 = vmul.f32 %v893, %v893
    %v1406 = vmul.f32 %v894, %v894
    %v1407 = vmul.f32 %v895, %v895
    %v1408 = vmul.f32 %v896, %v896
    %v1409 = vmul.f32 %v897, %v897
    %v1410 = vmul.f32 %v898, %v898
    %v1411 = vmul.f32 %v899, %v899
    %v1412 = vmul.f32 %v900, %v900
    %v1413 = vmul.f32 %v901, %v901
    %v1414 = vmul.f32 %v902, %v902
    %v1415 = vmul.f32 %v903, %v903
    %v1416 = vmul.f32 %v904, %v904
    %v1417 = vmul.f32 %v905, %v905
    %v1418 = vmul.f32 %v906, %v906
    %v1419 = vmul.f32 %v907, %v907
    %v1420 = vmul.f32 %v908, %v908
    %v1421 = vmul.f32 %v909, %v909
    %v1422 = vmul.f32 %v910, %v910
    %v1423 = vmul.f32 %v911, %v911
    %v1424 = vmul.f32 %v912, %v912
    %v1425 = vmul.f32 %v913, %v913
    %v1426 = vmul.f32 %v914, %v914
    %v1427 = vmul.f32 %v915, %v915
    %v1428 = vmul.f32 %v916, %v916
    %v1429 = vmul.f32 %v917, %v917
    %v1430 = vmul.f32 %v918, %v918
    %v1431 = vmul.f32 %v919, %v919
    %v1432 = vmul.f32 %v920, %v920
    %v1433 = vmul.f32 %v921, %v921
    %v1434 = vmul.f32 %v922, %v922
    %v1435 = vmul.f32 %v923, %v923
    %v1436 = vmul.f32 %v924, %v924
    %v1437 = vmul.f32 %v925, %v925
    %v1438 = vmul.f32 %v926, %v926
    %v1439 = vmul.f32 %v927, %v927
    %v1440 = vmul.f32 %v928, %v928
    %v1441 = vmul.f32 %v929, %v929
    %v1442 = vmul.f32 %v930, %v930
    %v1443 = vmul.f32 %v931, %v931
    %v1444 = vmul.f32 %v932, %v932
    %v1445 = vmul.f32 %v933, %v933
    %v1446 = vmul.f32 %v934, %v934
    %v1447 = vmul.f32 %v935, %v935
    %v1448 = vmul.f32 %v936, %v936
    %v1449 = vmul.f32 %v937, %v937
    %v1450 = vmul.f32 %v938, %v938
    %v1451 = vmul.f32 %v939, %v939
    %v1452 = vmul.f32 %v940, %v940
    %v1453 = vmul.f32 %v941, %v941
    %v1454 = vmul.f32 %v942, %v942
    %v1455 = vmul.f32 %v943, %v943
    %v1456 = vmul.f32 %v944, %v944
    %v1457 = vmul.f32 %v945, %v945
    %v1458 = vmul.f32 %v946, %v946
    %v1459 = vmul.f32 %v947, %v947
    %v1460 = vmul.f32 %v948, %v948
    %v1461 = vmul.f32 %v949, %v949
    %v1462 = vmul.f32 %v950, %v950
    %v1463 = vmul.f32 %v951, %v951
    %v1464 = vmul.f32 %v952, %v952
    %v1465 = vmul.f32 %v953, %v953
    %v1466 = vmul.f32 %v954, %v954
    %v1467 = vmul.f32 %v955, %v955
    %v1468 = vmul.f32 %v956, %v956
    %v1469 = vmul.f32 %v957, %v957
    %v1470 = vmul.f32 %v958, %v958
    %v1471 = vmul.f32 %v959, %v959
    %v1472 = vmul.f32 %v960, %v960
    %v1473 = vmul.f32 %v961, %v961
    %v1474 = vmul.f32 %v962, %v962
    %v1475 = vmul.f32 %v963, %v963
    %v1476 = vmul.f32 %v964, %v964
    %v1477 = vmul.f32 %v965, %v965
    %v1478 = vmul.f32 %v966, %v966
    %v1479 = vmul.f32 %v967, %v967
    %v1480 = vmul.f32 %v968, %v968
    %v1481 = vmul.f32 %v969, %v969
    %v1482 = vmul.f32 %v970, %v970
    %v1483 = vmul.f32 %v971, %v971
    %v1484 = vmul.f32 %v972, %v972
    %v1485 = vmul.f32 %v973, %v973
    %v1486 = vmul.f32 %v974, %v974
    %v1487 = vmul.f32 %v975, %v975
    %v1488 = vmul.f32 %v976, %v976
    %v1489 = vmul.f32 %v977, %v977
    %v1490 = vmul.f32 %v978, %v978
    %v1491 = vmul.f32 %v979, %v979
    %v1492 = vmul.f32 %v980, %v980
    %v1493 = vmul.f32 %v981, %v981
    %v1494 = vmul.f32 %v982, %v982
    %v1495 = vmul.f32 %v983, %v983
    %v1496 = vmul.f32 %v984, %v984
    %v1497 = vmul.f32 %v985, %v985
    %v1498 = vmul.f32 %v986, %v986
    %v1499 = vmul.f32 %v987, %v987
    %v1500 = vmul.f32 %v988, %v988
    %v1501 = vmul.f32 %v989, %v989
    %v1502 = vmul.f32 %v990, %v990
    %v1503 = vmul.f32 %v991, %v991
    %v1504 = vmul.f32 %v992, %v992
    %v1505 = vmul.f32 %v993, %v993
    %v1506 = vmul.f32 %v994, %v994
    %v1507 = vmul.f32 %v995, %v995
    %v1508 = vmul.f32 %v996, %v996
    %v1509 = vmul.f32 %v997, %v997
    %v1510 = vmul.f32 %v998, %v998
    %v1511 = vmul.f32 %v999, %v999
    %v1512 = vmul.f32 %v1000, %v1000
    %v1513 = vmul.f32 %v1001, %v1001
    %v1514 = vmul.f32 %v1002, %v1002
    %v1515 = vmul.f32 %v1003, %v1003
    %v1516 = vmul.f32 %v1004, %v1004
    %v1517 = vmul.f32 %v1005, %v1005
    %v1518 = vmul.f32 %v1006, %v1006
    %v1519 = vmul.f32 %v1007, %v1007
    %v1520 = vmul.f32 %v1008, %v1008
    %v1521 = vmul.f32 %v1009, %v1009
    %v1522 = vmul.f32 %v1010, %v1010
    %v1523 = vmul.f32 %v1011, %v1011
    %v1524 = vmul.f32 %v1012, %v1012
    %v1525 = vmul.f32 %v1013, %v1013
    %v1526 = vmul.f32 %v1014, %v1014
    %v1527 = vmul.f32 %v1015, %v1015
    %v1528 = vmul.f32 %v1016, %v1016
    %v1529 = vmul.f32 %v1017, %v1017
    %v1530 = vmul.f32 %v1018, %v1018
    %v1531 = vmul.f32 %v1019, %v1019
    %v1532 = vmul.f32 %v1020, %v1020
    %v1533 = vmul.f32 %v1021, %v1021
    %v1534 = vmul.f32 %v1022, %v1022
    %v1535 = vmul.f32 %v1023, %v1023
    %v1536 = vmul.f32 %v1024, %v1024
    %v1537 = vmul.f32 %v1025, %v1025
    %v1538 = vmul.f32 %v1026, %v1026
    %v1539 = vmul.f32 %v1027, %v1027
    %v1540 = vmul.f32 %v1028, %v1028
    %v1541 = vmul.f32 %v1029, %v1029
    %v1542 = vmul.f32 %v1030, %v1030
    %v1543 = vmul.f32 %v1031, %v1031
    %v1544 = vmul.f32 %v1032, %v1032
    %v1545 = vmul.f32 %v1033, %v1033
    %v1546 = vmul.f32 %v1034, %v1034
    %v1547 = vmul.f32 %v1035, %v1035
    %v1548 = vmul.f32 %v1036, %v1036
    %v1549 = vmul.f32 %v1037, %v1037
    %v1550 = vmul.f32 %v1038, %v1038
    %v1551 = vmul.f32 %v1039, %v1039
    %v1552 = vmul.f32 %v1040, %v1040
    %v1553 = vmul.f32 %v1041, %v1041
    %v1554 = vmul.f32 %v1042, %v1042
    %v1555 = vmul.f32 %v1043, %v1043
    %v1556 = vmul.f32 %v1044, %v1044
    %v1557 = vmul.f32 %v1045, %v1045
    %v1558 = vmul.f32 %v1046, %v1046
    %v1559 = vmul.f32 %v1047, %v1047
    %v1560 = vmul.f32 %v1048, %v1048
    %v1561 = vmul.f32 %v1049, %v1049
    %v1562 = vmul.f32 %v1050, %v1050
    %v1563 = vmul.f32 %v1051, %v1051
    %v1564 = vmul.f32 %v1052, %v1052
    %v1565 = vmul.f32 %v1053, %v1053
    %v1566 = vmul.f32 %v1054, %v1054
    %v1567 = vmul.f32 %v1055, %v1055
    %v1568 = vmul.f32 %v1056, %v1056
    %v1569 = vmul.f32 %v1057, %v1057
    %v1570 = vmul.f32 %v1058, %v1058
    %v1571 = vmul.f32 %v1059, %v1059
    %v1572 = vmul.f32 %v1060, %v1060
    %v1573 = vmul.f32 %v1061, %v1061
    %v1574 = vmul.f32 %v1062, %v1062
    %v1575 = vmul.f32 %v1063, %v1063
    %v1576 = vstv %s38
    %v1577 = vmul.f32 %v1064, %v1576
    %v1578 = vmul.f32 %v1065, %v1576
    %v1579 = vmul.f32 %v1066, %v1576
    %v1580 = vmul.f32 %v1067, %v1576
    %v1581 = vmul.f32 %v1068, %v1576
    %v1582 = vmul.f32 %v1069, %v1576
    %v1583 = vmul.f32 %v1070, %v1576
    %v1584 = vmul.f32 %v1071, %v1576
    %v1585 = vmul.f32 %v1072, %v1576
    %v1586 = vmul.f32 %v1073, %v1576
    %v1587 = vmul.f32 %v1074, %v1576
    %v1588 = vmul.f32 %v1075, %v1576
    %v1589 = vmul.f32 %v1076, %v1576
    %v1590 = vmul.f32 %v1077, %v1576
    %v1591 = vmul.f32 %v1078, %v1576
    %v1592 = vmul.f32 %v1079, %v1576
    %v1593 = vmul.f32 %v1080, %v1576
    %v1594 = vmul.f32 %v1081, %v1576
    %v1595 = vmul.f32 %v1082, %v1576
    %v1596 = vmul.f32 %v1083, %v1576
    %v1597 = vmul.f32 %v1084, %v1576
    %v1598 = vmul.f32 %v1085, %v1576
    %v1599 = vmul.f32 %v1086, %v1576
    %v1600 = vmul.f32 %v1087, %v1576
    %v1601 = vmul.f32 %v1088, %v1576
    %v1602 = vmul.f32 %v1089, %v1576
    %v1603 = vmul.f32 %v1090, %v1576
    %v1604 = vmul.f32 %v1091, %v1576
    %v1605 = vmul.f32 %v1092, %v1576
    %v1606 = vmul.f32 %v1093, %v1576
    %v1607 = vmul.f32 %v1094, %v1576
    %v1608 = vmul.f32 %v1095, %v1576
    %v1609 = vmul.f32 %v1096, %v1576
    %v1610 = vmul.f32 %v1097, %v1576
    %v1611 = vmul.f32 %v1098, %v1576
    %v1612 = vmul.f32 %v1099, %v1576
    %v1613 = vmul.f32 %v1100, %v1576
    %v1614 = vmul.f32 %v1101, %v1576
    %v1615 = vmul.f32 %v1102, %v1576
    %v1616 = vmul.f32 %v1103, %v1576
    %v1617 = vmul.f32 %v1104, %v1576
    %v1618 = vmul.f32 %v1105, %v1576
    %v1619 = vmul.f32 %v1106, %v1576
    %v1620 = vmul.f32 %v1107, %v1576
    %v1621 = vmul.f32 %v1108, %v1576
    %v1622 = vmul.f32 %v1109, %v1576
    %v1623 = vmul.f32 %v1110, %v1576
    %v1624 = vmul.f32 %v1111, %v1576
    %v1625 = vmul.f32 %v1112, %v1576
    %v1626 = vmul.f32 %v1113, %v1576
    %v1627 = vmul.f32 %v1114, %v1576
    %v1628 = vmul.f32 %v1115, %v1576
    %v1629 = vmul.f32 %v1116, %v1576
    %v1630 = vmul.f32 %v1117, %v1576
    %v1631 = vmul.f32 %v1118, %v1576
    %v1632 = vmul.f32 %v1119, %v1576
    %v1633 = vmul.f32 %v1120, %v1576
    %v1634 = vmul.f32 %v1121, %v1576
    %v1635 = vmul.f32 %v1122, %v1576
    %v1636 = vmul.f32 %v1123, %v1576
    %v1637 = vmul.f32 %v1124, %v1576
    %v1638 = vmul.f32 %v1125, %v1576
    %v1639 = vmul.f32 %v1126, %v1576
    %v1640 = vmul.f32 %v1127, %v1576
    %v1641 = vmul.f32 %v1128, %v1576
    %v1642 = vmul.f32 %v1129, %v1576
    %v1643 = vmul.f32 %v1130, %v1576
    %v1644 = vmul.f32 %v1131, %v1576
    %v1645 = vmul.f32 %v1132, %v1576
    %v1646 = vmul.f32 %v1133, %v1576
    %v1647 = vmul.f32 %v1134, %v1576
    %v1648 = vmul.f32 %v1135, %v1576
    %v1649 = vmul.f32 %v1136, %v1576
    %v1650 = vmul.f32 %v1137, %v1576
    %v1651 = vmul.f32 %v1138, %v1576
    %v1652 = vmul.f32 %v1139, %v1576
    %v1653 = vmul.f32 %v1140, %v1576
    %v1654 = vmul.f32 %v1141, %v1576
    %v1655 = vmul.f32 %v1142, %v1576
    %v1656 = vmul.f32 %v1143, %v1576
    %v1657 = vmul.f32 %v1144, %v1576
    %v1658 = vmul.f32 %v1145, %v1576
    %v1659 = vmul.f32 %v1146, %v1576
    %v1660 = vmul.f32 %v1147, %v1576
    %v1661 = vmul.f32 %v1148, %v1576
    %v1662 = vmul.f32 %v1149, %v1576
    %v1663 = vmul.f32 %v1150, %v1576
    %v1664 = vmul.f32 %v1151, %v1576
    %v1665 = vmul.f32 %v1152, %v1576
    %v1666 = vmul.f32 %v1153, %v1576
    %v1667 = vmul.f32 %v1154, %v1576
    %v1668 = vmul.f32 %v1155, %v1576
    %v1669 = vmul.f32 %v1156, %v1576
    %v1670 = vmul.f32 %v1157, %v1576
    %v1671 = vmul.f32 %v1158, %v1576
    %v1672 = vmul.f32 %v1159, %v1576
    %v1673 = vmul.f32 %v1160, %v1576
    %v1674 = vmul.f32 %v1161, %v1576
    %v1675 = vmul.f32 %v1162, %v1576
    %v1676 = vmul.f32 %v1163, %v1576
    %v1677 = vmul.f32 %v1164, %v1576
    %v1678 = vmul.f32 %v1165, %v1576
    %v1679 = vmul.f32 %v1166, %v1576
    %v1680 = vmul.f32 %v1167, %v1576
    %v1681 = vmul.f32 %v1168, %v1576
    %v1682 = vmul.f32 %v1169, %v1576
    %v1683 = vmul.f32 %v1170, %v1576
    %v1684 = vmul.f32 %v1171, %v1576
    %v1685 = vmul.f32 %v1172, %v1576
    %v1686 = vmul.f32 %v1173, %v1576
    %v1687 = vmul.f32 %v1174, %v1576
    %v1688 = vmul.f32 %v1175, %v1576
    %v1689 = vmul.f32 %v1176, %v1576
    %v1690 = vmul.f32 %v1177, %v1576
    %v1691 = vmul.f32 %v1178, %v1576
    %v1692 = vmul.f32 %v1179, %v1576
    %v1693 = vmul.f32 %v1180, %v1576
    %v1694 = vmul.f32 %v1181, %v1576
    %v1695 = vmul.f32 %v1182, %v1576
    %v1696 = vmul.f32 %v1183, %v1576
    %v1697 = vmul.f32 %v1184, %v1576
    %v1698 = vmul.f32 %v1185, %v1576
    %v1699 = vmul.f32 %v1186, %v1576
    %v1700 = vmul.f32 %v1187, %v1576
    %v1701 = vmul.f32 %v1188, %v1576
    %v1702 = vmul.f32 %v1189, %v1576
    %v1703 = vmul.f32 %v1190, %v1576
    %v1704 = vmul.f32 %v1191, %v1576
    %v1705 = vmul.f32 %v1192, %v1576
    %v1706 = vmul.f32 %v1193, %v1576
    %v1707 = vmul.f32 %v1194, %v1576
    %v1708 = vmul.f32 %v1195, %v1576
    %v1709 = vmul.f32 %v1196, %v1576
    %v1710 = vmul.f32 %v1197, %v1576
    %v1711 = vmul.f32 %v1198, %v1576
    %v1712 = vmul.f32 %v1199, %v1576
    %v1713 = vmul.f32 %v1200, %v1576
    %v1714 = vmul.f32 %v1201, %v1576
    %v1715 = vmul.f32 %v1202, %v1576
    %v1716 = vmul.f32 %v1203, %v1576
    %v1717 = vmul.f32 %v1204, %v1576
    %v1718 = vmul.f32 %v1205, %v1576
    %v1719 = vmul.f32 %v1206, %v1576
    %v1720 = vmul.f32 %v1207, %v1576
    %v1721 = vmul.f32 %v1208, %v1576
    %v1722 = vmul.f32 %v1209, %v1576
    %v1723 = vmul.f32 %v1210, %v1576
    %v1724 = vmul.f32 %v1211, %v1576
    %v1725 = vmul.f32 %v1212, %v1576
    %v1726 = vmul.f32 %v1213, %v1576
    %v1727 = vmul.f32 %v1214, %v1576
    %v1728 = vmul.f32 %v1215, %v1576
    %v1729 = vmul.f32 %v1216, %v1576
    %v1730 = vmul.f32 %v1217, %v1576
    %v1731 = vmul.f32 %v1218, %v1576
    %v1732 = vmul.f32 %v1219, %v1576
    %v1733 = vmul.f32 %v1220, %v1576
    %v1734 = vmul.f32 %v1221, %v1576
    %v1735 = vmul.f32 %v1222, %v1576
    %v1736 = vmul.f32 %v1223, %v1576
    %v1737 = vmul.f32 %v1224, %v1576
    %v1738 = vmul.f32 %v1225, %v1576
    %v1739 = vmul.f32 %v1226, %v1576
    %v1740 = vmul.f32 %v1227, %v1576
    %v1741 = vmul.f32 %v1228, %v1576
    %v1742 = vmul.f32 %v1229, %v1576
    %v1743 = vmul.f32 %v1230, %v1576
    %v1744 = vmul.f32 %v1231, %v1576
    %v1745 = vmul.f32 %v1232, %v1576
    %v1746 = vmul.f32 %v1233, %v1576
    %v1747 = vmul.f32 %v1234, %v1576
    %v1748 = vmul.f32 %v1235, %v1576
    %v1749 = vmul.f32 %v1236, %v1576
    %v1750 = vmul.f32 %v1237, %v1576
    %v1751 = vmul.f32 %v1238, %v1576
    %v1752 = vmul.f32 %v1239, %v1576
    %v1753 = vmul.f32 %v1240, %v1576
    %v1754 = vmul.f32 %v1241, %v1576
    %v1755 = vmul.f32 %v1242, %v1576
    %v1756 = vmul.f32 %v1243, %v1576
    %v1757 = vmul.f32 %v1244, %v1576
    %v1758 = vmul.f32 %v1245, %v1576
    %v1759 = vmul.f32 %v1246, %v1576
    %v1760 = vmul.f32 %v1247, %v1576
    %v1761 = vmul.f32 %v1248, %v1576
    %v1762 = vmul.f32 %v1249, %v1576
    %v1763 = vmul.f32 %v1250, %v1576
    %v1764 = vmul.f32 %v1251, %v1576
    %v1765 = vmul.f32 %v1252, %v1576
    %v1766 = vmul.f32 %v1253, %v1576
    %v1767 = vmul.f32 %v1254, %v1576
    %v1768 = vmul.f32 %v1255, %v1576
    %v1769 = vmul.f32 %v1256, %v1576
    %v1770 = vmul.f32 %v1257, %v1576
    %v1771 = vmul.f32 %v1258, %v1576
    %v1772 = vmul.f32 %v1259, %v1576
    %v1773 = vmul.f32 %v1260, %v1576
    %v1774 = vmul.f32 %v1261, %v1576
    %v1775 = vmul.f32 %v1262, %v1576
    %v1776 = vmul.f32 %v1263, %v1576
    %v1777 = vmul.f32 %v1264, %v1576
    %v1778 = vmul.f32 %v1265, %v1576
    %v1779 = vmul.f32 %v1266, %v1576
    %v1780 = vmul.f32 %v1267, %v1576
    %v1781 = vmul.f32 %v1268, %v1576
    %v1782 = vmul.f32 %v1269, %v1576
    %v1783 = vmul.f32 %v1270, %v1576
    %v1784 = vmul.f32 %v1271, %v1576
    %v1785 = vmul.f32 %v1272, %v1576
    %v1786 = vmul.f32 %v1273, %v1576
    %v1787 = vmul.f32 %v1274, %v1576
    %v1788 = vmul.f32 %v1275, %v1576
    %v1789 = vmul.f32 %v1276, %v1576
    %v1790 = vmul.f32 %v1277, %v1576
    %v1791 = vmul.f32 %v1278, %v1576
    %v1792 = vmul.f32 %v1279, %v1576
    %v1793 = vmul.f32 %v1280, %v1576
    %v1794 = vmul.f32 %v1281, %v1576
    %v1795 = vmul.f32 %v1282, %v1576
    %v1796 = vmul.f32 %v1283, %v1576
    %v1797 = vmul.f32 %v1284, %v1576
    %v1798 = vmul.f32 %v1285, %v1576
    %v1799 = vmul.f32 %v1286, %v1576
    %v1800 = vmul.f32 %v1287, %v1576
    %v1801 = vmul.f32 %v1288, %v1576
    %v1802 = vmul.f32 %v1289, %v1576
    %v1803 = vmul.f32 %v1290, %v1576
    %v1804 = vmul.f32 %v1291, %v1576
    %v1805 = vmul.f32 %v1292, %v1576
    %v1806 = vmul.f32 %v1293, %v1576
    %v1807 = vmul.f32 %v1294, %v1576
    %v1808 = vmul.f32 %v1295, %v1576
    %v1809 = vmul.f32 %v1296, %v1576
    %v1810 = vmul.f32 %v1297, %v1576
    %v1811 = vmul.f32 %v1298, %v1576
    %v1812 = vmul.f32 %v1299, %v1576
    %v1813 = vmul.f32 %v1300, %v1576
    %v1814 = vmul.f32 %v1301, %v1576
    %v1815 = vmul.f32 %v1302, %v1576
    %v1816 = vmul.f32 %v1303, %v1576
    %v1817 = vmul.f32 %v1304, %v1576
    %v1818 = vmul.f32 %v1305, %v1576
    %v1819 = vmul.f32 %v1306, %v1576
    %v1820 = vmul.f32 %v1307, %v1576
    %v1821 = vmul.f32 %v1308, %v1576
    %v1822 = vmul.f32 %v1309, %v1576
    %v1823 = vmul.f32 %v1310, %v1576
    %v1824 = vmul.f32 %v1311, %v1576
    %v1825 = vmul.f32 %v1312, %v1576
    %v1826 = vmul.f32 %v1313, %v1576
    %v1827 = vmul.f32 %v1314, %v1576
    %v1828 = vmul.f32 %v1315, %v1576
    %v1829 = vmul.f32 %v1316, %v1576
    %v1830 = vmul.f32 %v1317, %v1576
    %v1831 = vmul.f32 %v1318, %v1576
    %v1832 = vmul.f32 %v1319, %v1576
    %v1833 = vmul.f32 %v1320, %v1576
    %v1834 = vmul.f32 %v1321, %v1576
    %v1835 = vmul.f32 %v1322, %v1576
    %v1836 = vmul.f32 %v1323, %v1576
    %v1837 = vmul.f32 %v1324, %v1576
    %v1838 = vmul.f32 %v1325, %v1576
    %v1839 = vmul.f32 %v1326, %v1576
    %v1840 = vmul.f32 %v1327, %v1576
    %v1841 = vmul.f32 %v1328, %v1576
    %v1842 = vmul.f32 %v1329, %v1576
    %v1843 = vmul.f32 %v1330, %v1576
    %v1844 = vmul.f32 %v1331, %v1576
    %v1845 = vmul.f32 %v1332, %v1576
    %v1846 = vmul.f32 %v1333, %v1576
    %v1847 = vmul.f32 %v1334, %v1576
    %v1848 = vmul.f32 %v1335, %v1576
    %v1849 = vmul.f32 %v1336, %v1576
    %v1850 = vmul.f32 %v1337, %v1576
    %v1851 = vmul.f32 %v1338, %v1576
    %v1852 = vmul.f32 %v1339, %v1576
    %v1853 = vmul.f32 %v1340, %v1576
    %v1854 = vmul.f32 %v1341, %v1576
    %v1855 = vmul.f32 %v1342, %v1576
    %v1856 = vmul.f32 %v1343, %v1576
    %v1857 = vmul.f32 %v1344, %v1576
    %v1858 = vmul.f32 %v1345, %v1576
    %v1859 = vmul.f32 %v1346, %v1576
    %v1860 = vmul.f32 %v1347, %v1576
    %v1861 = vmul.f32 %v1348, %v1576
    %v1862 = vmul.f32 %v1349, %v1576
    %v1863 = vmul.f32 %v1350, %v1576
    %v1864 = vmul.f32 %v1351, %v1576
    %v1865 = vmul.f32 %v1352, %v1576
    %v1866 = vmul.f32 %v1353, %v1576
    %v1867 = vmul.f32 %v1354, %v1576
    %v1868 = vmul.f32 %v1355, %v1576
    %v1869 = vmul.f32 %v1356, %v1576
    %v1870 = vmul.f32 %v1357, %v1576
    %v1871 = vmul.f32 %v1358, %v1576
    %v1872 = vmul.f32 %v1359, %v1576
    %v1873 = vmul.f32 %v1360, %v1576
    %v1874 = vmul.f32 %v1361, %v1576
    %v1875 = vmul.f32 %v1362, %v1576
    %v1876 = vmul.f32 %v1363, %v1576
    %v1877 = vmul.f32 %v1364, %v1576
    %v1878 = vmul.f32 %v1365, %v1576
    %v1879 = vmul.f32 %v1366, %v1576
    %v1880 = vmul.f32 %v1367, %v1576
    %v1881 = vmul.f32 %v1368, %v1576
    %v1882 = vmul.f32 %v1369, %v1576
    %v1883 = vmul.f32 %v1370, %v1576
    %v1884 = vmul.f32 %v1371, %v1576
    %v1885 = vmul.f32 %v1372, %v1576
    %v1886 = vmul.f32 %v1373, %v1576
    %v1887 = vmul.f32 %v1374, %v1576
    %v1888 = vmul.f32 %v1375, %v1576
    %v1889 = vmul.f32 %v1376, %v1576
    %v1890 = vmul.f32 %v1377, %v1576
    %v1891 = vmul.f32 %v1378, %v1576
    %v1892 = vmul.f32 %v1379, %v1576
    %v1893 = vmul.f32 %v1380, %v1576
    %v1894 = vmul.f32 %v1381, %v1576
    %v1895 = vmul.f32 %v1382, %v1576
    %v1896 = vmul.f32 %v1383, %v1576
    %v1897 = vmul.f32 %v1384, %v1576
    %v1898 = vmul.f32 %v1385, %v1576
    %v1899 = vmul.f32 %v1386, %v1576
    %v1900 = vmul.f32 %v1387, %v1576
    %v1901 = vmul.f32 %v1388, %v1576
    %v1902 = vmul.f32 %v1389, %v1576
    %v1903 = vmul.f32 %v1390, %v1576
    %v1904 = vmul.f32 %v1391, %v1576
    %v1905 = vmul.f32 %v1392, %v1576
    %v1906 = vmul.f32 %v1393, %v1576
    %v1907 = vmul.f32 %v1394, %v1576
    %v1908 = vmul.f32 %v1395, %v1576
    %v1909 = vmul.f32 %v1396, %v1576
    %v1910 = vmul.f32 %v1397, %v1576
    %v1911 = vmul.f32 %v1398, %v1576
    %v1912 = vmul.f32 %v1399, %v1576
    %v1913 = vmul.f32 %v1400, %v1576
    %v1914 = vmul.f32 %v1401, %v1576
    %v1915 = vmul.f32 %v1402, %v1576
    %v1916 = vmul.f32 %v1403, %v1576
    %v1917 = vmul.f32 %v1404, %v1576
    %v1918 = vmul.f32 %v1405, %v1576
    %v1919 = vmul.f32 %v1406, %v1576
    %v1920 = vmul.f32 %v1407, %v1576
    %v1921 = vmul.f32 %v1408, %v1576
    %v1922 = vmul.f32 %v1409, %v1576
    %v1923 = vmul.f32 %v1410, %v1576
    %v1924 = vmul.f32 %v1411, %v1576
    %v1925 = vmul.f32 %v1412, %v1576
    %v1926 = vmul.f32 %v1413, %v1576
    %v1927 = vmul.f32 %v1414, %v1576
    %v1928 = vmul.f32 %v1415, %v1576
    %v1929 = vmul.f32 %v1416, %v1576
    %v1930 = vmul.f32 %v1417, %v1576
    %v1931 = vmul.f32 %v1418, %v1576
    %v1932 = vmul.f32 %v1419, %v1576
    %v1933 = vmul.f32 %v1420, %v1576
    %v1934 = vmul.f32 %v1421, %v1576
    %v1935 = vmul.f32 %v1422, %v1576
    %v1936 = vmul.f32 %v1423, %v1576
    %v1937 = vmul.f32 %v1424, %v1576
    %v1938 = vmul.f32 %v1425, %v1576
    %v1939 = vmul.f32 %v1426, %v1576
    %v1940 = vmul.f32 %v1427, %v1576
    %v1941 = vmul.f32 %v1428, %v1576
    %v1942 = vmul.f32 %v1429, %v1576
    %v1943 = vmul.f32 %v1430, %v1576
    %v1944 = vmul.f32 %v1431, %v1576
    %v1945 = vmul.f32 %v1432, %v1576
    %v1946 = vmul.f32 %v1433, %v1576
    %v1947 = vmul.f32 %v1434, %v1576
    %v1948 = vmul.f32 %v1435, %v1576
    %v1949 = vmul.f32 %v1436, %v1576
    %v1950 = vmul.f32 %v1437, %v1576
    %v1951 = vmul.f32 %v1438, %v1576
    %v1952 = vmul.f32 %v1439, %v1576
    %v1953 = vmul.f32 %v1440, %v1576
    %v1954 = vmul.f32 %v1441, %v1576
    %v1955 = vmul.f32 %v1442, %v1576
    %v1956 = vmul.f32 %v1443, %v1576
    %v1957 = vmul.f32 %v1444, %v1576
    %v1958 = vmul.f32 %v1445, %v1576
    %v1959 = vmul.f32 %v1446, %v1576
    %v1960 = vmul.f32 %v1447, %v1576
    %v1961 = vmul.f32 %v1448, %v1576
    %v1962 = vmul.f32 %v1449, %v1576
    %v1963 = vmul.f32 %v1450, %v1576
    %v1964 = vmul.f32 %v1451, %v1576
    %v1965 = vmul.f32 %v1452, %v1576
    %v1966 = vmul.f32 %v1453, %v1576
    %v1967 = vmul.f32 %v1454, %v1576
    %v1968 = vmul.f32 %v1455, %v1576
    %v1969 = vmul.f32 %v1456, %v1576
    %v1970 = vmul.f32 %v1457, %v1576
    %v1971 = vmul.f32 %v1458, %v1576
    %v1972 = vmul.f32 %v1459, %v1576
    %v1973 = vmul.f32 %v1460, %v1576
    %v1974 = vmul.f32 %v1461, %v1576
    %v1975 = vmul.f32 %v1462, %v1576
    %v1976 = vmul.f32 %v1463, %v1576
    %v1977 = vmul.f32 %v1464, %v1576
    %v1978 = vmul.f32 %v1465, %v1576
    %v1979 = vmul.f32 %v1466, %v1576
    %v1980 = vmul.f32 %v1467, %v1576
    %v1981 = vmul.f32 %v1468, %v1576
    %v1982 = vmul.f32 %v1469, %v1576
    %v1983 = vmul.f32 %v1470, %v1576
    %v1984 = vmul.f32 %v1471, %v1576
    %v1985 = vmul.f32 %v1472, %v1576
    %v1986 = vmul.f32 %v1473, %v1576
    %v1987 = vmul.f32 %v1474, %v1576
    %v1988 = vmul.f32 %v1475, %v1576
    %v1989 = vmul.f32 %v1476, %v1576
    %v1990 = vmul.f32 %v1477, %v1576
    %v1991 = vmul.f32 %v1478, %v1576
    %v1992 = vmul.f32 %v1479, %v1576
    %v1993 = vmul.f32 %v1480, %v1576
    %v1994 = vmul.f32 %v1481, %v1576
    %v1995 = vmul.f32 %v1482, %v1576
    %v1996 = vmul.f32 %v1483, %v1576
    %v1997 = vmul.f32 %v1484, %v1576
    %v1998 = vmul.f32 %v1485, %v1576
    %v1999 = vmul.f32 %v1486, %v1576
    %v2000 = vmul.f32 %v1487, %v1576
    %v2001 = vmul.f32 %v1488, %v1576
    %v2002 = vmul.f32 %v1489, %v1576
    %v2003 = vmul.f32 %v1490, %v1576
    %v2004 = vmul.f32 %v1491, %v1576
    %v2005 = vmul.f32 %v1492, %v1576
    %v2006 = vmul.f32 %v1493, %v1576
    %v2007 = vmul.f32 %v1494, %v1576
    %v2008 = vmul.f32 %v1495, %v1576
    %v2009 = vmul.f32 %v1496, %v1576
    %v2010 = vmul.f32 %v1497, %v1576
    %v2011 = vmul.f32 %v1498, %v1576
    %v2012 = vmul.f32 %v1499, %v1576
    %v2013 = vmul.f32 %v1500, %v1576
    %v2014 = vmul.f32 %v1501, %v1576
    %v2015 = vmul.f32 %v1502, %v1576
    %v2016 = vmul.f32 %v1503, %v1576
    %v2017 = vmul.f32 %v1504, %v1576
    %v2018 = vmul.f32 %v1505, %v1576
    %v2019 = vmul.f32 %v1506, %v1576
    %v2020 = vmul.f32 %v1507, %v1576
    %v2021 = vmul.f32 %v1508, %v1576
    %v2022 = vmul.f32 %v1509, %v1576
    %v2023 = vmul.f32 %v1510, %v1576
    %v2024 = vmul.f32 %v1511, %v1576
    %v2025 = vmul.f32 %v1512, %v1576
    %v2026 = vmul.f32 %v1513, %v1576
    %v2027 = vmul.f32 %v1514, %v1576
    %v2028 = vmul.f32 %v1515, %v1576
    %v2029 = vmul.f32 %v1516, %v1576
    %v2030 = vmul.f32 %v1517, %v1576
    %v2031 = vmul.f32 %v1518, %v1576
    %v2032 = vmul.f32 %v1519, %v1576
    %v2033 = vmul.f32 %v1520, %v1576
    %v2034 = vmul.f32 %v1521, %v1576
    %v2035 = vmul.f32 %v1522, %v1576
    %v2036 = vmul.f32 %v1523, %v1576
    %v2037 = vmul.f32 %v1524, %v1576
    %v2038 = vmul.f32 %v1525, %v1576
    %v2039 = vmul.f32 %v1526, %v1576
    %v2040 = vmul.f32 %v1527, %v1576
    %v2041 = vmul.f32 %v1528, %v1576
    %v2042 = vmul.f32 %v1529, %v1576
    %v2043 = vmul.f32 %v1530, %v1576
    %v2044 = vmul.f32 %v1531, %v1576
    %v2045 = vmul.f32 %v1532, %v1576
    %v2046 = vmul.f32 %v1533, %v1576
    %v2047 = vmul.f32 %v1534, %v1576
    %v2048 = vmul.f32 %v1535, %v1576
    %v2049 = vmul.f32 %v1536, %v1576
    %v2050 = vmul.f32 %v1537, %v1576
    %v2051 = vmul.f32 %v1538, %v1576
    %v2052 = vmul.f32 %v1539, %v1576
    %v2053 = vmul.f32 %v1540, %v1576
    %v2054 = vmul.f32 %v1541, %v1576
    %v2055 = vmul.f32 %v1542, %v1576
    %v2056 = vmul.f32 %v1543, %v1576
    %v2057 = vmul.f32 %v1544, %v1576
    %v2058 = vmul.f32 %v1545, %v1576
    %v2059 = vmul.f32 %v1546, %v1576
    %v2060 = vmul.f32 %v1547, %v1576
    %v2061 = vmul.f32 %v1548, %v1576
    %v2062 = vmul.f32 %v1549, %v1576
    %v2063 = vmul.f32 %v1550, %v1576
    %v2064 = vmul.f32 %v1551, %v1576
    %v2065 = vmul.f32 %v1552, %v1576
    %v2066 = vmul.f32 %v1553, %v1576
    %v2067 = vmul.f32 %v1554, %v1576
    %v2068 = vmul.f32 %v1555, %v1576
    %v2069 = vmul.f32 %v1556, %v1576
    %v2070 = vmul.f32 %v1557, %v1576
    %v2071 = vmul.f32 %v1558, %v1576
    %v2072 = vmul.f32 %v1559, %v1576
    %v2073 = vmul.f32 %v1560, %v1576
    %v2074 = vmul.f32 %v1561, %v1576
    %v2075 = vmul.f32 %v1562, %v1576
    %v2076 = vmul.f32 %v1563, %v1576
    %v2077 = vmul.f32 %v1564, %v1576
    %v2078 = vmul.f32 %v1565, %v1576
    %v2079 = vmul.f32 %v1566, %v1576
    %v2080 = vmul.f32 %v1567, %v1576
    %v2081 = vmul.f32 %v1568, %v1576
    %v2082 = vmul.f32 %v1569, %v1576
    %v2083 = vmul.f32 %v1570, %v1576
    %v2084 = vmul.f32 %v1571, %v1576
    %v2085 = vmul.f32 %v1572, %v1576
    %v2086 = vmul.f32 %v1573, %v1576
    %v2087 = vmul.f32 %v1574, %v1576
    %v2088 = vmul.f32 %v1575, %v1576
    %v2089 = vmul.f32 %v1577, 1.442695
    %v2090 = vpow.pop %v2089
    %v2091 = vmul.f32 %v1578, 1.442695
    %v2092 = vpow.pop %v2091
    %v2093 = vmul.f32 %v1579, 1.442695
    %v2094 = vpow.pop %v2093
    %v2095 = vmul.f32 %v1580, 1.442695
    %v2096 = vpow.pop %v2095
    %v2097 = vmul.f32 %v1581, 1.442695
    %v2098 = vpow.pop %v2097
    %v2099 = vmul.f32 %v1582, 1.442695
    %v2100 = vpow.pop %v2099
    %v2101 = vmul.f32 %v1583, 1.442695
    %v2102 = vpow.pop %v2101
    %v2103 = vmul.f32 %v1584, 1.442695
    %v2104 = vpow.pop %v2103
    %v2105 = vmul.f32 %v1585, 1.442695
    %v2106 = vpow.pop %v2105
    %v2107 = vmul.f32 %v1586, 1.442695
    %v2108 = vpow.pop %v2107
    %v2109 = vmul.f32 %v1587, 1.442695
    %v2110 = vpow.pop %v2109
    %v2111 = vmul.f32 %v1588, 1.442695
    %v2112 = vpow.pop %v2111
    %v2113 = vmul.f32 %v1589, 1.442695
    %v2114 = vpow.pop %v2113
    %v2115 = vmul.f32 %v1590, 1.442695
    %v2116 = vpow.pop %v2115
    %v2117 = vmul.f32 %v1591, 1.442695
    %v2118 = vpow.pop %v2117
    %v2119 = vmul.f32 %v1592, 1.442695
    %v2120 = vpow.pop %v2119
    %v2121 = vmul.f32 %v1593, 1.442695
    %v2122 = vpow.pop %v2121
    %v2123 = vmul.f32 %v1594, 1.442695
    %v2124 = vpow.pop %v2123
    %v2125 = vmul.f32 %v1595, 1.442695
    %v2126 = vpow.pop %v2125
    %v2127 = vmul.f32 %v1596, 1.442695
    %v2128 = vpow.pop %v2127
    %v2129 = vmul.f32 %v1597, 1.442695
    %v2130 = vpow.pop %v2129
    %v2131 = vmul.f32 %v1598, 1.442695
    %v2132 = vpow.pop %v2131
    %v2133 = vmul.f32 %v1599, 1.442695
    %v2134 = vpow.pop %v2133
    %v2135 = vmul.f32 %v1600, 1.442695
    %v2136 = vpow.pop %v2135
    %v2137 = vmul.f32 %v1601, 1.442695
    %v2138 = vpow.pop %v2137
    %v2139 = vmul.f32 %v1602, 1.442695
    %v2140 = vpow.pop %v2139
    %v2141 = vmul.f32 %v1603, 1.442695
    %v2142 = vpow.pop %v2141
    %v2143 = vmul.f32 %v1604, 1.442695
    %v2144 = vpow.pop %v2143
    %v2145 = vmul.f32 %v1605, 1.442695
    %v2146 = vpow.pop %v2145
    %v2147 = vmul.f32 %v1606, 1.442695
    %v2148 = vpow.pop %v2147
    %v2149 = vmul.f32 %v1607, 1.442695
    %v2150 = vpow.pop %v2149
    %v2151 = vmul.f32 %v1608, 1.442695
    %v2152 = vpow.pop %v2151
    %v2153 = vmul.f32 %v1609, 1.442695
    %v2154 = vpow.pop %v2153
    %v2155 = vmul.f32 %v1610, 1.442695
    %v2156 = vpow.pop %v2155
    %v2157 = vmul.f32 %v1611, 1.442695
    %v2158 = vpow.pop %v2157
    %v2159 = vmul.f32 %v1612, 1.442695
    %v2160 = vpow.pop %v2159
    %v2161 = vmul.f32 %v1613, 1.442695
    %v2162 = vpow.pop %v2161
    %v2163 = vmul.f32 %v1614, 1.442695
    %v2164 = vpow.pop %v2163
    %v2165 = vmul.f32 %v1615, 1.442695
    %v2166 = vpow.pop %v2165
    %v2167 = vmul.f32 %v1616, 1.442695
    %v2168 = vpow.pop %v2167
    %v2169 = vmul.f32 %v1617, 1.442695
    %v2170 = vpow.pop %v2169
    %v2171 = vmul.f32 %v1618, 1.442695
    %v2172 = vpow.pop %v2171
    %v2173 = vmul.f32 %v1619, 1.442695
    %v2174 = vpow.pop %v2173
    %v2175 = vmul.f32 %v1620, 1.442695
    %v2176 = vpow.pop %v2175
    %v2177 = vmul.f32 %v1621, 1.442695
    %v2178 = vpow.pop %v2177
    %v2179 = vmul.f32 %v1622, 1.442695
    %v2180 = vpow.pop %v2179
    %v2181 = vmul.f32 %v1623, 1.442695
    %v2182 = vpow.pop %v2181
    %v2183 = vmul.f32 %v1624, 1.442695
    %v2184 = vpow.pop %v2183
    %v2185 = vmul.f32 %v1625, 1.442695
    %v2186 = vpow.pop %v2185
    %v2187 = vmul.f32 %v1626, 1.442695
    %v2188 = vpow.pop %v2187
    %v2189 = vmul.f32 %v1627, 1.442695
    %v2190 = vpow.pop %v2189
    %v2191 = vmul.f32 %v1628, 1.442695
    %v2192 = vpow.pop %v2191
    %v2193 = vmul.f32 %v1629, 1.442695
    %v2194 = vpow.pop %v2193
    %v2195 = vmul.f32 %v1630, 1.442695
    %v2196 = vpow.pop %v2195
    %v2197 = vmul.f32 %v1631, 1.442695
    %v2198 = vpow.pop %v2197
    %v2199 = vmul.f32 %v1632, 1.442695
    %v2200 = vpow.pop %v2199
    %v2201 = vmul.f32 %v1633, 1.442695
    %v2202 = vpow.pop %v2201
    %v2203 = vmul.f32 %v1634, 1.442695
    %v2204 = vpow.pop %v2203
    %v2205 = vmul.f32 %v1635, 1.442695
    %v2206 = vpow.pop %v2205
    %v2207 = vmul.f32 %v1636, 1.442695
    %v2208 = vpow.pop %v2207
    %v2209 = vmul.f32 %v1637, 1.442695
    %v2210 = vpow.pop %v2209
    %v2211 = vmul.f32 %v1638, 1.442695
    %v2212 = vpow.pop %v2211
    %v2213 = vmul.f32 %v1639, 1.442695
    %v2214 = vpow.pop %v2213
    %v2215 = vmul.f32 %v1640, 1.442695
    %v2216 = vpow.pop %v2215
    %v2217 = vmul.f32 %v1641, 1.442695
    %v2218 = vpow.pop %v2217
    %v2219 = vmul.f32 %v1642, 1.442695
    %v2220 = vpow.pop %v2219
    %v2221 = vmul.f32 %v1643, 1.442695
    %v2222 = vpow.pop %v2221
    %v2223 = vmul.f32 %v1644, 1.442695
    %v2224 = vpow.pop %v2223
    %v2225 = vmul.f32 %v1645, 1.442695
    %v2226 = vpow.pop %v2225
    %v2227 = vmul.f32 %v1646, 1.442695
    %v2228 = vpow.pop %v2227
    %v2229 = vmul.f32 %v1647, 1.442695
    %v2230 = vpow.pop %v2229
    %v2231 = vmul.f32 %v1648, 1.442695
    %v2232 = vpow.pop %v2231
    %v2233 = vmul.f32 %v1649, 1.442695
    %v2234 = vpow.pop %v2233
    %v2235 = vmul.f32 %v1650, 1.442695
    %v2236 = vpow.pop %v2235
    %v2237 = vmul.f32 %v1651, 1.442695
    %v2238 = vpow.pop %v2237
    %v2239 = vmul.f32 %v1652, 1.442695
    %v2240 = vpow.pop %v2239
    %v2241 = vmul.f32 %v1653, 1.442695
    %v2242 = vpow.pop %v2241
    %v2243 = vmul.f32 %v1654, 1.442695
    %v2244 = vpow.pop %v2243
    %v2245 = vmul.f32 %v1655, 1.442695
    %v2246 = vpow.pop %v2245
    %v2247 = vmul.f32 %v1656, 1.442695
    %v2248 = vpow.pop %v2247
    %v2249 = vmul.f32 %v1657, 1.442695
    %v2250 = vpow.pop %v2249
    %v2251 = vmul.f32 %v1658, 1.442695
    %v2252 = vpow.pop %v2251
    %v2253 = vmul.f32 %v1659, 1.442695
    %v2254 = vpow.pop %v2253
    %v2255 = vmul.f32 %v1660, 1.442695
    %v2256 = vpow.pop %v2255
    %v2257 = vmul.f32 %v1661, 1.442695
    %v2258 = vpow.pop %v2257
    %v2259 = vmul.f32 %v1662, 1.442695
    %v2260 = vpow.pop %v2259
    %v2261 = vmul.f32 %v1663, 1.442695
    %v2262 = vpow.pop %v2261
    %v2263 = vmul.f32 %v1664, 1.442695
    %v2264 = vpow.pop %v2263
    %v2265 = vmul.f32 %v1665, 1.442695
    %v2266 = vpow.pop %v2265
    %v2267 = vmul.f32 %v1666, 1.442695
    %v2268 = vpow.pop %v2267
    %v2269 = vmul.f32 %v1667, 1.442695
    %v2270 = vpow.pop %v2269
    %v2271 = vmul.f32 %v1668, 1.442695
    %v2272 = vpow.pop %v2271
    %v2273 = vmul.f32 %v1669, 1.442695
    %v2274 = vpow.pop %v2273
    %v2275 = vmul.f32 %v1670, 1.442695
    %v2276 = vpow.pop %v2275
    %v2277 = vmul.f32 %v1671, 1.442695
    %v2278 = vpow.pop %v2277
    %v2279 = vmul.f32 %v1672, 1.442695
    %v2280 = vpow.pop %v2279
    %v2281 = vmul.f32 %v1673, 1.442695
    %v2282 = vpow.pop %v2281
    %v2283 = vmul.f32 %v1674, 1.442695
    %v2284 = vpow.pop %v2283
    %v2285 = vmul.f32 %v1675, 1.442695
    %v2286 = vpow.pop %v2285
    %v2287 = vmul.f32 %v1676, 1.442695
    %v2288 = vpow.pop %v2287
    %v2289 = vmul.f32 %v1677, 1.442695
    %v2290 = vpow.pop %v2289
    %v2291 = vmul.f32 %v1678, 1.442695
    %v2292 = vpow.pop %v2291
    %v2293 = vmul.f32 %v1679, 1.442695
    %v2294 = vpow.pop %v2293
    %v2295 = vmul.f32 %v1680, 1.442695
    %v2296 = vpow.pop %v2295
    %v2297 = vmul.f32 %v1681, 1.442695
    %v2298 = vpow.pop %v2297
    %v2299 = vmul.f32 %v1682, 1.442695
    %v2300 = vpow.pop %v2299
    %v2301 = vmul.f32 %v1683, 1.442695
    %v2302 = vpow.pop %v2301
    %v2303 = vmul.f32 %v1684, 1.442695
    %v2304 = vpow.pop %v2303
    %v2305 = vmul.f32 %v1685, 1.442695
    %v2306 = vpow.pop %v2305
    %v2307 = vmul.f32 %v1686, 1.442695
    %v2308 = vpow.pop %v2307
    %v2309 = vmul.f32 %v1687, 1.442695
    %v2310 = vpow.pop %v2309
    %v2311 = vmul.f32 %v1688, 1.442695
    %v2312 = vpow.pop %v2311
    %v2313 = vmul.f32 %v1689, 1.442695
    %v2314 = vpow.pop %v2313
    %v2315 = vmul.f32 %v1690, 1.442695
    %v2316 = vpow.pop %v2315
    %v2317 = vmul.f32 %v1691, 1.442695
    %v2318 = vpow.pop %v2317
    %v2319 = vmul.f32 %v1692, 1.442695
    %v2320 = vpow.pop %v2319
    %v2321 = vmul.f32 %v1693, 1.442695
    %v2322 = vpow.pop %v2321
    %v2323 = vmul.f32 %v1694, 1.442695
    %v2324 = vpow.pop %v2323
    %v2325 = vmul.f32 %v1695, 1.442695
    %v2326 = vpow.pop %v2325
    %v2327 = vmul.f32 %v1696, 1.442695
    %v2328 = vpow.pop %v2327
    %v2329 = vmul.f32 %v1697, 1.442695
    %v2330 = vpow.pop %v2329
    %v2331 = vmul.f32 %v1698, 1.442695
    %v2332 = vpow.pop %v2331
    %v2333 = vmul.f32 %v1699, 1.442695
    %v2334 = vpow.pop %v2333
    %v2335 = vmul.f32 %v1700, 1.442695
    %v2336 = vpow.pop %v2335
    %v2337 = vmul.f32 %v1701, 1.442695
    %v2338 = vpow.pop %v2337
    %v2339 = vmul.f32 %v1702, 1.442695
    %v2340 = vpow.pop %v2339
    %v2341 = vmul.f32 %v1703, 1.442695
    %v2342 = vpow.pop %v2341
    %v2343 = vmul.f32 %v1704, 1.442695
    %v2344 = vpow.pop %v2343
    %v2345 = vmul.f32 %v1705, 1.442695
    %v2346 = vpow.pop %v2345
    %v2347 = vmul.f32 %v1706, 1.442695
    %v2348 = vpow.pop %v2347
    %v2349 = vmul.f32 %v1707, 1.442695
    %v2350 = vpow.pop %v2349
    %v2351 = vmul.f32 %v1708, 1.442695
    %v2352 = vpow.pop %v2351
    %v2353 = vmul.f32 %v1709, 1.442695
    %v2354 = vpow.pop %v2353
    %v2355 = vmul.f32 %v1710, 1.442695
    %v2356 = vpow.pop %v2355
    %v2357 = vmul.f32 %v1711, 1.442695
    %v2358 = vpow.pop %v2357
    %v2359 = vmul.f32 %v1712, 1.442695
    %v2360 = vpow.pop %v2359
    %v2361 = vmul.f32 %v1713, 1.442695
    %v2362 = vpow.pop %v2361
    %v2363 = vmul.f32 %v1714, 1.442695
    %v2364 = vpow.pop %v2363
    %v2365 = vmul.f32 %v1715, 1.442695
    %v2366 = vpow.pop %v2365
    %v2367 = vmul.f32 %v1716, 1.442695
    %v2368 = vpow.pop %v2367
    %v2369 = vmul.f32 %v1717, 1.442695
    %v2370 = vpow.pop %v2369
    %v2371 = vmul.f32 %v1718, 1.442695
    %v2372 = vpow.pop %v2371
    %v2373 = vmul.f32 %v1719, 1.442695
    %v2374 = vpow.pop %v2373
    %v2375 = vmul.f32 %v1720, 1.442695
    %v2376 = vpow.pop %v2375
    %v2377 = vmul.f32 %v1721, 1.442695
    %v2378 = vpow.pop %v2377
    %v2379 = vmul.f32 %v1722, 1.442695
    %v2380 = vpow.pop %v2379
    %v2381 = vmul.f32 %v1723, 1.442695
    %v2382 = vpow.pop %v2381
    %v2383 = vmul.f32 %v1724, 1.442695
    %v2384 = vpow.pop %v2383
    %v2385 = vmul.f32 %v1725, 1.442695
    %v2386 = vpow.pop %v2385
    %v2387 = vmul.f32 %v1726, 1.442695
    %v2388 = vpow.pop %v2387
    %v2389 = vmul.f32 %v1727, 1.442695
    %v2390 = vpow.pop %v2389
    %v2391 = vmul.f32 %v1728, 1.442695
    %v2392 = vpow.pop %v2391
    %v2393 = vmul.f32 %v1729, 1.442695
    %v2394 = vpow.pop %v2393
    %v2395 = vmul.f32 %v1730, 1.442695
    %v2396 = vpow.pop %v2395
    %v2397 = vmul.f32 %v1731, 1.442695
    %v2398 = vpow.pop %v2397
    %v2399 = vmul.f32 %v1732, 1.442695
    %v2400 = vpow.pop %v2399
    %v2401 = vmul.f32 %v1733, 1.442695
    %v2402 = vpow.pop %v2401
    %v2403 = vmul.f32 %v1734, 1.442695
    %v2404 = vpow.pop %v2403
    %v2405 = vmul.f32 %v1735, 1.442695
    %v2406 = vpow.pop %v2405
    %v2407 = vmul.f32 %v1736, 1.442695
    %v2408 = vpow.pop %v2407
    %v2409 = vmul.f32 %v1737, 1.442695
    %v2410 = vpow.pop %v2409
    %v2411 = vmul.f32 %v1738, 1.442695
    %v2412 = vpow.pop %v2411
    %v2413 = vmul.f32 %v1739, 1.442695
    %v2414 = vpow.pop %v2413
    %v2415 = vmul.f32 %v1740, 1.442695
    %v2416 = vpow.pop %v2415
    %v2417 = vmul.f32 %v1741, 1.442695
    %v2418 = vpow.pop %v2417
    %v2419 = vmul.f32 %v1742, 1.442695
    %v2420 = vpow.pop %v2419
    %v2421 = vmul.f32 %v1743, 1.442695
    %v2422 = vpow.pop %v2421
    %v2423 = vmul.f32 %v1744, 1.442695
    %v2424 = vpow.pop %v2423
    %v2425 = vmul.f32 %v1745, 1.442695
    %v2426 = vpow.pop %v2425
    %v2427 = vmul.f32 %v1746, 1.442695
    %v2428 = vpow.pop %v2427
    %v2429 = vmul.f32 %v1747, 1.442695
    %v2430 = vpow.pop %v2429
    %v2431 = vmul.f32 %v1748, 1.442695
    %v2432 = vpow.pop %v2431
    %v2433 = vmul.f32 %v1749, 1.442695
    %v2434 = vpow.pop %v2433
    %v2435 = vmul.f32 %v1750, 1.442695
    %v2436 = vpow.pop %v2435
    %v2437 = vmul.f32 %v1751, 1.442695
    %v2438 = vpow.pop %v2437
    %v2439 = vmul.f32 %v1752, 1.442695
    %v2440 = vpow.pop %v2439
    %v2441 = vmul.f32 %v1753, 1.442695
    %v2442 = vpow.pop %v2441
    %v2443 = vmul.f32 %v1754, 1.442695
    %v2444 = vpow.pop %v2443
    %v2445 = vmul.f32 %v1755, 1.442695
    %v2446 = vpow.pop %v2445
    %v2447 = vmul.f32 %v1756, 1.442695
    %v2448 = vpow.pop %v2447
    %v2449 = vmul.f32 %v1757, 1.442695
    %v2450 = vpow.pop %v2449
    %v2451 = vmul.f32 %v1758, 1.442695
    %v2452 = vpow.pop %v2451
    %v2453 = vmul.f32 %v1759, 1.442695
    %v2454 = vpow.pop %v2453
    %v2455 = vmul.f32 %v1760, 1.442695
    %v2456 = vpow.pop %v2455
    %v2457 = vmul.f32 %v1761, 1.442695
    %v2458 = vpow.pop %v2457
    %v2459 = vmul.f32 %v1762, 1.442695
    %v2460 = vpow.pop %v2459
    %v2461 = vmul.f32 %v1763, 1.442695
    %v2462 = vpow.pop %v2461
    %v2463 = vmul.f32 %v1764, 1.442695
    %v2464 = vpow.pop %v2463
    %v2465 = vmul.f32 %v1765, 1.442695
    %v2466 = vpow.pop %v2465
    %v2467 = vmul.f32 %v1766, 1.442695
    %v2468 = vpow.pop %v2467
    %v2469 = vmul.f32 %v1767, 1.442695
    %v2470 = vpow.pop %v2469
    %v2471 = vmul.f32 %v1768, 1.442695
    %v2472 = vpow.pop %v2471
    %v2473 = vmul.f32 %v1769, 1.442695
    %v2474 = vpow.pop %v2473
    %v2475 = vmul.f32 %v1770, 1.442695
    %v2476 = vpow.pop %v2475
    %v2477 = vmul.f32 %v1771, 1.442695
    %v2478 = vpow.pop %v2477
    %v2479 = vmul.f32 %v1772, 1.442695
    %v2480 = vpow.pop %v2479
    %v2481 = vmul.f32 %v1773, 1.442695
    %v2482 = vpow.pop %v2481
    %v2483 = vmul.f32 %v1774, 1.442695
    %v2484 = vpow.pop %v2483
    %v2485 = vmul.f32 %v1775, 1.442695
    %v2486 = vpow.pop %v2485
    %v2487 = vmul.f32 %v1776, 1.442695
    %v2488 = vpow.pop %v2487
    %v2489 = vmul.f32 %v1777, 1.442695
    %v2490 = vpow.pop %v2489
    %v2491 = vmul.f32 %v1778, 1.442695
    %v2492 = vpow.pop %v2491
    %v2493 = vmul.f32 %v1779, 1.442695
    %v2494 = vpow.pop %v2493
    %v2495 = vmul.f32 %v1780, 1.442695
    %v2496 = vpow.pop %v2495
    %v2497 = vmul.f32 %v1781, 1.442695
    %v2498 = vpow.pop %v2497
    %v2499 = vmul.f32 %v1782, 1.442695
    %v2500 = vpow.pop %v2499
    %v2501 = vmul.f32 %v1783, 1.442695
    %v2502 = vpow.pop %v2501
    %v2503 = vmul.f32 %v1784, 1.442695
    %v2504 = vpow.pop %v2503
    %v2505 = vmul.f32 %v1785, 1.442695
    %v2506 = vpow.pop %v2505
    %v2507 = vmul.f32 %v1786, 1.442695
    %v2508 = vpow.pop %v2507
    %v2509 = vmul.f32 %v1787, 1.442695
    %v2510 = vpow.pop %v2509
    %v2511 = vmul.f32 %v1788, 1.442695
    %v2512 = vpow.pop %v2511
    %v2513 = vmul.f32 %v1789, 1.442695
    %v2514 = vpow.pop %v2513
    %v2515 = vmul.f32 %v1790, 1.442695
    %v2516 = vpow.pop %v2515
    %v2517 = vmul.f32 %v1791, 1.442695
    %v2518 = vpow.pop %v2517
    %v2519 = vmul.f32 %v1792, 1.442695
    %v2520 = vpow.pop %v2519
    %v2521 = vmul.f32 %v1793, 1.442695
    %v2522 = vpow.pop %v2521
    %v2523 = vmul.f32 %v1794, 1.442695
    %v2524 = vpow.pop %v2523
    %v2525 = vmul.f32 %v1795, 1.442695
    %v2526 = vpow.pop %v2525
    %v2527 = vmul.f32 %v1796, 1.442695
    %v2528 = vpow.pop %v2527
    %v2529 = vmul.f32 %v1797, 1.442695
    %v2530 = vpow.pop %v2529
    %v2531 = vmul.f32 %v1798, 1.442695
    %v2532 = vpow.pop %v2531
    %v2533 = vmul.f32 %v1799, 1.442695
    %v2534 = vpow.pop %v2533
    %v2535 = vmul.f32 %v1800, 1.442695
    %v2536 = vpow.pop %v2535
    %v2537 = vmul.f32 %v1801, 1.442695
    %v2538 = vpow.pop %v2537
    %v2539 = vmul.f32 %v1802, 1.442695
    %v2540 = vpow.pop %v2539
    %v2541 = vmul.f32 %v1803, 1.442695
    %v2542 = vpow.pop %v2541
    %v2543 = vmul.f32 %v1804, 1.442695
    %v2544 = vpow.pop %v2543
    %v2545 = vmul.f32 %v1805, 1.442695
    %v2546 = vpow.pop %v2545
    %v2547 = vmul.f32 %v1806, 1.442695
    %v2548 = vpow.pop %v2547
    %v2549 = vmul.f32 %v1807, 1.442695
    %v2550 = vpow.pop %v2549
    %v2551 = vmul.f32 %v1808, 1.442695
    %v2552 = vpow.pop %v2551
    %v2553 = vmul.f32 %v1809, 1.442695
    %v2554 = vpow.pop %v2553
    %v2555 = vmul.f32 %v1810, 1.442695
    %v2556 = vpow.pop %v2555
    %v2557 = vmul.f32 %v1811, 1.442695
    %v2558 = vpow.pop %v2557
    %v2559 = vmul.f32 %v1812, 1.442695
    %v2560 = vpow.pop %v2559
    %v2561 = vmul.f32 %v1813, 1.442695
    %v2562 = vpow.pop %v2561
    %v2563 = vmul.f32 %v1814, 1.442695
    %v2564 = vpow.pop %v2563
    %v2565 = vmul.f32 %v1815, 1.442695
    %v2566 = vpow.pop %v2565
    %v2567 = vmul.f32 %v1816, 1.442695
    %v2568 = vpow.pop %v2567
    %v2569 = vmul.f32 %v1817, 1.442695
    %v2570 = vpow.pop %v2569
    %v2571 = vmul.f32 %v1818, 1.442695
    %v2572 = vpow.pop %v2571
    %v2573 = vmul.f32 %v1819, 1.442695
    %v2574 = vpow.pop %v2573
    %v2575 = vmul.f32 %v1820, 1.442695
    %v2576 = vpow.pop %v2575
    %v2577 = vmul.f32 %v1821, 1.442695
    %v2578 = vpow.pop %v2577
    %v2579 = vmul.f32 %v1822, 1.442695
    %v2580 = vpow.pop %v2579
    %v2581 = vmul.f32 %v1823, 1.442695
    %v2582 = vpow.pop %v2581
    %v2583 = vmul.f32 %v1824, 1.442695
    %v2584 = vpow.pop %v2583
    %v2585 = vmul.f32 %v1825, 1.442695
    %v2586 = vpow.pop %v2585
    %v2587 = vmul.f32 %v1826, 1.442695
    %v2588 = vpow.pop %v2587
    %v2589 = vmul.f32 %v1827, 1.442695
    %v2590 = vpow.pop %v2589
    %v2591 = vmul.f32 %v1828, 1.442695
    %v2592 = vpow.pop %v2591
    %v2593 = vmul.f32 %v1829, 1.442695
    %v2594 = vpow.pop %v2593
    %v2595 = vmul.f32 %v1830, 1.442695
    %v2596 = vpow.pop %v2595
    %v2597 = vmul.f32 %v1831, 1.442695
    %v2598 = vpow.pop %v2597
    %v2599 = vmul.f32 %v1832, 1.442695
    %v2600 = vpow.pop %v2599
    %v2601 = vmul.f32 %v1833, 1.442695
    %v2602 = vpow.pop %v2601
    %v2603 = vmul.f32 %v1834, 1.442695
    %v2604 = vpow.pop %v2603
    %v2605 = vmul.f32 %v1835, 1.442695
    %v2606 = vpow.pop %v2605
    %v2607 = vmul.f32 %v1836, 1.442695
    %v2608 = vpow.pop %v2607
    %v2609 = vmul.f32 %v1837, 1.442695
    %v2610 = vpow.pop %v2609
    %v2611 = vmul.f32 %v1838, 1.442695
    %v2612 = vpow.pop %v2611
    %v2613 = vmul.f32 %v1839, 1.442695
    %v2614 = vpow.pop %v2613
    %v2615 = vmul.f32 %v1840, 1.442695
    %v2616 = vpow.pop %v2615
    %v2617 = vmul.f32 %v1841, 1.442695
    %v2618 = vpow.pop %v2617
    %v2619 = vmul.f32 %v1842, 1.442695
    %v2620 = vpow.pop %v2619
    %v2621 = vmul.f32 %v1843, 1.442695
    %v2622 = vpow.pop %v2621
    %v2623 = vmul.f32 %v1844, 1.442695
    %v2624 = vpow.pop %v2623
    %v2625 = vmul.f32 %v1845, 1.442695
    %v2626 = vpow.pop %v2625
    %v2627 = vmul.f32 %v1846, 1.442695
    %v2628 = vpow.pop %v2627
    %v2629 = vmul.f32 %v1847, 1.442695
    %v2630 = vpow.pop %v2629
    %v2631 = vmul.f32 %v1848, 1.442695
    %v2632 = vpow.pop %v2631
    %v2633 = vmul.f32 %v1849, 1.442695
    %v2634 = vpow.pop %v2633
    %v2635 = vmul.f32 %v1850, 1.442695
    %v2636 = vpow.pop %v2635
    %v2637 = vmul.f32 %v1851, 1.442695
    %v2638 = vpow.pop %v2637
    %v2639 = vmul.f32 %v1852, 1.442695
    %v2640 = vpow.pop %v2639
    %v2641 = vmul.f32 %v1853, 1.442695
    %v2642 = vpow.pop %v2641
    %v2643 = vmul.f32 %v1854, 1.442695
    %v2644 = vpow.pop %v2643
    %v2645 = vmul.f32 %v1855, 1.442695
    %v2646 = vpow.pop %v2645
    %v2647 = vmul.f32 %v1856, 1.442695
    %v2648 = vpow.pop %v2647
    %v2649 = vmul.f32 %v1857, 1.442695
    %v2650 = vpow.pop %v2649
    %v2651 = vmul.f32 %v1858, 1.442695
    %v2652 = vpow.pop %v2651
    %v2653 = vmul.f32 %v1859, 1.442695
    %v2654 = vpow.pop %v2653
    %v2655 = vmul.f32 %v1860, 1.442695
    %v2656 = vpow.pop %v2655
    %v2657 = vmul.f32 %v1861, 1.442695
    %v2658 = vpow.pop %v2657
    %v2659 = vmul.f32 %v1862, 1.442695
    %v2660 = vpow.pop %v2659
    %v2661 = vmul.f32 %v1863, 1.442695
    %v2662 = vpow.pop %v2661
    %v2663 = vmul.f32 %v1864, 1.442695
    %v2664 = vpow.pop %v2663
    %v2665 = vmul.f32 %v1865, 1.442695
    %v2666 = vpow.pop %v2665
    %v2667 = vmul.f32 %v1866, 1.442695
    %v2668 = vpow.pop %v2667
    %v2669 = vmul.f32 %v1867, 1.442695
    %v2670 = vpow.pop %v2669
    %v2671 = vmul.f32 %v1868, 1.442695
    %v2672 = vpow.pop %v2671
    %v2673 = vmul.f32 %v1869, 1.442695
    %v2674 = vpow.pop %v2673
    %v2675 = vmul.f32 %v1870, 1.442695
    %v2676 = vpow.pop %v2675
    %v2677 = vmul.f32 %v1871, 1.442695
    %v2678 = vpow.pop %v2677
    %v2679 = vmul.f32 %v1872, 1.442695
    %v2680 = vpow.pop %v2679
    %v2681 = vmul.f32 %v1873, 1.442695
    %v2682 = vpow.pop %v2681
    %v2683 = vmul.f32 %v1874, 1.442695
    %v2684 = vpow.pop %v2683
    %v2685 = vmul.f32 %v1875, 1.442695
    %v2686 = vpow.pop %v2685
    %v2687 = vmul.f32 %v1876, 1.442695
    %v2688 = vpow.pop %v2687
    %v2689 = vmul.f32 %v1877, 1.442695
    %v2690 = vpow.pop %v2689
    %v2691 = vmul.f32 %v1878, 1.442695
    %v2692 = vpow.pop %v2691
    %v2693 = vmul.f32 %v1879, 1.442695
    %v2694 = vpow.pop %v2693
    %v2695 = vmul.f32 %v1880, 1.442695
    %v2696 = vpow.pop %v2695
    %v2697 = vmul.f32 %v1881, 1.442695
    %v2698 = vpow.pop %v2697
    %v2699 = vmul.f32 %v1882, 1.442695
    %v2700 = vpow.pop %v2699
    %v2701 = vmul.f32 %v1883, 1.442695
    %v2702 = vpow.pop %v2701
    %v2703 = vmul.f32 %v1884, 1.442695
    %v2704 = vpow.pop %v2703
    %v2705 = vmul.f32 %v1885, 1.442695
    %v2706 = vpow.pop %v2705
    %v2707 = vmul.f32 %v1886, 1.442695
    %v2708 = vpow.pop %v2707
    %v2709 = vmul.f32 %v1887, 1.442695
    %v2710 = vpow.pop %v2709
    %v2711 = vmul.f32 %v1888, 1.442695
    %v2712 = vpow.pop %v2711
    %v2713 = vmul.f32 %v1889, 1.442695
    %v2714 = vpow.pop %v2713
    %v2715 = vmul.f32 %v1890, 1.442695
    %v2716 = vpow.pop %v2715
    %v2717 = vmul.f32 %v1891, 1.442695
    %v2718 = vpow.pop %v2717
    %v2719 = vmul.f32 %v1892, 1.442695
    %v2720 = vpow.pop %v2719
    %v2721 = vmul.f32 %v1893, 1.442695
    %v2722 = vpow.pop %v2721
    %v2723 = vmul.f32 %v1894, 1.442695
    %v2724 = vpow.pop %v2723
    %v2725 = vmul.f32 %v1895, 1.442695
    %v2726 = vpow.pop %v2725
    %v2727 = vmul.f32 %v1896, 1.442695
    %v2728 = vpow.pop %v2727
    %v2729 = vmul.f32 %v1897, 1.442695
    %v2730 = vpow.pop %v2729
    %v2731 = vmul.f32 %v1898, 1.442695
    %v2732 = vpow.pop %v2731
    %v2733 = vmul.f32 %v1899, 1.442695
    %v2734 = vpow.pop %v2733
    %v2735 = vmul.f32 %v1900, 1.442695
    %v2736 = vpow.pop %v2735
    %v2737 = vmul.f32 %v1901, 1.442695
    %v2738 = vpow.pop %v2737
    %v2739 = vmul.f32 %v1902, 1.442695
    %v2740 = vpow.pop %v2739
    %v2741 = vmul.f32 %v1903, 1.442695
    %v2742 = vpow.pop %v2741
    %v2743 = vmul.f32 %v1904, 1.442695
    %v2744 = vpow.pop %v2743
    %v2745 = vmul.f32 %v1905, 1.442695
    %v2746 = vpow.pop %v2745
    %v2747 = vmul.f32 %v1906, 1.442695
    %v2748 = vpow.pop %v2747
    %v2749 = vmul.f32 %v1907, 1.442695
    %v2750 = vpow.pop %v2749
    %v2751 = vmul.f32 %v1908, 1.442695
    %v2752 = vpow.pop %v2751
    %v2753 = vmul.f32 %v1909, 1.442695
    %v2754 = vpow.pop %v2753
    %v2755 = vmul.f32 %v1910, 1.442695
    %v2756 = vpow.pop %v2755
    %v2757 = vmul.f32 %v1911, 1.442695
    %v2758 = vpow.pop %v2757
    %v2759 = vmul.f32 %v1912, 1.442695
    %v2760 = vpow.pop %v2759
    %v2761 = vmul.f32 %v1913, 1.442695
    %v2762 = vpow.pop %v2761
    %v2763 = vmul.f32 %v1914, 1.442695
    %v2764 = vpow.pop %v2763
    %v2765 = vmul.f32 %v1915, 1.442695
    %v2766 = vpow.pop %v2765
    %v2767 = vmul.f32 %v1916, 1.442695
    %v2768 = vpow.pop %v2767
    %v2769 = vmul.f32 %v1917, 1.442695
    %v2770 = vpow.pop %v2769
    %v2771 = vmul.f32 %v1918, 1.442695
    %v2772 = vpow.pop %v2771
    %v2773 = vmul.f32 %v1919, 1.442695
    %v2774 = vpow.pop %v2773
    %v2775 = vmul.f32 %v1920, 1.442695
    %v2776 = vpow.pop %v2775
    %v2777 = vmul.f32 %v1921, 1.442695
    %v2778 = vpow.pop %v2777
    %v2779 = vmul.f32 %v1922, 1.442695
    %v2780 = vpow.pop %v2779
    %v2781 = vmul.f32 %v1923, 1.442695
    %v2782 = vpow.pop %v2781
    %v2783 = vmul.f32 %v1924, 1.442695
    %v2784 = vpow.pop %v2783
    %v2785 = vmul.f32 %v1925, 1.442695
    %v2786 = vpow.pop %v2785
    %v2787 = vmul.f32 %v1926, 1.442695
    %v2788 = vpow.pop %v2787
    %v2789 = vmul.f32 %v1927, 1.442695
    %v2790 = vpow.pop %v2789
    %v2791 = vmul.f32 %v1928, 1.442695
    %v2792 = vpow.pop %v2791
    %v2793 = vmul.f32 %v1929, 1.442695
    %v2794 = vpow.pop %v2793
    %v2795 = vmul.f32 %v1930, 1.442695
    %v2796 = vpow.pop %v2795
    %v2797 = vmul.f32 %v1931, 1.442695
    %v2798 = vpow.pop %v2797
    %v2799 = vmul.f32 %v1932, 1.442695
    %v2800 = vpow.pop %v2799
    %v2801 = vmul.f32 %v1933, 1.442695
    %v2802 = vpow.pop %v2801
    %v2803 = vmul.f32 %v1934, 1.442695
    %v2804 = vpow.pop %v2803
    %v2805 = vmul.f32 %v1935, 1.442695
    %v2806 = vpow.pop %v2805
    %v2807 = vmul.f32 %v1936, 1.442695
    %v2808 = vpow.pop %v2807
    %v2809 = vmul.f32 %v1937, 1.442695
    %v2810 = vpow.pop %v2809
    %v2811 = vmul.f32 %v1938, 1.442695
    %v2812 = vpow.pop %v2811
    %v2813 = vmul.f32 %v1939, 1.442695
    %v2814 = vpow.pop %v2813
    %v2815 = vmul.f32 %v1940, 1.442695
    %v2816 = vpow.pop %v2815
    %v2817 = vmul.f32 %v1941, 1.442695
    %v2818 = vpow.pop %v2817
    %v2819 = vmul.f32 %v1942, 1.442695
    %v2820 = vpow.pop %v2819
    %v2821 = vmul.f32 %v1943, 1.442695
    %v2822 = vpow.pop %v2821
    %v2823 = vmul.f32 %v1944, 1.442695
    %v2824 = vpow.pop %v2823
    %v2825 = vmul.f32 %v1945, 1.442695
    %v2826 = vpow.pop %v2825
    %v2827 = vmul.f32 %v1946, 1.442695
    %v2828 = vpow.pop %v2827
    %v2829 = vmul.f32 %v1947, 1.442695
    %v2830 = vpow.pop %v2829
    %v2831 = vmul.f32 %v1948, 1.442695
    %v2832 = vpow.pop %v2831
    %v2833 = vmul.f32 %v1949, 1.442695
    %v2834 = vpow.pop %v2833
    %v2835 = vmul.f32 %v1950, 1.442695
    %v2836 = vpow.pop %v2835
    %v2837 = vmul.f32 %v1951, 1.442695
    %v2838 = vpow.pop %v2837
    %v2839 = vmul.f32 %v1952, 1.442695
    %v2840 = vpow.pop %v2839
    %v2841 = vmul.f32 %v1953, 1.442695
    %v2842 = vpow.pop %v2841
    %v2843 = vmul.f32 %v1954, 1.442695
    %v2844 = vpow.pop %v2843
    %v2845 = vmul.f32 %v1955, 1.442695
    %v2846 = vpow.pop %v2845
    %v2847 = vmul.f32 %v1956, 1.442695
    %v2848 = vpow.pop %v2847
    %v2849 = vmul.f32 %v1957, 1.442695
    %v2850 = vpow.pop %v2849
    %v2851 = vmul.f32 %v1958, 1.442695
    %v2852 = vpow.pop %v2851
    %v2853 = vmul.f32 %v1959, 1.442695
    %v2854 = vpow.pop %v2853
    %v2855 = vmul.f32 %v1960, 1.442695
    %v2856 = vpow.pop %v2855
    %v2857 = vmul.f32 %v1961, 1.442695
    %v2858 = vpow.pop %v2857
    %v2859 = vmul.f32 %v1962, 1.442695
    %v2860 = vpow.pop %v2859
    %v2861 = vmul.f32 %v1963, 1.442695
    %v2862 = vpow.pop %v2861
    %v2863 = vmul.f32 %v1964, 1.442695
    %v2864 = vpow.pop %v2863
    %v2865 = vmul.f32 %v1965, 1.442695
    %v2866 = vpow.pop %v2865
    %v2867 = vmul.f32 %v1966, 1.442695
    %v2868 = vpow.pop %v2867
    %v2869 = vmul.f32 %v1967, 1.442695
    %v2870 = vpow.pop %v2869
    %v2871 = vmul.f32 %v1968, 1.442695
    %v2872 = vpow.pop %v2871
    %v2873 = vmul.f32 %v1969, 1.442695
    %v2874 = vpow.pop %v2873
    %v2875 = vmul.f32 %v1970, 1.442695
    %v2876 = vpow.pop %v2875
    %v2877 = vmul.f32 %v1971, 1.442695
    %v2878 = vpow.pop %v2877
    %v2879 = vmul.f32 %v1972, 1.442695
    %v2880 = vpow.pop %v2879
    %v2881 = vmul.f32 %v1973, 1.442695
    %v2882 = vpow.pop %v2881
    %v2883 = vmul.f32 %v1974, 1.442695
    %v2884 = vpow.pop %v2883
    %v2885 = vmul.f32 %v1975, 1.442695
    %v2886 = vpow.pop %v2885
    %v2887 = vmul.f32 %v1976, 1.442695
    %v2888 = vpow.pop %v2887
    %v2889 = vmul.f32 %v1977, 1.442695
    %v2890 = vpow.pop %v2889
    %v2891 = vmul.f32 %v1978, 1.442695
    %v2892 = vpow.pop %v2891
    %v2893 = vmul.f32 %v1979, 1.442695
    %v2894 = vpow.pop %v2893
    %v2895 = vmul.f32 %v1980, 1.442695
    %v2896 = vpow.pop %v2895
    %v2897 = vmul.f32 %v1981, 1.442695
    %v2898 = vpow.pop %v2897
    %v2899 = vmul.f32 %v1982, 1.442695
    %v2900 = vpow.pop %v2899
    %v2901 = vmul.f32 %v1983, 1.442695
    %v2902 = vpow.pop %v2901
    %v2903 = vmul.f32 %v1984, 1.442695
    %v2904 = vpow.pop %v2903
    %v2905 = vmul.f32 %v1985, 1.442695
    %v2906 = vpow.pop %v2905
    %v2907 = vmul.f32 %v1986, 1.442695
    %v2908 = vpow.pop %v2907
    %v2909 = vmul.f32 %v1987, 1.442695
    %v2910 = vpow.pop %v2909
    %v2911 = vmul.f32 %v1988, 1.442695
    %v2912 = vpow.pop %v2911
    %v2913 = vmul.f32 %v1989, 1.442695
    %v2914 = vpow.pop %v2913
    %v2915 = vmul.f32 %v1990, 1.442695
    %v2916 = vpow.pop %v2915
    %v2917 = vmul.f32 %v1991, 1.442695
    %v2918 = vpow.pop %v2917
    %v2919 = vmul.f32 %v1992, 1.442695
    %v2920 = vpow.pop %v2919
    %v2921 = vmul.f32 %v1993, 1.442695
    %v2922 = vpow.pop %v2921
    %v2923 = vmul.f32 %v1994, 1.442695
    %v2924 = vpow.pop %v2923
    %v2925 = vmul.f32 %v1995, 1.442695
    %v2926 = vpow.pop %v2925
    %v2927 = vmul.f32 %v1996, 1.442695
    %v2928 = vpow.pop %v2927
    %v2929 = vmul.f32 %v1997, 1.442695
    %v2930 = vpow.pop %v2929
    %v2931 = vmul.f32 %v1998, 1.442695
    %v2932 = vpow.pop %v2931
    %v2933 = vmul.f32 %v1999, 1.442695
    %v2934 = vpow.pop %v2933
    %v2935 = vmul.f32 %v2000, 1.442695
    %v2936 = vpow.pop %v2935
    %v2937 = vmul.f32 %v2001, 1.442695
    %v2938 = vpow.pop %v2937
    %v2939 = vmul.f32 %v2002, 1.442695
    %v2940 = vpow.pop %v2939
    %v2941 = vmul.f32 %v2003, 1.442695
    %v2942 = vpow.pop %v2941
    %v2943 = vmul.f32 %v2004, 1.442695
    %v2944 = vpow.pop %v2943
    %v2945 = vmul.f32 %v2005, 1.442695
    %v2946 = vpow.pop %v2945
    %v2947 = vmul.f32 %v2006, 1.442695
    %v2948 = vpow.pop %v2947
    %v2949 = vmul.f32 %v2007, 1.442695
    %v2950 = vpow.pop %v2949
    %v2951 = vmul.f32 %v2008, 1.442695
    %v2952 = vpow.pop %v2951
    %v2953 = vmul.f32 %v2009, 1.442695
    %v2954 = vpow.pop %v2953
    %v2955 = vmul.f32 %v2010, 1.442695
    %v2956 = vpow.pop %v2955
    %v2957 = vmul.f32 %v2011, 1.442695
    %v2958 = vpow.pop %v2957
    %v2959 = vmul.f32 %v2012, 1.442695
    %v2960 = vpow.pop %v2959
    %v2961 = vmul.f32 %v2013, 1.442695
    %v2962 = vpow.pop %v2961
    %v2963 = vmul.f32 %v2014, 1.442695
    %v2964 = vpow.pop %v2963
    %v2965 = vmul.f32 %v2015, 1.442695
    %v2966 = vpow.pop %v2965
    %v2967 = vmul.f32 %v2016, 1.442695
    %v2968 = vpow.pop %v2967
    %v2969 = vmul.f32 %v2017, 1.442695
    %v2970 = vpow.pop %v2969
    %v2971 = vmul.f32 %v2018, 1.442695
    %v2972 = vpow.pop %v2971
    %v2973 = vmul.f32 %v2019, 1.442695
    %v2974 = vpow.pop %v2973
    %v2975 = vmul.f32 %v2020, 1.442695
    %v2976 = vpow.pop %v2975
    %v2977 = vmul.f32 %v2021, 1.442695
    %v2978 = vpow.pop %v2977
    %v2979 = vmul.f32 %v2022, 1.442695
    %v2980 = vpow.pop %v2979
    %v2981 = vmul.f32 %v2023, 1.442695
    %v2982 = vpow.pop %v2981
    %v2983 = vmul.f32 %v2024, 1.442695
    %v2984 = vpow.pop %v2983
    %v2985 = vmul.f32 %v2025, 1.442695
    %v2986 = vpow.pop %v2985
    %v2987 = vmul.f32 %v2026, 1.442695
    %v2988 = vpow.pop %v2987
    %v2989 = vmul.f32 %v2027, 1.442695
    %v2990 = vpow.pop %v2989
    %v2991 = vmul.f32 %v2028, 1.442695
    %v2992 = vpow.pop %v2991
    %v2993 = vmul.f32 %v2029, 1.442695
    %v2994 = vpow.pop %v2993
    %v2995 = vmul.f32 %v2030, 1.442695
    %v2996 = vpow.pop %v2995
    %v2997 = vmul.f32 %v2031, 1.442695
    %v2998 = vpow.pop %v2997
    %v2999 = vmul.f32 %v2032, 1.442695
    %v3000 = vpow.pop %v2999
    %v3001 = vmul.f32 %v2033, 1.442695
    %v3002 = vpow.pop %v3001
    %v3003 = vmul.f32 %v2034, 1.442695
    %v3004 = vpow.pop %v3003
    %v3005 = vmul.f32 %v2035, 1.442695
    %v3006 = vpow.pop %v3005
    %v3007 = vmul.f32 %v2036, 1.442695
    %v3008 = vpow.pop %v3007
    %v3009 = vmul.f32 %v2037, 1.442695
    %v3010 = vpow.pop %v3009
    %v3011 = vmul.f32 %v2038, 1.442695
    %v3012 = vpow.pop %v3011
    %v3013 = vmul.f32 %v2039, 1.442695
    %v3014 = vpow.pop %v3013
    %v3015 = vmul.f32 %v2040, 1.442695
    %v3016 = vpow.pop %v3015
    %v3017 = vmul.f32 %v2041, 1.442695
    %v3018 = vpow.pop %v3017
    %v3019 = vmul.f32 %v2042, 1.442695
    %v3020 = vpow.pop %v3019
    %v3021 = vmul.f32 %v2043, 1.442695
    %v3022 = vpow.pop %v3021
    %v3023 = vmul.f32 %v2044, 1.442695
    %v3024 = vpow.pop %v3023
    %v3025 = vmul.f32 %v2045, 1.442695
    %v3026 = vpow.pop %v3025
    %v3027 = vmul.f32 %v2046, 1.442695
    %v3028 = vpow.pop %v3027
    %v3029 = vmul.f32 %v2047, 1.442695
    %v3030 = vpow.pop %v3029
    %v3031 = vmul.f32 %v2048, 1.442695
    %v3032 = vpow.pop %v3031
    %v3033 = vmul.f32 %v2049, 1.442695
    %v3034 = vpow.pop %v3033
    %v3035 = vmul.f32 %v2050, 1.442695
    %v3036 = vpow.pop %v3035
    %v3037 = vmul.f32 %v2051, 1.442695
    %v3038 = vpow.pop %v3037
    %v3039 = vmul.f32 %v2052, 1.442695
    %v3040 = vpow.pop %v3039
    %v3041 = vmul.f32 %v2053, 1.442695
    %v3042 = vpow.pop %v3041
    %v3043 = vmul.f32 %v2054, 1.442695
    %v3044 = vpow.pop %v3043
    %v3045 = vmul.f32 %v2055, 1.442695
    %v3046 = vpow.pop %v3045
    %v3047 = vmul.f32 %v2056, 1.442695
    %v3048 = vpow.pop %v3047
    %v3049 = vmul.f32 %v2057, 1.442695
    %v3050 = vpow.pop %v3049
    %v3051 = vmul.f32 %v2058, 1.442695
    %v3052 = vpow.pop %v3051
    %v3053 = vmul.f32 %v2059, 1.442695
    %v3054 = vpow.pop %v3053
    %v3055 = vmul.f32 %v2060, 1.442695
    %v3056 = vpow.pop %v3055
    %v3057 = vmul.f32 %v2061, 1.442695
    %v3058 = vpow.pop %v3057
    %v3059 = vmul.f32 %v2062, 1.442695
    %v3060 = vpow.pop %v3059
    %v3061 = vmul.f32 %v2063, 1.442695
    %v3062 = vpow.pop %v3061
    %v3063 = vmul.f32 %v2064, 1.442695
    %v3064 = vpow.pop %v3063
    %v3065 = vmul.f32 %v2065, 1.442695
    %v3066 = vpow.pop %v3065
    %v3067 = vmul.f32 %v2066, 1.442695
    %v3068 = vpow.pop %v3067
    %v3069 = vmul.f32 %v2067, 1.442695
    %v3070 = vpow.pop %v3069
    %v3071 = vmul.f32 %v2068, 1.442695
    %v3072 = vpow.pop %v3071
    %v3073 = vmul.f32 %v2069, 1.442695
    %v3074 = vpow.pop %v3073
    %v3075 = vmul.f32 %v2070, 1.442695
    %v3076 = vpow.pop %v3075
    %v3077 = vmul.f32 %v2071, 1.442695
    %v3078 = vpow.pop %v3077
    %v3079 = vmul.f32 %v2072, 1.442695
    %v3080 = vpow.pop %v3079
    %v3081 = vmul.f32 %v2073, 1.442695
    %v3082 = vpow.pop %v3081
    %v3083 = vmul.f32 %v2074, 1.442695
    %v3084 = vpow.pop %v3083
    %v3085 = vmul.f32 %v2075, 1.442695
    %v3086 = vpow.pop %v3085
    %v3087 = vmul.f32 %v2076, 1.442695
    %v3088 = vpow.pop %v3087
    %v3089 = vmul.f32 %v2077, 1.442695
    %v3090 = vpow.pop %v3089
    %v3091 = vmul.f32 %v2078, 1.442695
    %v3092 = vpow.pop %v3091
    %v3093 = vmul.f32 %v2079, 1.442695
    %v3094 = vpow.pop %v3093
    %v3095 = vmul.f32 %v2080, 1.442695
    %v3096 = vpow.pop %v3095
    %v3097 = vmul.f32 %v2081, 1.442695
    %v3098 = vpow.pop %v3097
    %v3099 = vmul.f32 %v2082, 1.442695
    %v3100 = vpow.pop %v3099
    %v3101 = vmul.f32 %v2083, 1.442695
    %v3102 = vpow.pop %v3101
    %v3103 = vmul.f32 %v2084, 1.442695
    %v3104 = vpow.pop %v3103
    %v3105 = vmul.f32 %v2085, 1.442695
    %v3106 = vpow.pop %v3105
    %v3107 = vmul.f32 %v2086, 1.442695
    %v3108 = vpow.pop %v3107
    %v3109 = vmul.f32 %v2087, 1.442695
    %v3110 = vpow.pop %v3109
    %v3111 = vmul.f32 %v2088, 1.442695
    %v3112 = vpow.pop %v3111
    %3113 = vst [vmem:[#allocation7] sm:$0xff] %v2090
    %3114 = vst [vmem:[#allocation7 + $0x8] sm:$0xff] %v2092
    %3115 = vst [vmem:[#allocation7 + $0x10] sm:$0xff] %v2094
    %3116 = vst [vmem:[#allocation7 + $0x18] sm:$0xff] %v2096
    %3117 = vst [vmem:[#allocation7 + $0x20] sm:$0xff] %v2098
    %3118 = vst [vmem:[#allocation7 + $0x28] sm:$0xff] %v2100
    %3119 = vst [vmem:[#allocation7 + $0x30] sm:$0xff] %v2102
    %3120 = vst [vmem:[#allocation7 + $0x38] sm:$0xff] %v2104
    %3121 = vst [vmem:[#allocation7 + $0x40] sm:$0xff] %v2106
    %3122 = vst [vmem:[#allocation7 + $0x48] sm:$0xff] %v2108
    %3123 = vst [vmem:[#allocation7 + $0x50] sm:$0xff] %v2110
    %3124 = vst [vmem:[#allocation7 + $0x58] sm:$0xff] %v2112
    %3125 = vst [vmem:[#allocation7 + $0x60] sm:$0xff] %v2114
    %3126 = vst [vmem:[#allocation7 + $0x68] sm:$0xff] %v2116
    %3127 = vst [vmem:[#allocation7 + $0x70] sm:$0xff] %v2118
    %3128 = vst [vmem:[#allocation7 + $0x78] sm:$0xff] %v2120
    %3129 = vst [vmem:[#allocation7 + $0x80] sm:$0xff] %v2122
    %3130 = vst [vmem:[#allocation7 + $0x88] sm:$0xff] %v2124
    %3131 = vst [vmem:[#allocation7 + $0x90] sm:$0xff] %v2126
    %3132 = vst [vmem:[#allocation7 + $0x98] sm:$0xff] %v2128
    %3133 = vst [vmem:[#allocation7 + $0xa0] sm:$0xff] %v2130
    %3134 = vst [vmem:[#allocation7 + $0xa8] sm:$0xff] %v2132
    %3135 = vst [vmem:[#allocation7 + $0xb0] sm:$0xff] %v2134
    %3136 = vst [vmem:[#allocation7 + $0xb8] sm:$0xff] %v2136
    %3137 = vst [vmem:[#allocation7 + $0xc0] sm:$0xff] %v2138
    %3138 = vst [vmem:[#allocation7 + $0xc8] sm:$0xff] %v2140
    %3139 = vst [vmem:[#allocation7 + $0xd0] sm:$0xff] %v2142
    %3140 = vst [vmem:[#allocation7 + $0xd8] sm:$0xff] %v2144
    %3141 = vst [vmem:[#allocation7 + $0xe0] sm:$0xff] %v2146
    %3142 = vst [vmem:[#allocation7 + $0xe8] sm:$0xff] %v2148
    %3143 = vst [vmem:[#allocation7 + $0xf0] sm:$0xff] %v2150
    %3144 = vst [vmem:[#allocation7 + $0xf8] sm:$0xff] %v2152
    %3145 = vst [vmem:[#allocation7 + $0x100] sm:$0xff] %v2154
    %3146 = vst [vmem:[#allocation7 + $0x108] sm:$0xff] %v2156
    %3147 = vst [vmem:[#allocation7 + $0x110] sm:$0xff] %v2158
    %3148 = vst [vmem:[#allocation7 + $0x118] sm:$0xff] %v2160
    %3149 = vst [vmem:[#allocation7 + $0x120] sm:$0xff] %v2162
    %3150 = vst [vmem:[#allocation7 + $0x128] sm:$0xff] %v2164
    %3151 = vst [vmem:[#allocation7 + $0x130] sm:$0xff] %v2166
    %3152 = vst [vmem:[#allocation7 + $0x138] sm:$0xff] %v2168
    %3153 = vst [vmem:[#allocation7 + $0x140] sm:$0xff] %v2170
    %3154 = vst [vmem:[#allocation7 + $0x148] sm:$0xff] %v2172
    %3155 = vst [vmem:[#allocation7 + $0x150] sm:$0xff] %v2174
    %3156 = vst [vmem:[#allocation7 + $0x158] sm:$0xff] %v2176
    %3157 = vst [vmem:[#allocation7 + $0x160] sm:$0xff] %v2178
    %3158 = vst [vmem:[#allocation7 + $0x168] sm:$0xff] %v2180
    %3159 = vst [vmem:[#allocation7 + $0x170] sm:$0xff] %v2182
    %3160 = vst [vmem:[#allocation7 + $0x178] sm:$0xff] %v2184
    %3161 = vst [vmem:[#allocation7 + $0x180] sm:$0xff] %v2186
    %3162 = vst [vmem:[#allocation7 + $0x188] sm:$0xff] %v2188
    %3163 = vst [vmem:[#allocation7 + $0x190] sm:$0xff] %v2190
    %3164 = vst [vmem:[#allocation7 + $0x198] sm:$0xff] %v2192
    %3165 = vst [vmem:[#allocation7 + $0x1a0] sm:$0xff] %v2194
    %3166 = vst [vmem:[#allocation7 + $0x1a8] sm:$0xff] %v2196
    %3167 = vst [vmem:[#allocation7 + $0x1b0] sm:$0xff] %v2198
    %3168 = vst [vmem:[#allocation7 + $0x1b8] sm:$0xff] %v2200
    %3169 = vst [vmem:[#allocation7 + $0x1c0] sm:$0xff] %v2202
    %3170 = vst [vmem:[#allocation7 + $0x1c8] sm:$0xff] %v2204
    %3171 = vst [vmem:[#allocation7 + $0x1d0] sm:$0xff] %v2206
    %3172 = vst [vmem:[#allocation7 + $0x1d8] sm:$0xff] %v2208
    %3173 = vst [vmem:[#allocation7 + $0x1e0] sm:$0xff] %v2210
    %3174 = vst [vmem:[#allocation7 + $0x1e8] sm:$0xff] %v2212
    %3175 = vst [vmem:[#allocation7 + $0x1f0] sm:$0xff] %v2214
    %3176 = vst [vmem:[#allocation7 + $0x1f8] sm:$0xff] %v2216
    %3177 = vst [vmem:[#allocation7 + $0x200] sm:$0xff] %v2218
    %3178 = vst [vmem:[#allocation7 + $0x208] sm:$0xff] %v2220
    %3179 = vst [vmem:[#allocation7 + $0x210] sm:$0xff] %v2222
    %3180 = vst [vmem:[#allocation7 + $0x218] sm:$0xff] %v2224
    %3181 = vst [vmem:[#allocation7 + $0x220] sm:$0xff] %v2226
    %3182 = vst [vmem:[#allocation7 + $0x228] sm:$0xff] %v2228
    %3183 = vst [vmem:[#allocation7 + $0x230] sm:$0xff] %v2230
    %3184 = vst [vmem:[#allocation7 + $0x238] sm:$0xff] %v2232
    %3185 = vst [vmem:[#allocation7 + $0x240] sm:$0xff] %v2234
    %3186 = vst [vmem:[#allocation7 + $0x248] sm:$0xff] %v2236
    %3187 = vst [vmem:[#allocation7 + $0x250] sm:$0xff] %v2238
    %3188 = vst [vmem:[#allocation7 + $0x258] sm:$0xff] %v2240
    %3189 = vst [vmem:[#allocation7 + $0x260] sm:$0xff] %v2242
    %3190 = vst [vmem:[#allocation7 + $0x268] sm:$0xff] %v2244
    %3191 = vst [vmem:[#allocation7 + $0x270] sm:$0xff] %v2246
    %3192 = vst [vmem:[#allocation7 + $0x278] sm:$0xff] %v2248
    %3193 = vst [vmem:[#allocation7 + $0x280] sm:$0xff] %v2250
    %3194 = vst [vmem:[#allocation7 + $0x288] sm:$0xff] %v2252
    %3195 = vst [vmem:[#allocation7 + $0x290] sm:$0xff] %v2254
    %3196 = vst [vmem:[#allocation7 + $0x298] sm:$0xff] %v2256
    %3197 = vst [vmem:[#allocation7 + $0x2a0] sm:$0xff] %v2258
    %3198 = vst [vmem:[#allocation7 + $0x2a8] sm:$0xff] %v2260
    %3199 = vst [vmem:[#allocation7 + $0x2b0] sm:$0xff] %v2262
    %3200 = vst [vmem:[#allocation7 + $0x2b8] sm:$0xff] %v2264
    %3201 = vst [vmem:[#allocation7 + $0x2c0] sm:$0xff] %v2266
    %3202 = vst [vmem:[#allocation7 + $0x2c8] sm:$0xff] %v2268
    %3203 = vst [vmem:[#allocation7 + $0x2d0] sm:$0xff] %v2270
    %3204 = vst [vmem:[#allocation7 + $0x2d8] sm:$0xff] %v2272
    %3205 = vst [vmem:[#allocation7 + $0x2e0] sm:$0xff] %v2274
    %3206 = vst [vmem:[#allocation7 + $0x2e8] sm:$0xff] %v2276
    %3207 = vst [vmem:[#allocation7 + $0x2f0] sm:$0xff] %v2278
    %3208 = vst [vmem:[#allocation7 + $0x2f8] sm:$0xff] %v2280
    %3209 = vst [vmem:[#allocation7 + $0x300] sm:$0xff] %v2282
    %3210 = vst [vmem:[#allocation7 + $0x308] sm:$0xff] %v2284
    %3211 = vst [vmem:[#allocation7 + $0x310] sm:$0xff] %v2286
    %3212 = vst [vmem:[#allocation7 + $0x318] sm:$0xff] %v2288
    %3213 = vst [vmem:[#allocation7 + $0x320] sm:$0xff] %v2290
    %3214 = vst [vmem:[#allocation7 + $0x328] sm:$0xff] %v2292
    %3215 = vst [vmem:[#allocation7 + $0x330] sm:$0xff] %v2294
    %3216 = vst [vmem:[#allocation7 + $0x338] sm:$0xff] %v2296
    %3217 = vst [vmem:[#allocation7 + $0x340] sm:$0xff] %v2298
    %3218 = vst [vmem:[#allocation7 + $0x348] sm:$0xff] %v2300
    %3219 = vst [vmem:[#allocation7 + $0x350] sm:$0xff] %v2302
    %3220 = vst [vmem:[#allocation7 + $0x358] sm:$0xff] %v2304
    %3221 = vst [vmem:[#allocation7 + $0x360] sm:$0xff] %v2306
    %3222 = vst [vmem:[#allocation7 + $0x368] sm:$0xff] %v2308
    %3223 = vst [vmem:[#allocation7 + $0x370] sm:$0xff] %v2310
    %3224 = vst [vmem:[#allocation7 + $0x378] sm:$0xff] %v2312
    %3225 = vst [vmem:[#allocation7 + $0x380] sm:$0xff] %v2314
    %3226 = vst [vmem:[#allocation7 + $0x388] sm:$0xff] %v2316
    %3227 = vst [vmem:[#allocation7 + $0x390] sm:$0xff] %v2318
    %3228 = vst [vmem:[#allocation7 + $0x398] sm:$0xff] %v2320
    %3229 = vst [vmem:[#allocation7 + $0x3a0] sm:$0xff] %v2322
    %3230 = vst [vmem:[#allocation7 + $0x3a8] sm:$0xff] %v2324
    %3231 = vst [vmem:[#allocation7 + $0x3b0] sm:$0xff] %v2326
    %3232 = vst [vmem:[#allocation7 + $0x3b8] sm:$0xff] %v2328
    %3233 = vst [vmem:[#allocation7 + $0x3c0] sm:$0xff] %v2330
    %3234 = vst [vmem:[#allocation7 + $0x3c8] sm:$0xff] %v2332
    %3235 = vst [vmem:[#allocation7 + $0x3d0] sm:$0xff] %v2334
    %3236 = vst [vmem:[#allocation7 + $0x3d8] sm:$0xff] %v2336
    %3237 = vst [vmem:[#allocation7 + $0x3e0] sm:$0xff] %v2338
    %3238 = vst [vmem:[#allocation7 + $0x3e8] sm:$0xff] %v2340
    %3239 = vst [vmem:[#allocation7 + $0x3f0] sm:$0xff] %v2342
    %3240 = vst [vmem:[#allocation7 + $0x3f8] sm:$0xff] %v2344
    %3241 = vst [vmem:[#allocation7 + $0x400] sm:$0xff] %v2346
    %3242 = vst [vmem:[#allocation7 + $0x408] sm:$0xff] %v2348
    %3243 = vst [vmem:[#allocation7 + $0x410] sm:$0xff] %v2350
    %3244 = vst [vmem:[#allocation7 + $0x418] sm:$0xff] %v2352
    %3245 = vst [vmem:[#allocation7 + $0x420] sm:$0xff] %v2354
    %3246 = vst [vmem:[#allocation7 + $0x428] sm:$0xff] %v2356
    %3247 = vst [vmem:[#allocation7 + $0x430] sm:$0xff] %v2358
    %3248 = vst [vmem:[#allocation7 + $0x438] sm:$0xff] %v2360
    %3249 = vst [vmem:[#allocation7 + $0x440] sm:$0xff] %v2362
    %3250 = vst [vmem:[#allocation7 + $0x448] sm:$0xff] %v2364
    %3251 = vst [vmem:[#allocation7 + $0x450] sm:$0xff] %v2366
    %3252 = vst [vmem:[#allocation7 + $0x458] sm:$0xff] %v2368
    %3253 = vst [vmem:[#allocation7 + $0x460] sm:$0xff] %v2370
    %3254 = vst [vmem:[#allocation7 + $0x468] sm:$0xff] %v2372
    %3255 = vst [vmem:[#allocation7 + $0x470] sm:$0xff] %v2374
    %3256 = vst [vmem:[#allocation7 + $0x478] sm:$0xff] %v2376
    %3257 = vst [vmem:[#allocation7 + $0x480] sm:$0xff] %v2378
    %3258 = vst [vmem:[#allocation7 + $0x488] sm:$0xff] %v2380
    %3259 = vst [vmem:[#allocation7 + $0x490] sm:$0xff] %v2382
    %3260 = vst [vmem:[#allocation7 + $0x498] sm:$0xff] %v2384
    %3261 = vst [vmem:[#allocation7 + $0x4a0] sm:$0xff] %v2386
    %3262 = vst [vmem:[#allocation7 + $0x4a8] sm:$0xff] %v2388
    %3263 = vst [vmem:[#allocation7 + $0x4b0] sm:$0xff] %v2390
    %3264 = vst [vmem:[#allocation7 + $0x4b8] sm:$0xff] %v2392
    %3265 = vst [vmem:[#allocation7 + $0x4c0] sm:$0xff] %v2394
    %3266 = vst [vmem:[#allocation7 + $0x4c8] sm:$0xff] %v2396
    %3267 = vst [vmem:[#allocation7 + $0x4d0] sm:$0xff] %v2398
    %3268 = vst [vmem:[#allocation7 + $0x4d8] sm:$0xff] %v2400
    %3269 = vst [vmem:[#allocation7 + $0x4e0] sm:$0xff] %v2402
    %3270 = vst [vmem:[#allocation7 + $0x4e8] sm:$0xff] %v2404
    %3271 = vst [vmem:[#allocation7 + $0x4f0] sm:$0xff] %v2406
    %3272 = vst [vmem:[#allocation7 + $0x4f8] sm:$0xff] %v2408
    %3273 = vst [vmem:[#allocation7 + $0x500] sm:$0xff] %v2410
    %3274 = vst [vmem:[#allocation7 + $0x508] sm:$0xff] %v2412
    %3275 = vst [vmem:[#allocation7 + $0x510] sm:$0xff] %v2414
    %3276 = vst [vmem:[#allocation7 + $0x518] sm:$0xff] %v2416
    %3277 = vst [vmem:[#allocation7 + $0x520] sm:$0xff] %v2418
    %3278 = vst [vmem:[#allocation7 + $0x528] sm:$0xff] %v2420
    %3279 = vst [vmem:[#allocation7 + $0x530] sm:$0xff] %v2422
    %3280 = vst [vmem:[#allocation7 + $0x538] sm:$0xff] %v2424
    %3281 = vst [vmem:[#allocation7 + $0x540] sm:$0xff] %v2426
    %3282 = vst [vmem:[#allocation7 + $0x548] sm:$0xff] %v2428
    %3283 = vst [vmem:[#allocation7 + $0x550] sm:$0xff] %v2430
    %3284 = vst [vmem:[#allocation7 + $0x558] sm:$0xff] %v2432
    %3285 = vst [vmem:[#allocation7 + $0x560] sm:$0xff] %v2434
    %3286 = vst [vmem:[#allocation7 + $0x568] sm:$0xff] %v2436
    %3287 = vst [vmem:[#allocation7 + $0x570] sm:$0xff] %v2438
    %3288 = vst [vmem:[#allocation7 + $0x578] sm:$0xff] %v2440
    %3289 = vst [vmem:[#allocation7 + $0x580] sm:$0xff] %v2442
    %3290 = vst [vmem:[#allocation7 + $0x588] sm:$0xff] %v2444
    %3291 = vst [vmem:[#allocation7 + $0x590] sm:$0xff] %v2446
    %3292 = vst [vmem:[#allocation7 + $0x598] sm:$0xff] %v2448
    %3293 = vst [vmem:[#allocation7 + $0x5a0] sm:$0xff] %v2450
    %3294 = vst [vmem:[#allocation7 + $0x5a8] sm:$0xff] %v2452
    %3295 = vst [vmem:[#allocation7 + $0x5b0] sm:$0xff] %v2454
    %3296 = vst [vmem:[#allocation7 + $0x5b8] sm:$0xff] %v2456
    %3297 = vst [vmem:[#allocation7 + $0x5c0] sm:$0xff] %v2458
    %3298 = vst [vmem:[#allocation7 + $0x5c8] sm:$0xff] %v2460
    %3299 = vst [vmem:[#allocation7 + $0x5d0] sm:$0xff] %v2462
    %3300 = vst [vmem:[#allocation7 + $0x5d8] sm:$0xff] %v2464
    %3301 = vst [vmem:[#allocation7 + $0x5e0] sm:$0xff] %v2466
    %3302 = vst [vmem:[#allocation7 + $0x5e8] sm:$0xff] %v2468
    %3303 = vst [vmem:[#allocation7 + $0x5f0] sm:$0xff] %v2470
    %3304 = vst [vmem:[#allocation7 + $0x5f8] sm:$0xff] %v2472
    %3305 = vst [vmem:[#allocation7 + $0x600] sm:$0xff] %v2474
    %3306 = vst [vmem:[#allocation7 + $0x608] sm:$0xff] %v2476
    %3307 = vst [vmem:[#allocation7 + $0x610] sm:$0xff] %v2478
    %3308 = vst [vmem:[#allocation7 + $0x618] sm:$0xff] %v2480
    %3309 = vst [vmem:[#allocation7 + $0x620] sm:$0xff] %v2482
    %3310 = vst [vmem:[#allocation7 + $0x628] sm:$0xff] %v2484
    %3311 = vst [vmem:[#allocation7 + $0x630] sm:$0xff] %v2486
    %3312 = vst [vmem:[#allocation7 + $0x638] sm:$0xff] %v2488
    %3313 = vst [vmem:[#allocation7 + $0x640] sm:$0xff] %v2490
    %3314 = vst [vmem:[#allocation7 + $0x648] sm:$0xff] %v2492
    %3315 = vst [vmem:[#allocation7 + $0x650] sm:$0xff] %v2494
    %3316 = vst [vmem:[#allocation7 + $0x658] sm:$0xff] %v2496
    %3317 = vst [vmem:[#allocation7 + $0x660] sm:$0xff] %v2498
    %3318 = vst [vmem:[#allocation7 + $0x668] sm:$0xff] %v2500
    %3319 = vst [vmem:[#allocation7 + $0x670] sm:$0xff] %v2502
    %3320 = vst [vmem:[#allocation7 + $0x678] sm:$0xff] %v2504
    %3321 = vst [vmem:[#allocation7 + $0x680] sm:$0xff] %v2506
    %3322 = vst [vmem:[#allocation7 + $0x688] sm:$0xff] %v2508
    %3323 = vst [vmem:[#allocation7 + $0x690] sm:$0xff] %v2510
    %3324 = vst [vmem:[#allocation7 + $0x698] sm:$0xff] %v2512
    %3325 = vst [vmem:[#allocation7 + $0x6a0] sm:$0xff] %v2514
    %3326 = vst [vmem:[#allocation7 + $0x6a8] sm:$0xff] %v2516
    %3327 = vst [vmem:[#allocation7 + $0x6b0] sm:$0xff] %v2518
    %3328 = vst [vmem:[#allocation7 + $0x6b8] sm:$0xff] %v2520
    %3329 = vst [vmem:[#allocation7 + $0x6c0] sm:$0xff] %v2522
    %3330 = vst [vmem:[#allocation7 + $0x6c8] sm:$0xff] %v2524
    %3331 = vst [vmem:[#allocation7 + $0x6d0] sm:$0xff] %v2526
    %3332 = vst [vmem:[#allocation7 + $0x6d8] sm:$0xff] %v2528
    %3333 = vst [vmem:[#allocation7 + $0x6e0] sm:$0xff] %v2530
    %3334 = vst [vmem:[#allocation7 + $0x6e8] sm:$0xff] %v2532
    %3335 = vst [vmem:[#allocation7 + $0x6f0] sm:$0xff] %v2534
    %3336 = vst [vmem:[#allocation7 + $0x6f8] sm:$0xff] %v2536
    %3337 = vst [vmem:[#allocation7 + $0x700] sm:$0xff] %v2538
    %3338 = vst [vmem:[#allocation7 + $0x708] sm:$0xff] %v2540
    %3339 = vst [vmem:[#allocation7 + $0x710] sm:$0xff] %v2542
    %3340 = vst [vmem:[#allocation7 + $0x718] sm:$0xff] %v2544
    %3341 = vst [vmem:[#allocation7 + $0x720] sm:$0xff] %v2546
    %3342 = vst [vmem:[#allocation7 + $0x728] sm:$0xff] %v2548
    %3343 = vst [vmem:[#allocation7 + $0x730] sm:$0xff] %v2550
    %3344 = vst [vmem:[#allocation7 + $0x738] sm:$0xff] %v2552
    %3345 = vst [vmem:[#allocation7 + $0x740] sm:$0xff] %v2554
    %3346 = vst [vmem:[#allocation7 + $0x748] sm:$0xff] %v2556
    %3347 = vst [vmem:[#allocation7 + $0x750] sm:$0xff] %v2558
    %3348 = vst [vmem:[#allocation7 + $0x758] sm:$0xff] %v2560
    %3349 = vst [vmem:[#allocation7 + $0x760] sm:$0xff] %v2562
    %3350 = vst [vmem:[#allocation7 + $0x768] sm:$0xff] %v2564
    %3351 = vst [vmem:[#allocation7 + $0x770] sm:$0xff] %v2566
    %3352 = vst [vmem:[#allocation7 + $0x778] sm:$0xff] %v2568
    %3353 = vst [vmem:[#allocation7 + $0x780] sm:$0xff] %v2570
    %3354 = vst [vmem:[#allocation7 + $0x788] sm:$0xff] %v2572
    %3355 = vst [vmem:[#allocation7 + $0x790] sm:$0xff] %v2574
    %3356 = vst [vmem:[#allocation7 + $0x798] sm:$0xff] %v2576
    %3357 = vst [vmem:[#allocation7 + $0x7a0] sm:$0xff] %v2578
    %3358 = vst [vmem:[#allocation7 + $0x7a8] sm:$0xff] %v2580
    %3359 = vst [vmem:[#allocation7 + $0x7b0] sm:$0xff] %v2582
    %3360 = vst [vmem:[#allocation7 + $0x7b8] sm:$0xff] %v2584
    %3361 = vst [vmem:[#allocation7 + $0x7c0] sm:$0xff] %v2586
    %3362 = vst [vmem:[#allocation7 + $0x7c8] sm:$0xff] %v2588
    %3363 = vst [vmem:[#allocation7 + $0x7d0] sm:$0xff] %v2590
    %3364 = vst [vmem:[#allocation7 + $0x7d8] sm:$0xff] %v2592
    %3365 = vst [vmem:[#allocation7 + $0x7e0] sm:$0xff] %v2594
    %3366 = vst [vmem:[#allocation7 + $0x7e8] sm:$0xff] %v2596
    %3367 = vst [vmem:[#allocation7 + $0x7f0] sm:$0xff] %v2598
    %3368 = vst [vmem:[#allocation7 + $0x7f8] sm:$0xff] %v2600
    %3369 = vst [vmem:[#allocation7 + $0x800] sm:$0xff] %v2602
    %3370 = vst [vmem:[#allocation7 + $0x808] sm:$0xff] %v2604
    %3371 = vst [vmem:[#allocation7 + $0x810] sm:$0xff] %v2606
    %3372 = vst [vmem:[#allocation7 + $0x818] sm:$0xff] %v2608
    %3373 = vst [vmem:[#allocation7 + $0x820] sm:$0xff] %v2610
    %3374 = vst [vmem:[#allocation7 + $0x828] sm:$0xff] %v2612
    %3375 = vst [vmem:[#allocation7 + $0x830] sm:$0xff] %v2614
    %3376 = vst [vmem:[#allocation7 + $0x838] sm:$0xff] %v2616
    %3377 = vst [vmem:[#allocation7 + $0x840] sm:$0xff] %v2618
    %3378 = vst [vmem:[#allocation7 + $0x848] sm:$0xff] %v2620
    %3379 = vst [vmem:[#allocation7 + $0x850] sm:$0xff] %v2622
    %3380 = vst [vmem:[#allocation7 + $0x858] sm:$0xff] %v2624
    %3381 = vst [vmem:[#allocation7 + $0x860] sm:$0xff] %v2626
    %3382 = vst [vmem:[#allocation7 + $0x868] sm:$0xff] %v2628
    %3383 = vst [vmem:[#allocation7 + $0x870] sm:$0xff] %v2630
    %3384 = vst [vmem:[#allocation7 + $0x878] sm:$0xff] %v2632
    %3385 = vst [vmem:[#allocation7 + $0x880] sm:$0xff] %v2634
    %3386 = vst [vmem:[#allocation7 + $0x888] sm:$0xff] %v2636
    %3387 = vst [vmem:[#allocation7 + $0x890] sm:$0xff] %v2638
    %3388 = vst [vmem:[#allocation7 + $0x898] sm:$0xff] %v2640
    %3389 = vst [vmem:[#allocation7 + $0x8a0] sm:$0xff] %v2642
    %3390 = vst [vmem:[#allocation7 + $0x8a8] sm:$0xff] %v2644
    %3391 = vst [vmem:[#allocation7 + $0x8b0] sm:$0xff] %v2646
    %3392 = vst [vmem:[#allocation7 + $0x8b8] sm:$0xff] %v2648
    %3393 = vst [vmem:[#allocation7 + $0x8c0] sm:$0xff] %v2650
    %3394 = vst [vmem:[#allocation7 + $0x8c8] sm:$0xff] %v2652
    %3395 = vst [vmem:[#allocation7 + $0x8d0] sm:$0xff] %v2654
    %3396 = vst [vmem:[#allocation7 + $0x8d8] sm:$0xff] %v2656
    %3397 = vst [vmem:[#allocation7 + $0x8e0] sm:$0xff] %v2658
    %3398 = vst [vmem:[#allocation7 + $0x8e8] sm:$0xff] %v2660
    %3399 = vst [vmem:[#allocation7 + $0x8f0] sm:$0xff] %v2662
    %3400 = vst [vmem:[#allocation7 + $0x8f8] sm:$0xff] %v2664
    %3401 = vst [vmem:[#allocation7 + $0x900] sm:$0xff] %v2666
    %3402 = vst [vmem:[#allocation7 + $0x908] sm:$0xff] %v2668
    %3403 = vst [vmem:[#allocation7 + $0x910] sm:$0xff] %v2670
    %3404 = vst [vmem:[#allocation7 + $0x918] sm:$0xff] %v2672
    %3405 = vst [vmem:[#allocation7 + $0x920] sm:$0xff] %v2674
    %3406 = vst [vmem:[#allocation7 + $0x928] sm:$0xff] %v2676
    %3407 = vst [vmem:[#allocation7 + $0x930] sm:$0xff] %v2678
    %3408 = vst [vmem:[#allocation7 + $0x938] sm:$0xff] %v2680
    %3409 = vst [vmem:[#allocation7 + $0x940] sm:$0xff] %v2682
    %3410 = vst [vmem:[#allocation7 + $0x948] sm:$0xff] %v2684
    %3411 = vst [vmem:[#allocation7 + $0x950] sm:$0xff] %v2686
    %3412 = vst [vmem:[#allocation7 + $0x958] sm:$0xff] %v2688
    %3413 = vst [vmem:[#allocation7 + $0x960] sm:$0xff] %v2690
    %3414 = vst [vmem:[#allocation7 + $0x968] sm:$0xff] %v2692
    %3415 = vst [vmem:[#allocation7 + $0x970] sm:$0xff] %v2694
    %3416 = vst [vmem:[#allocation7 + $0x978] sm:$0xff] %v2696
    %3417 = vst [vmem:[#allocation7 + $0x980] sm:$0xff] %v2698
    %3418 = vst [vmem:[#allocation7 + $0x988] sm:$0xff] %v2700
    %3419 = vst [vmem:[#allocation7 + $0x990] sm:$0xff] %v2702
    %3420 = vst [vmem:[#allocation7 + $0x998] sm:$0xff] %v2704
    %3421 = vst [vmem:[#allocation7 + $0x9a0] sm:$0xff] %v2706
    %3422 = vst [vmem:[#allocation7 + $0x9a8] sm:$0xff] %v2708
    %3423 = vst [vmem:[#allocation7 + $0x9b0] sm:$0xff] %v2710
    %3424 = vst [vmem:[#allocation7 + $0x9b8] sm:$0xff] %v2712
    %3425 = vst [vmem:[#allocation7 + $0x9c0] sm:$0xff] %v2714
    %3426 = vst [vmem:[#allocation7 + $0x9c8] sm:$0xff] %v2716
    %3427 = vst [vmem:[#allocation7 + $0x9d0] sm:$0xff] %v2718
    %3428 = vst [vmem:[#allocation7 + $0x9d8] sm:$0xff] %v2720
    %3429 = vst [vmem:[#allocation7 + $0x9e0] sm:$0xff] %v2722
    %3430 = vst [vmem:[#allocation7 + $0x9e8] sm:$0xff] %v2724
    %3431 = vst [vmem:[#allocation7 + $0x9f0] sm:$0xff] %v2726
    %3432 = vst [vmem:[#allocation7 + $0x9f8] sm:$0xff] %v2728
    %3433 = vst [vmem:[#allocation7 + $0xa00] sm:$0xff] %v2730
    %3434 = vst [vmem:[#allocation7 + $0xa08] sm:$0xff] %v2732
    %3435 = vst [vmem:[#allocation7 + $0xa10] sm:$0xff] %v2734
    %3436 = vst [vmem:[#allocation7 + $0xa18] sm:$0xff] %v2736
    %3437 = vst [vmem:[#allocation7 + $0xa20] sm:$0xff] %v2738
    %3438 = vst [vmem:[#allocation7 + $0xa28] sm:$0xff] %v2740
    %3439 = vst [vmem:[#allocation7 + $0xa30] sm:$0xff] %v2742
    %3440 = vst [vmem:[#allocation7 + $0xa38] sm:$0xff] %v2744
    %3441 = vst [vmem:[#allocation7 + $0xa40] sm:$0xff] %v2746
    %3442 = vst [vmem:[#allocation7 + $0xa48] sm:$0xff] %v2748
    %3443 = vst [vmem:[#allocation7 + $0xa50] sm:$0xff] %v2750
    %3444 = vst [vmem:[#allocation7 + $0xa58] sm:$0xff] %v2752
    %3445 = vst [vmem:[#allocation7 + $0xa60] sm:$0xff] %v2754
    %3446 = vst [vmem:[#allocation7 + $0xa68] sm:$0xff] %v2756
    %3447 = vst [vmem:[#allocation7 + $0xa70] sm:$0xff] %v2758
    %3448 = vst [vmem:[#allocation7 + $0xa78] sm:$0xff] %v2760
    %3449 = vst [vmem:[#allocation7 + $0xa80] sm:$0xff] %v2762
    %3450 = vst [vmem:[#allocation7 + $0xa88] sm:$0xff] %v2764
    %3451 = vst [vmem:[#allocation7 + $0xa90] sm:$0xff] %v2766
    %3452 = vst [vmem:[#allocation7 + $0xa98] sm:$0xff] %v2768
    %3453 = vst [vmem:[#allocation7 + $0xaa0] sm:$0xff] %v2770
    %3454 = vst [vmem:[#allocation7 + $0xaa8] sm:$0xff] %v2772
    %3455 = vst [vmem:[#allocation7 + $0xab0] sm:$0xff] %v2774
    %3456 = vst [vmem:[#allocation7 + $0xab8] sm:$0xff] %v2776
    %3457 = vst [vmem:[#allocation7 + $0xac0] sm:$0xff] %v2778
    %3458 = vst [vmem:[#allocation7 + $0xac8] sm:$0xff] %v2780
    %3459 = vst [vmem:[#allocation7 + $0xad0] sm:$0xff] %v2782
    %3460 = vst [vmem:[#allocation7 + $0xad8] sm:$0xff] %v2784
    %3461 = vst [vmem:[#allocation7 + $0xae0] sm:$0xff] %v2786
    %3462 = vst [vmem:[#allocation7 + $0xae8] sm:$0xff] %v2788
    %3463 = vst [vmem:[#allocation7 + $0xaf0] sm:$0xff] %v2790
    %3464 = vst [vmem:[#allocation7 + $0xaf8] sm:$0xff] %v2792
    %3465 = vst [vmem:[#allocation7 + $0xb00] sm:$0xff] %v2794
    %3466 = vst [vmem:[#allocation7 + $0xb08] sm:$0xff] %v2796
    %3467 = vst [vmem:[#allocation7 + $0xb10] sm:$0xff] %v2798
    %3468 = vst [vmem:[#allocation7 + $0xb18] sm:$0xff] %v2800
    %3469 = vst [vmem:[#allocation7 + $0xb20] sm:$0xff] %v2802
    %3470 = vst [vmem:[#allocation7 + $0xb28] sm:$0xff] %v2804
    %3471 = vst [vmem:[#allocation7 + $0xb30] sm:$0xff] %v2806
    %3472 = vst [vmem:[#allocation7 + $0xb38] sm:$0xff] %v2808
    %3473 = vst [vmem:[#allocation7 + $0xb40] sm:$0xff] %v2810
    %3474 = vst [vmem:[#allocation7 + $0xb48] sm:$0xff] %v2812
    %3475 = vst [vmem:[#allocation7 + $0xb50] sm:$0xff] %v2814
    %3476 = vst [vmem:[#allocation7 + $0xb58] sm:$0xff] %v2816
    %3477 = vst [vmem:[#allocation7 + $0xb60] sm:$0xff] %v2818
    %3478 = vst [vmem:[#allocation7 + $0xb68] sm:$0xff] %v2820
    %3479 = vst [vmem:[#allocation7 + $0xb70] sm:$0xff] %v2822
    %3480 = vst [vmem:[#allocation7 + $0xb78] sm:$0xff] %v2824
    %3481 = vst [vmem:[#allocation7 + $0xb80] sm:$0xff] %v2826
    %3482 = vst [vmem:[#allocation7 + $0xb88] sm:$0xff] %v2828
    %3483 = vst [vmem:[#allocation7 + $0xb90] sm:$0xff] %v2830
    %3484 = vst [vmem:[#allocation7 + $0xb98] sm:$0xff] %v2832
    %3485 = vst [vmem:[#allocation7 + $0xba0] sm:$0xff] %v2834
    %3486 = vst [vmem:[#allocation7 + $0xba8] sm:$0xff] %v2836
    %3487 = vst [vmem:[#allocation7 + $0xbb0] sm:$0xff] %v2838
    %3488 = vst [vmem:[#allocation7 + $0xbb8] sm:$0xff] %v2840
    %3489 = vst [vmem:[#allocation7 + $0xbc0] sm:$0xff] %v2842
    %3490 = vst [vmem:[#allocation7 + $0xbc8] sm:$0xff] %v2844
    %3491 = vst [vmem:[#allocation7 + $0xbd0] sm:$0xff] %v2846
    %3492 = vst [vmem:[#allocation7 + $0xbd8] sm:$0xff] %v2848
    %3493 = vst [vmem:[#allocation7 + $0xbe0] sm:$0xff] %v2850
    %3494 = vst [vmem:[#allocation7 + $0xbe8] sm:$0xff] %v2852
    %3495 = vst [vmem:[#allocation7 + $0xbf0] sm:$0xff] %v2854
    %3496 = vst [vmem:[#allocation7 + $0xbf8] sm:$0xff] %v2856
    %3497 = vst [vmem:[#allocation7 + $0xc00] sm:$0xff] %v2858
    %3498 = vst [vmem:[#allocation7 + $0xc08] sm:$0xff] %v2860
    %3499 = vst [vmem:[#allocation7 + $0xc10] sm:$0xff] %v2862
    %3500 = vst [vmem:[#allocation7 + $0xc18] sm:$0xff] %v2864
    %3501 = vst [vmem:[#allocation7 + $0xc20] sm:$0xff] %v2866
    %3502 = vst [vmem:[#allocation7 + $0xc28] sm:$0xff] %v2868
    %3503 = vst [vmem:[#allocation7 + $0xc30] sm:$0xff] %v2870
    %3504 = vst [vmem:[#allocation7 + $0xc38] sm:$0xff] %v2872
    %3505 = vst [vmem:[#allocation7 + $0xc40] sm:$0xff] %v2874
    %3506 = vst [vmem:[#allocation7 + $0xc48] sm:$0xff] %v2876
    %3507 = vst [vmem:[#allocation7 + $0xc50] sm:$0xff] %v2878
    %3508 = vst [vmem:[#allocation7 + $0xc58] sm:$0xff] %v2880
    %3509 = vst [vmem:[#allocation7 + $0xc60] sm:$0xff] %v2882
    %3510 = vst [vmem:[#allocation7 + $0xc68] sm:$0xff] %v2884
    %3511 = vst [vmem:[#allocation7 + $0xc70] sm:$0xff] %v2886
    %3512 = vst [vmem:[#allocation7 + $0xc78] sm:$0xff] %v2888
    %3513 = vst [vmem:[#allocation7 + $0xc80] sm:$0xff] %v2890
    %3514 = vst [vmem:[#allocation7 + $0xc88] sm:$0xff] %v2892
    %3515 = vst [vmem:[#allocation7 + $0xc90] sm:$0xff] %v2894
    %3516 = vst [vmem:[#allocation7 + $0xc98] sm:$0xff] %v2896
    %3517 = vst [vmem:[#allocation7 + $0xca0] sm:$0xff] %v2898
    %3518 = vst [vmem:[#allocation7 + $0xca8] sm:$0xff] %v2900
    %3519 = vst [vmem:[#allocation7 + $0xcb0] sm:$0xff] %v2902
    %3520 = vst [vmem:[#allocation7 + $0xcb8] sm:$0xff] %v2904
    %3521 = vst [vmem:[#allocation7 + $0xcc0] sm:$0xff] %v2906
    %3522 = vst [vmem:[#allocation7 + $0xcc8] sm:$0xff] %v2908
    %3523 = vst [vmem:[#allocation7 + $0xcd0] sm:$0xff] %v2910
    %3524 = vst [vmem:[#allocation7 + $0xcd8] sm:$0xff] %v2912
    %3525 = vst [vmem:[#allocation7 + $0xce0] sm:$0xff] %v2914
    %3526 = vst [vmem:[#allocation7 + $0xce8] sm:$0xff] %v2916
    %3527 = vst [vmem:[#allocation7 + $0xcf0] sm:$0xff] %v2918
    %3528 = vst [vmem:[#allocation7 + $0xcf8] sm:$0xff] %v2920
    %3529 = vst [vmem:[#allocation7 + $0xd00] sm:$0xff] %v2922
    %3530 = vst [vmem:[#allocation7 + $0xd08] sm:$0xff] %v2924
    %3531 = vst [vmem:[#allocation7 + $0xd10] sm:$0xff] %v2926
    %3532 = vst [vmem:[#allocation7 + $0xd18] sm:$0xff] %v2928
    %3533 = vst [vmem:[#allocation7 + $0xd20] sm:$0xff] %v2930
    %3534 = vst [vmem:[#allocation7 + $0xd28] sm:$0xff] %v2932
    %3535 = vst [vmem:[#allocation7 + $0xd30] sm:$0xff] %v2934
    %3536 = vst [vmem:[#allocation7 + $0xd38] sm:$0xff] %v2936
    %3537 = vst [vmem:[#allocation7 + $0xd40] sm:$0xff] %v2938
    %3538 = vst [vmem:[#allocation7 + $0xd48] sm:$0xff] %v2940
    %3539 = vst [vmem:[#allocation7 + $0xd50] sm:$0xff] %v2942
    %3540 = vst [vmem:[#allocation7 + $0xd58] sm:$0xff] %v2944
    %3541 = vst [vmem:[#allocation7 + $0xd60] sm:$0xff] %v2946
    %3542 = vst [vmem:[#allocation7 + $0xd68] sm:$0xff] %v2948
    %3543 = vst [vmem:[#allocation7 + $0xd70] sm:$0xff] %v2950
    %3544 = vst [vmem:[#allocation7 + $0xd78] sm:$0xff] %v2952
    %3545 = vst [vmem:[#allocation7 + $0xd80] sm:$0xff] %v2954
    %3546 = vst [vmem:[#allocation7 + $0xd88] sm:$0xff] %v2956
    %3547 = vst [vmem:[#allocation7 + $0xd90] sm:$0xff] %v2958
    %3548 = vst [vmem:[#allocation7 + $0xd98] sm:$0xff] %v2960
    %3549 = vst [vmem:[#allocation7 + $0xda0] sm:$0xff] %v2962
    %3550 = vst [vmem:[#allocation7 + $0xda8] sm:$0xff] %v2964
    %3551 = vst [vmem:[#allocation7 + $0xdb0] sm:$0xff] %v2966
    %3552 = vst [vmem:[#allocation7 + $0xdb8] sm:$0xff] %v2968
    %3553 = vst [vmem:[#allocation7 + $0xdc0] sm:$0xff] %v2970
    %3554 = vst [vmem:[#allocation7 + $0xdc8] sm:$0xff] %v2972
    %3555 = vst [vmem:[#allocation7 + $0xdd0] sm:$0xff] %v2974
    %3556 = vst [vmem:[#allocation7 + $0xdd8] sm:$0xff] %v2976
    %3557 = vst [vmem:[#allocation7 + $0xde0] sm:$0xff] %v2978
    %3558 = vst [vmem:[#allocation7 + $0xde8] sm:$0xff] %v2980
    %3559 = vst [vmem:[#allocation7 + $0xdf0] sm:$0xff] %v2982
    %3560 = vst [vmem:[#allocation7 + $0xdf8] sm:$0xff] %v2984
    %3561 = vst [vmem:[#allocation7 + $0xe00] sm:$0xff] %v2986
    %3562 = vst [vmem:[#allocation7 + $0xe08] sm:$0xff] %v2988
    %3563 = vst [vmem:[#allocation7 + $0xe10] sm:$0xff] %v2990
    %3564 = vst [vmem:[#allocation7 + $0xe18] sm:$0xff] %v2992
    %3565 = vst [vmem:[#allocation7 + $0xe20] sm:$0xff] %v2994
    %3566 = vst [vmem:[#allocation7 + $0xe28] sm:$0xff] %v2996
    %3567 = vst [vmem:[#allocation7 + $0xe30] sm:$0xff] %v2998
    %3568 = vst [vmem:[#allocation7 + $0xe38] sm:$0xff] %v3000
    %3569 = vst [vmem:[#allocation7 + $0xe40] sm:$0xff] %v3002
    %3570 = vst [vmem:[#allocation7 + $0xe48] sm:$0xff] %v3004
    %3571 = vst [vmem:[#allocation7 + $0xe50] sm:$0xff] %v3006
    %3572 = vst [vmem:[#allocation7 + $0xe58] sm:$0xff] %v3008
    %3573 = vst [vmem:[#allocation7 + $0xe60] sm:$0xff] %v3010
    %3574 = vst [vmem:[#allocation7 + $0xe68] sm:$0xff] %v3012
    %3575 = vst [vmem:[#allocation7 + $0xe70] sm:$0xff] %v3014
    %3576 = vst [vmem:[#allocation7 + $0xe78] sm:$0xff] %v3016
    %3577 = vst [vmem:[#allocation7 + $0xe80] sm:$0xff] %v3018
    %3578 = vst [vmem:[#allocation7 + $0xe88] sm:$0xff] %v3020
    %3579 = vst [vmem:[#allocation7 + $0xe90] sm:$0xff] %v3022
    %3580 = vst [vmem:[#allocation7 + $0xe98] sm:$0xff] %v3024
    %3581 = vst [vmem:[#allocation7 + $0xea0] sm:$0xff] %v3026
    %3582 = vst [vmem:[#allocation7 + $0xea8] sm:$0xff] %v3028
    %3583 = vst [vmem:[#allocation7 + $0xeb0] sm:$0xff] %v3030
    %3584 = vst [vmem:[#allocation7 + $0xeb8] sm:$0xff] %v3032
    %3585 = vst [vmem:[#allocation7 + $0xec0] sm:$0xff] %v3034
    %3586 = vst [vmem:[#allocation7 + $0xec8] sm:$0xff] %v3036
    %3587 = vst [vmem:[#allocation7 + $0xed0] sm:$0xff] %v3038
    %3588 = vst [vmem:[#allocation7 + $0xed8] sm:$0xff] %v3040
    %3589 = vst [vmem:[#allocation7 + $0xee0] sm:$0xff] %v3042
    %3590 = vst [vmem:[#allocation7 + $0xee8] sm:$0xff] %v3044
    %3591 = vst [vmem:[#allocation7 + $0xef0] sm:$0xff] %v3046
    %3592 = vst [vmem:[#allocation7 + $0xef8] sm:$0xff] %v3048
    %3593 = vst [vmem:[#allocation7 + $0xf00] sm:$0xff] %v3050
    %3594 = vst [vmem:[#allocation7 + $0xf08] sm:$0xff] %v3052
    %3595 = vst [vmem:[#allocation7 + $0xf10] sm:$0xff] %v3054
    %3596 = vst [vmem:[#allocation7 + $0xf18] sm:$0xff] %v3056
    %3597 = vst [vmem:[#allocation7 + $0xf20] sm:$0xff] %v3058
    %3598 = vst [vmem:[#allocation7 + $0xf28] sm:$0xff] %v3060
    %3599 = vst [vmem:[#allocation7 + $0xf30] sm:$0xff] %v3062
    %3600 = vst [vmem:[#allocation7 + $0xf38] sm:$0xff] %v3064
    %3601 = vst [vmem:[#allocation7 + $0xf40] sm:$0xff] %v3066
    %3602 = vst [vmem:[#allocation7 + $0xf48] sm:$0xff] %v3068
    %3603 = vst [vmem:[#allocation7 + $0xf50] sm:$0xff] %v3070
    %3604 = vst [vmem:[#allocation7 + $0xf58] sm:$0xff] %v3072
    %3605 = vst [vmem:[#allocation7 + $0xf60] sm:$0xff] %v3074
    %3606 = vst [vmem:[#allocation7 + $0xf68] sm:$0xff] %v3076
    %3607 = vst [vmem:[#allocation7 + $0xf70] sm:$0xff] %v3078
    %3608 = vst [vmem:[#allocation7 + $0xf78] sm:$0xff] %v3080
    %3609 = vst [vmem:[#allocation7 + $0xf80] sm:$0xff] %v3082
    %3610 = vst [vmem:[#allocation7 + $0xf88] sm:$0xff] %v3084
    %3611 = vst [vmem:[#allocation7 + $0xf90] sm:$0xff] %v3086
    %3612 = vst [vmem:[#allocation7 + $0xf98] sm:$0xff] %v3088
    %3613 = vst [vmem:[#allocation7 + $0xfa0] sm:$0xff] %v3090
    %3614 = vst [vmem:[#allocation7 + $0xfa8] sm:$0xff] %v3092
    %3615 = vst [vmem:[#allocation7 + $0xfb0] sm:$0xff] %v3094
    %3616 = vst [vmem:[#allocation7 + $0xfb8] sm:$0xff] %v3096
    %3617 = vst [vmem:[#allocation7 + $0xfc0] sm:$0xff] %v3098
    %3618 = vst [vmem:[#allocation7 + $0xfc8] sm:$0xff] %v3100
    %3619 = vst [vmem:[#allocation7 + $0xfd0] sm:$0xff] %v3102
    %3620 = vst [vmem:[#allocation7 + $0xfd8] sm:$0xff] %v3104
    %3621 = vst [vmem:[#allocation7 + $0xfe0] sm:$0xff] %v3106
    %3622 = vst [vmem:[#allocation7 + $0xfe8] sm:$0xff] %v3108
    %3623 = vst [vmem:[#allocation7 + $0xff0] sm:$0xff] %v3110
    %3624 = vst [vmem:[#allocation7 + $0xff8] sm:$0xff] %v3112
    // Predicated region
    $region18: #{tpu_custom_call.1} parent=1 // pred_check
      _
    $region19: #{tpu_custom_call.1} parent=1 // pred_check_branch
      %3626 = sbr.rel (0) target = $region21
    $region20: #{tpu_custom_call.1} parent=1 // pred_region
      %s3628 = ssub.s32 65536, 65536
      %3629 = vsyncadd [#allocation4], %s3628
      %s3630 = sshll.u32 [#allocation7], 4
      %s3631 = int_to_ptr.vmem [resolvable:$true] %s3630
      %3636 = dma.vmem_to_hbm [thread:$0]  %s3631, 65536, %s2, [#allocation4], 1024, 1024, 64
    $region21: #{tpu_custom_call.1} parent=1 // pred_fallthru
      _
    // Predicated region
    $region22: #{tpu_custom_call.1} parent=1 // pred_check
      _
    $region23: #{tpu_custom_call.1} parent=1 // pred_check_branch
      %3638 = sbr.rel (0) target = $region25
    $region24: #{tpu_custom_call.1} parent=1 // pred_region
      %3639 = dma.done [#allocation4], 65536
    $region25: #{tpu_custom_call.1} parent=1 // pred_fallthru
      _
    %3640 = vsyncpa [#allocation3], 1
    %3641 = vsyncpa [#allocation4], 1
    %3642 = vsyncpa [#allocation5], 1

</llo_original>
